<compile_context>
chip_gen: v7x
topology: tpu7x:2x2x1
jax: 0.10.0
libtpu: 0.0.40
codegen_flags: <defaults>
</compile_context>

<pallas_src>
import math

import jax
import jax.numpy as jnp
from jax import lax
from jax.experimental import pallas as pl
from jax.experimental.pallas import tpu as pltpu

# Full-f32 matmuls everywhere (reference side); kernel dots pass HIGHEST explicitly.
jax.config.update("jax_default_matmul_precision", "highest")

# Small, module-consistent shapes (hidden divisible by num heads, as required).
B, S, H = 2, 8, 32          # batch, seq, hidden_size
NH = 2                      # num_attention_heads (BertLayer default)
DH = H // NH                # attention_head_size
I = 16                      # intermediate_size
T = NH * B * S              # stacked (head, batch, seq) rows for attention
EPS = 1e-8                  # BertLayerNorm eps (module uses eps=1e-08)
NEG_BIG = -1e9              # cross-(head,batch) additive mask value

LANES = 128                 # lane-padded weight slab width
R_WQKV = 0                  # rows 0..H-1   : fused [wq|wk|wv]   (H, 3H)
R_WO = R_WQKV + H           # rows 32..63   : wo                 (H, H)
R_WI = R_WO + H             # rows 64..95   : wi                 (H, I)
R_W2 = R_WI + H             # rows 96..111  : w2                 (I, H)
R_VEC = R_W2 + I            # rows 112..119 : bias / LN vector rows
R_TOTAL = R_VEC + 8         # 120 rows (multiple of 8)

HIGH = lax.Precision.HIGHEST


def _layer_norm(x, gamma, beta):
    mu = jnp.mean(x, axis=-1, keepdims=True)
    var = jnp.mean((x - mu) ** 2, axis=-1, keepdims=True)
    return (x - mu) * lax.rsqrt(var + EPS) * gamma + beta


def _gelu(x):
    return x * 0.5 * (1.0 + lax.erf(x / math.sqrt(2.0)))


def bert_layer_kernel(x_ref, mask_ref, w_ref, o_ref):
    x = x_ref[...]                                   # (B*S, H)
    bigmask = mask_ref[...]                          # (T, T) block-diag additive mask

    # Static, 8-row-aligned slices of the packed weight slab.
    wqkv = w_ref[R_WQKV:R_WQKV + H, 0:3 * H]         # (H, 3H)
    wi = w_ref[R_WI:R_WI + H, 0:I]                   # (H, I)
    w2 = w_ref[R_W2:R_W2 + I, 0:H]                   # (I, H)
    vec = w_ref[R_VEC:R_VEC + 8, :]                  # (8, 128) bias / LN rows
    bqkv = vec[0:1, 0:3 * H]
    bo = vec[1:2, 0:H]
    g1 = vec[2:3, 0:H]
    be1 = vec[3:4, 0:H]
    bi = vec[4:5, 0:I]
    b2 = vec[5:6, 0:H]
    g2 = vec[6:7, 0:H]
    be2 = vec[7:8, 0:H]

    # Fused QKV projection: one MXU pass over the whole (B*S, H) slab.
    qkv = jnp.dot(x, wqkv, preferred_element_type=jnp.float32,
                  precision=HIGH) + bqkv             # (B*S, 3H)

    # Stack heads along sublanes -> one attention over all (head, batch) blocks.
    q = jnp.concatenate([qkv[:, h * DH:(h + 1) * DH]
                         for h in range(NH)], axis=0)                    # (T, DH)
    k = jnp.concatenate([qkv[:, H + h * DH:H + (h + 1) * DH]
                         for h in range(NH)], axis=0)                    # (T, DH)
    v = jnp.concatenate([qkv[:, 2 * H + h * DH:2 * H + (h + 1) * DH]
                         for h in range(NH)], axis=0)                    # (T, DH)

    # Scores: contract last dims of Q and K (no explicit K transpose).
    s = lax.dot_general(q, k, dimension_numbers=(((1,), (1,)), ((), ())),
                        preferred_element_type=jnp.float32, precision=HIGH)
    s = s * (1.0 / math.sqrt(DH)) + bigmask          # (T, T)
    s = s - jnp.max(s, axis=-1, keepdims=True)
    p = jnp.exp(s)
    p = p / jnp.sum(p, axis=-1, keepdims=True)       # exact softmax (tolerance-critical)
    ctx = jnp.dot(p, v, preferred_element_type=jnp.float32,
                  precision=HIGH)                    # (T, DH)

    # Per-head output projection accumulated straight into the (B*S, H) slab.
    att = None
    for h in range(NH):                              # static unrolled; NH is tiny
        woh = w_ref[R_WO + h * DH:R_WO + (h + 1) * DH, 0:H]              # (DH, H)
        part = jnp.dot(ctx[h * (B * S):(h + 1) * (B * S), :], woh,
                       preferred_element_type=jnp.float32, precision=HIGH)
        att = part if att is None else att + part
    att = att + bo                                   # (B*S, H)

    # Attention output residual + LayerNorm (dropout prob = 0.0 -> no-op).
    att_out = _layer_norm(att + x, g1, be1)

    # Intermediate dense + GeLU, output dense + residual + LayerNorm.
    inter = _gelu(jnp.dot(att_out, wi, preferred_element_type=jnp.float32,
                          precision=HIGH) + bi)
    ff = jnp.dot(inter, w2, preferred_element_type=jnp.float32,
                 precision=HIGH) + b2
    out = _layer_norm(ff + att_out, g2, be2)

    o_ref[...] = out.astype(o_ref.dtype)


def pack_params(raw):
    """Pack the 16 nn.Linear/LayerNorm tensors into one lane-padded f32 slab."""
    (wq, bq, wk, bk, wv, bv, wo, bo, g1, be1, wi, bi, w2, b2, g2, be2) = raw
    wqkv = jnp.concatenate([wq, wk, wv], axis=1)                 # (H, 3H)
    bqkv = jnp.concatenate([bq, bk, bv], axis=1)                 # (1, 3H)
    slab = jnp.zeros((R_TOTAL, LANES), jnp.float32)
    slab = slab.at[R_WQKV:R_WQKV + H, :3 * H].set(wqkv)
    slab = slab.at[R_WO:R_WO + H, :H].set(wo)
    slab = slab.at[R_WI:R_WI + H, :I].set(wi)
    slab = slab.at[R_W2:R_W2 + I, :H].set(w2)
    slab = slab.at[R_VEC + 0, :3 * H].set(bqkv[0])
    slab = slab.at[R_VEC + 1, :H].set(bo[0])
    slab = slab.at[R_VEC + 2, :H].set(g1[0])
    slab = slab.at[R_VEC + 3, :H].set(be1[0])
    slab = slab.at[R_VEC + 4, :I].set(bi[0])
    slab = slab.at[R_VEC + 5, :H].set(b2[0])
    slab = slab.at[R_VEC + 6, :H].set(g2[0])
    slab = slab.at[R_VEC + 7, :H].set(be2[0])
    return slab


def _build_block_mask(attention_mask):
    """(B,1,1,S) additive key mask -> (T, T) block-diagonal additive mask."""
    m = attention_mask.reshape(B, S).astype(jnp.float32)
    idx = jnp.arange(T)
    group = idx // S                      # h * B + b of each stacked row/col
    b_of = group % B
    s_of = idx % S
    key_mask = m[b_of, s_of]              # (T,) user mask of each key column
    same = group[:, None] == group[None, :]
    return jnp.where(same, key_mask[None, :], jnp.float32(NEG_BIG))


def bert_layer_pallas(x, attention_mask, weight_slab):
    """x: (B, S, H) float32; attention_mask: (B, 1, 1, S) additive mask."""
    # Wrapper-side layout plumbing: flatten batch*seq into one lane-dense slab
    # and pre-build the block-diagonal attention mask.
    x2 = x.reshape(B * S, H)
    bigmask = _build_block_mask(attention_mask)

    out2 = pl.pallas_call(
        bert_layer_kernel,
        out_shape=jax.ShapeDtypeStruct((B * S, H), x.dtype),
        in_specs=[
            pl.BlockSpec(memory_space=pltpu.MemorySpace.VMEM),   # activations
            pl.BlockSpec(memory_space=pltpu.MemorySpace.VMEM),   # block-diag mask
            pl.BlockSpec(memory_space=pltpu.MemorySpace.VMEM),   # packed weights
        ],
        out_specs=pl.BlockSpec(memory_space=pltpu.MemorySpace.VMEM),
    )(x2, bigmask, weight_slab)
    return out2.reshape(B, S, H)


def bert_layer_ref(x, attention_mask, params):
    """Pure-JAX reference mirroring the PyTorch forward exactly (raw params)."""
    (wq, bq, wk, bk, wv, bv, wo, bo, g1, be1, wi, bi, w2, b2, g2, be2) = params

    def ln(v, g, b):
        mu = jnp.mean(v, axis=-1, keepdims=True)
        var = jnp.mean((v - mu) ** 2, axis=-1, keepdims=True)
        return (v - mu) / jnp.sqrt(var + EPS) * g[0] + b[0]

    q = x @ wq + bq[0]
    k = x @ wk + bk[0]
    v = x @ wv + bv[0]

    def split_heads(t):  # (B, S, H) -> (B, NH, S, DH)
        return t.reshape(B, S, NH, DH).transpose(0, 2, 1, 3)

    ql, kl, vl = split_heads(q), split_heads(k), split_heads(v)
    scores = jnp.einsum("bhqd,bhkd->bhqk", ql, kl) / math.sqrt(DH)
    scores = scores + attention_mask  # (B,1,1,S) broadcast
    probs = jax.nn.softmax(scores, axis=-1)
    ctx = jnp.einsum("bhqk,bhkd->bhqd", probs, vl)
    ctx = ctx.transpose(0, 2, 1, 3).reshape(B, S, H)

    att = ctx @ wo + bo[0]
    att_out = ln(att + x, g1, be1)

    inter = att_out @ wi + bi[0]
    inter = inter * 0.5 * (1.0 + lax.erf(inter / math.sqrt(2.0)))
    ff = inter @ w2 + b2[0]
    return ln(ff + att_out, g2, be2)


def init_params(key):
    ks = jax.random.split(key, 16)
    n = lambda k, s, sc=0.05: (sc * jax.random.normal(k, s)).astype(jnp.float32)
    wq, bq = n(ks[0], (H, H)), n(ks[1], (1, H))
    wk, bk = n(ks[2], (H, H)), n(ks[3], (1, H))
    wv, bv = n(ks[4], (H, H)), n(ks[5], (1, H))
    wo, bo = n(ks[6], (H, H)), n(ks[7], (1, H))
    g1 = 1.0 + n(ks[8], (1, H), 0.1)
    be1 = n(ks[9], (1, H), 0.1)
    wi, bi = n(ks[10], (H, I)), n(ks[11], (1, I))
    w2, b2 = n(ks[12], (I, H)), n(ks[13], (1, H))
    g2 = 1.0 + n(ks[14], (1, H), 0.1)
    be2 = n(ks[15], (1, H), 0.1)
    return (wq, bq, wk, bk, wv, bv, wo, bo, g1, be1, wi, bi, w2, b2, g2, be2)


if __name__ == "__main__":
    key = jax.random.PRNGKey(0)
    kx, km, kp = jax.random.split(key, 3)

    x = jax.random.normal(kx, (B, S, H), dtype=jnp.float32)
    # Additive attention mask: mask out the last 2 key positions of batch 1.
    mask = jnp.zeros((B, 1, 1, S), dtype=jnp.float32)
    mask = mask.at[1, 0, 0, -2:].set(-10000.0)

    raw_params = init_params(kp)
    slab = pack_params(raw_params)

    out = bert_layer_pallas(x, mask, slab)
    out = jax.block_until_ready(out)

    ref = bert_layer_ref(x, mask, raw_params)
    assert out.shape == (B, S, H)
    max_err = float(jnp.max(jnp.abs(out - ref)))
    assert jnp.allclose(out, ref, rtol=1e-4, atol=1e-4), (
        f"mismatch vs reference: max abs err {max_err}")

    print("KERNEL_OK")
</pallas_src>

<mosaic_0001>
module attributes {stable_mosaic.version = 11 : i64} {
  func.func @bert_layer_kernel(%arg0: memref<16x32xf32, #tpu.memory_space<vmem>>, %arg1: memref<32x32xf32, #tpu.memory_space<vmem>>, %arg2: memref<120x128xf32, #tpu.memory_space<vmem>>, %arg3: memref<16x32xf32, #tpu.memory_space<vmem>>) attributes {dimension_semantics = [], scalar_prefetch = 0 : i64, scratch_operands = 0 : i64, tpu.core_type = #tpu.core_type<tc>} {
    %c0 = arith.constant 0 : index
    %c0_0 = arith.constant 0 : index
    %0 = vector.load %arg0[%c0, %c0_0] : memref<16x32xf32, #tpu.memory_space<vmem>>, vector<16x32xf32>
    %c0_1 = arith.constant 0 : index
    %c0_2 = arith.constant 0 : index
    %1 = vector.load %arg1[%c0_1, %c0_2] : memref<32x32xf32, #tpu.memory_space<vmem>>, vector<32x32xf32>
    %c0_3 = arith.constant 0 : index
    %c0_4 = arith.constant 0 : index
    %2 = vector.load %arg2[%c0_3, %c0_4] : memref<120x128xf32, #tpu.memory_space<vmem>>, vector<32x96xf32>
    %c64 = arith.constant 64 : index
    %c0_5 = arith.constant 0 : index
    %3 = vector.load %arg2[%c64, %c0_5] : memref<120x128xf32, #tpu.memory_space<vmem>>, vector<32x16xf32>
    %c96 = arith.constant 96 : index
    %c0_6 = arith.constant 0 : index
    %4 = vector.load %arg2[%c96, %c0_6] : memref<120x128xf32, #tpu.memory_space<vmem>>, vector<16x32xf32>
    %c112 = arith.constant 112 : index
    %c0_7 = arith.constant 0 : index
    %5 = vector.load %arg2[%c112, %c0_7] : memref<120x128xf32, #tpu.memory_space<vmem>>, vector<8x128xf32>
    %6 = vector.extract_strided_slice %5 {offsets = [0, 0], sizes = [1, 96], strides = [1, 1]} : vector<8x128xf32> to vector<1x96xf32>
    %7 = vector.extract_strided_slice %5 {offsets = [1, 0], sizes = [1, 32], strides = [1, 1]} : vector<8x128xf32> to vector<1x32xf32>
    %8 = vector.extract_strided_slice %5 {offsets = [2, 0], sizes = [1, 32], strides = [1, 1]} : vector<8x128xf32> to vector<1x32xf32>
    %9 = vector.extract_strided_slice %5 {offsets = [3, 0], sizes = [1, 32], strides = [1, 1]} : vector<8x128xf32> to vector<1x32xf32>
    %10 = vector.extract_strided_slice %5 {offsets = [4, 0], sizes = [1, 16], strides = [1, 1]} : vector<8x128xf32> to vector<1x16xf32>
    %11 = vector.extract_strided_slice %5 {offsets = [5, 0], sizes = [1, 32], strides = [1, 1]} : vector<8x128xf32> to vector<1x32xf32>
    %12 = vector.extract_strided_slice %5 {offsets = [6, 0], sizes = [1, 32], strides = [1, 1]} : vector<8x128xf32> to vector<1x32xf32>
    %13 = vector.extract_strided_slice %5 {offsets = [7, 0], sizes = [1, 32], strides = [1, 1]} : vector<8x128xf32> to vector<1x32xf32>
    %cst = arith.constant dense<0.000000e+00> : vector<16x96xf32>
    %14 = tpu.matmul %0, %2, %cst {dimension_numbers = #tpu.dot_dimension_numbers<[1], [0], [0], [1], [0, 0, 1, 1], [], []>, precision = #tpu.contract_precision<fp32>} : vector<16x32xf32>, vector<32x96xf32>, vector<16x96xf32> -> vector<16x96xf32>
    %15 = vector.broadcast %6 : vector<1x96xf32> to vector<16x96xf32>
    %16 = arith.addf %14, %15 : vector<16x96xf32>
    %17 = vector.extract_strided_slice %16 {offsets = [0, 0], sizes = [16, 16], strides = [1, 1]} : vector<16x96xf32> to vector<16x16xf32>
    %18 = vector.extract_strided_slice %16 {offsets = [0, 16], sizes = [16, 16], strides = [1, 1]} : vector<16x96xf32> to vector<16x16xf32>
    %19 = tpu.concatenate %17, %18 in 0 : vector<16x16xf32>, vector<16x16xf32> -> vector<32x16xf32>
    %20 = vector.extract_strided_slice %16 {offsets = [0, 32], sizes = [16, 16], strides = [1, 1]} : vector<16x96xf32> to vector<16x16xf32>
    %21 = vector.extract_strided_slice %16 {offsets = [0, 48], sizes = [16, 16], strides = [1, 1]} : vector<16x96xf32> to vector<16x16xf32>
    %22 = tpu.concatenate %20, %21 in 0 : vector<16x16xf32>, vector<16x16xf32> -> vector<32x16xf32>
    %23 = vector.extract_strided_slice %16 {offsets = [0, 64], sizes = [16, 16], strides = [1, 1]} : vector<16x96xf32> to vector<16x16xf32>
    %24 = vector.extract_strided_slice %16 {offsets = [0, 80], sizes = [16, 16], strides = [1, 1]} : vector<16x96xf32> to vector<16x16xf32>
    %25 = tpu.concatenate %23, %24 in 0 : vector<16x16xf32>, vector<16x16xf32> -> vector<32x16xf32>
    %cst_8 = arith.constant dense<0.000000e+00> : vector<32x32xf32>
    %26 = tpu.matmul %19, %22, %cst_8 {dimension_numbers = #tpu.dot_dimension_numbers<[1], [1], [0], [0], [0, 0, 1, 0], [], []>, precision = #tpu.contract_precision<fp32>} : vector<32x16xf32>, vector<32x16xf32>, vector<32x32xf32> -> vector<32x32xf32>
    %cst_9 = arith.constant 2.500000e-01 : f32
    %27 = vector.broadcast %cst_9 : f32 to vector<32x32xf32>
    %28 = arith.mulf %26, %27 : vector<32x32xf32>
    %29 = arith.addf %28, %1 : vector<32x32xf32>
    %cst_10 = arith.constant dense<0xFF800000> : vector<32xf32>
    %30 = vector.multi_reduction <maximumf>, %29, %cst_10 [1] : vector<32x32xf32> to vector<32xf32>
    %31 = vector.shape_cast %30 : vector<32xf32> to vector<32x1xf32>
    %32 = vector.broadcast %31 : vector<32x1xf32> to vector<32x32xf32>
    %33 = arith.subf %29, %32 : vector<32x32xf32>
    %34 = math.exp %33 : vector<32x32xf32>
    %cst_11 = arith.constant dense<0.000000e+00> : vector<32xf32>
    %35 = vector.multi_reduction <add>, %34, %cst_11 [1] : vector<32x32xf32> to vector<32xf32>
    %36 = vector.shape_cast %35 : vector<32xf32> to vector<32x1xf32>
    %37 = vector.broadcast %36 : vector<32x1xf32> to vector<32x32xf32>
    %38 = arith.divf %34, %37 : vector<32x32xf32>
    %cst_12 = arith.constant dense<0.000000e+00> : vector<32x16xf32>
    %39 = tpu.matmul %38, %25, %cst_12 {dimension_numbers = #tpu.dot_dimension_numbers<[1], [0], [0], [1], [0, 0, 1, 1], [], []>, precision = #tpu.contract_precision<fp32>} : vector<32x32xf32>, vector<32x16xf32>, vector<32x16xf32> -> vector<32x16xf32>
    %c32 = arith.constant 32 : index
    %c0_13 = arith.constant 0 : index
    %40 = vector.load %arg2[%c32, %c0_13] : memref<120x128xf32, #tpu.memory_space<vmem>>, vector<16x32xf32>
    %41 = vector.extract_strided_slice %39 {offsets = [0, 0], sizes = [16, 16], strides = [1, 1]} : vector<32x16xf32> to vector<16x16xf32>
    %cst_14 = arith.constant dense<0.000000e+00> : vector<16x32xf32>
    %42 = tpu.matmul %41, %40, %cst_14 {dimension_numbers = #tpu.dot_dimension_numbers<[1], [0], [0], [1], [0, 0, 1, 1], [], []>, precision = #tpu.contract_precision<fp32>} : vector<16x16xf32>, vector<16x32xf32>, vector<16x32xf32> -> vector<16x32xf32>
    %c48 = arith.constant 48 : index
    %c0_15 = arith.constant 0 : index
    %43 = vector.load %arg2[%c48, %c0_15] : memref<120x128xf32, #tpu.memory_space<vmem>>, vector<16x32xf32>
    %44 = vector.extract_strided_slice %39 {offsets = [16, 0], sizes = [16, 16], strides = [1, 1]} : vector<32x16xf32> to vector<16x16xf32>
    %cst_16 = arith.constant dense<0.000000e+00> : vector<16x32xf32>
    %45 = tpu.matmul %44, %43, %cst_16 {dimension_numbers = #tpu.dot_dimension_numbers<[1], [0], [0], [1], [0, 0, 1, 1], [], []>, precision = #tpu.contract_precision<fp32>} : vector<16x16xf32>, vector<16x32xf32>, vector<16x32xf32> -> vector<16x32xf32>
    %46 = arith.addf %42, %45 : vector<16x32xf32>
    %47 = vector.broadcast %7 : vector<1x32xf32> to vector<16x32xf32>
    %48 = arith.addf %46, %47 : vector<16x32xf32>
    %49 = arith.addf %48, %0 : vector<16x32xf32>
    %cst_17 = arith.constant dense<0.000000e+00> : vector<16xf32>
    %50 = vector.multi_reduction <add>, %49, %cst_17 [1] : vector<16x32xf32> to vector<16xf32>
    %51 = vector.shape_cast %50 : vector<16xf32> to vector<16x1xf32>
    %cst_18 = arith.constant 3.200000e+01 : f32
    %52 = vector.broadcast %cst_18 : f32 to vector<16x1xf32>
    %53 = arith.divf %51, %52 : vector<16x1xf32>
    %54 = vector.broadcast %53 : vector<16x1xf32> to vector<16x32xf32>
    %55 = arith.subf %49, %54 : vector<16x32xf32>
    %56 = arith.mulf %55, %55 : vector<16x32xf32>
    %cst_19 = arith.constant dense<0.000000e+00> : vector<16xf32>
    %57 = vector.multi_reduction <add>, %56, %cst_19 [1] : vector<16x32xf32> to vector<16xf32>
    %58 = vector.shape_cast %57 : vector<16xf32> to vector<16x1xf32>
    %cst_20 = arith.constant 3.200000e+01 : f32
    %59 = vector.broadcast %cst_20 : f32 to vector<16x1xf32>
    %60 = arith.divf %58, %59 : vector<16x1xf32>
    %61 = vector.broadcast %53 : vector<16x1xf32> to vector<16x32xf32>
    %62 = arith.subf %49, %61 : vector<16x32xf32>
    %cst_21 = arith.constant 9.99999993E-9 : f32
    %63 = vector.broadcast %cst_21 : f32 to vector<16x1xf32>
    %64 = arith.addf %60, %63 : vector<16x1xf32>
    %65 = math.rsqrt %64 : vector<16x1xf32>
    %66 = vector.broadcast %65 : vector<16x1xf32> to vector<16x32xf32>
    %67 = arith.mulf %62, %66 : vector<16x32xf32>
    %68 = vector.broadcast %8 : vector<1x32xf32> to vector<16x32xf32>
    %69 = arith.mulf %67, %68 : vector<16x32xf32>
    %70 = vector.broadcast %9 : vector<1x32xf32> to vector<16x32xf32>
    %71 = arith.addf %69, %70 : vector<16x32xf32>
    %cst_22 = arith.constant dense<0.000000e+00> : vector<16x16xf32>
    %72 = tpu.matmul %71, %3, %cst_22 {dimension_numbers = #tpu.dot_dimension_numbers<[1], [0], [0], [1], [0, 0, 1, 1], [], []>, precision = #tpu.contract_precision<fp32>} : vector<16x32xf32>, vector<32x16xf32>, vector<16x16xf32> -> vector<16x16xf32>
    %73 = vector.broadcast %10 : vector<1x16xf32> to vector<16x16xf32>
    %74 = arith.addf %72, %73 : vector<16x16xf32>
    %cst_23 = arith.constant 5.000000e-01 : f32
    %75 = vector.broadcast %cst_23 : f32 to vector<16x16xf32>
    %76 = arith.mulf %74, %75 : vector<16x16xf32>
    %cst_24 = arith.constant 1.41421354 : f32
    %77 = vector.broadcast %cst_24 : f32 to vector<16x16xf32>
    %78 = arith.divf %74, %77 : vector<16x16xf32>
    %79 = math.erf %78 : vector<16x16xf32>
    %cst_25 = arith.constant 1.000000e+00 : f32
    %80 = vector.broadcast %cst_25 : f32 to vector<16x16xf32>
    %81 = arith.addf %80, %79 : vector<16x16xf32>
    %82 = arith.mulf %76, %81 : vector<16x16xf32>
    %cst_26 = arith.constant dense<0.000000e+00> : vector<16x32xf32>
    %83 = tpu.matmul %82, %4, %cst_26 {dimension_numbers = #tpu.dot_dimension_numbers<[1], [0], [0], [1], [0, 0, 1, 1], [], []>, precision = #tpu.contract_precision<fp32>} : vector<16x16xf32>, vector<16x32xf32>, vector<16x32xf32> -> vector<16x32xf32>
    %84 = vector.broadcast %11 : vector<1x32xf32> to vector<16x32xf32>
    %85 = arith.addf %83, %84 : vector<16x32xf32>
    %86 = arith.addf %85, %71 : vector<16x32xf32>
    %cst_27 = arith.constant dense<0.000000e+00> : vector<16xf32>
    %87 = vector.multi_reduction <add>, %86, %cst_27 [1] : vector<16x32xf32> to vector<16xf32>
    %88 = vector.shape_cast %87 : vector<16xf32> to vector<16x1xf32>
    %cst_28 = arith.constant 3.200000e+01 : f32
    %89 = vector.broadcast %cst_28 : f32 to vector<16x1xf32>
    %90 = arith.divf %88, %89 : vector<16x1xf32>
    %91 = vector.broadcast %90 : vector<16x1xf32> to vector<16x32xf32>
    %92 = arith.subf %86, %91 : vector<16x32xf32>
    %93 = arith.mulf %92, %92 : vector<16x32xf32>
    %cst_29 = arith.constant dense<0.000000e+00> : vector<16xf32>
    %94 = vector.multi_reduction <add>, %93, %cst_29 [1] : vector<16x32xf32> to vector<16xf32>
    %95 = vector.shape_cast %94 : vector<16xf32> to vector<16x1xf32>
    %cst_30 = arith.constant 3.200000e+01 : f32
    %96 = vector.broadcast %cst_30 : f32 to vector<16x1xf32>
    %97 = arith.divf %95, %96 : vector<16x1xf32>
    %98 = vector.broadcast %90 : vector<16x1xf32> to vector<16x32xf32>
    %99 = arith.subf %86, %98 : vector<16x32xf32>
    %cst_31 = arith.constant 9.99999993E-9 : f32
    %100 = vector.broadcast %cst_31 : f32 to vector<16x1xf32>
    %101 = arith.addf %97, %100 : vector<16x1xf32>
    %102 = math.rsqrt %101 : vector<16x1xf32>
    %103 = vector.broadcast %102 : vector<16x1xf32> to vector<16x32xf32>
    %104 = arith.mulf %99, %103 : vector<16x32xf32>
    %105 = vector.broadcast %12 : vector<1x32xf32> to vector<16x32xf32>
    %106 = arith.mulf %104, %105 : vector<16x32xf32>
    %107 = vector.broadcast %13 : vector<1x32xf32> to vector<16x32xf32>
    %108 = arith.addf %106, %107 : vector<16x32xf32>
    %c0_32 = arith.constant 0 : index
    %c0_33 = arith.constant 0 : index
    %109 = vector.load %arg3[%c0_32, %c0_33] : memref<16x32xf32, #tpu.memory_space<vmem>>, vector<16x32xf32>
    tpu.vector_store %arg3[%c0_32, %c0_33], %108 {strides = array<i32>} : memref<16x32xf32, #tpu.memory_space<vmem>>, vector<16x32xf32>,
    return
  }
}

</mosaic_0001>

<llo_original>
// kernel: tpu_custom_call.1
$region0: #{tpu_custom_call.1}
  #allocation0 [shape = 'u32[]', space=smem, size = 0x4, offset = 0x4, fixed_abs, tag = 'smem constant byte address 0x4 - core index']
  #allocation1 [shape = 'u32[144,128]{1,0:T(1,128)}', space=vmem, size = 0x12000, scoped, tag = 'internal scratch']
  %s0 = inlined_call_operand.hbm [shape: f32[16,32], index: 0, kind: input, shape index: {}]
  %s1 = inlined_call_operand.hbm [shape: f32[32,32], index: 1, kind: input, shape index: {}]
  %s2 = inlined_call_operand.hbm [shape: f32[120,128], index: 2, kind: input, shape index: {}]
  %s3 = inlined_call_operand.hbm [shape: f32[16,32], index: 3, kind: output, shape index: {}]
  %s4 = sld [smem:[#allocation0]]
  $region34: #{tpu_custom_call.1} parent=0
    _
  %s6 = ssub.s32 1, %s4
  %s7 = scalar_select 0, %s6, %s4
  $region1: #{tpu_custom_call.1} parent=0
    #allocation2 [shape = 'u8[8192]{0}', space=vmem, size = 0x2000, scoped, tag = 'input window, operand 0, single buffered']
    #allocation3 [shape = 's32[1]{0}', space=sflag, size = 0x4, scoped, tag = 'scoped memory for tpu_custom_call.1']
    #allocation4 [shape = 's32[1]{0}', space=sflag, size = 0x4, scoped, tag = 'scoped memory for tpu_custom_call.1']
    #allocation5 [shape = 'u8[16384]{0}', space=vmem, size = 0x4000, scoped, tag = 'input window, operand 1, single buffered']
    #allocation6 [shape = 's32[1]{0}', space=sflag, size = 0x4, scoped, tag = 'scoped memory for tpu_custom_call.1']
    #allocation7 [shape = 'u8[61440]{0}', space=vmem, size = 0xf000, scoped, tag = 'input window, operand 2, single buffered']
    #allocation8 [shape = 'u8[8192]{0}', space=vmem, size = 0x2000, scoped, tag = 'output window, operand 0, single buffered']
    %8 = vsyncpa [#allocation3], 0
    %9 = vsyncpa [#allocation6], 0
    %10 = vsyncpa [#allocation4], 0
    // Predicated region
    $region2: #{tpu_custom_call.1} parent=1 // pred_check
      _
    $region3: #{tpu_custom_call.1} parent=1 // pred_check_branch
      %12 = sbr.rel (0) target = $region5
    $region4: #{tpu_custom_call.1} parent=1 // pred_region
      %s14 = ssub.s32 256, 256
      %15 = vsyncadd [#allocation3], %s14
      %s16 = sshll.u32 [#allocation2], 4
      %s17 = int_to_ptr.vmem [resolvable:$true] %s16
      %22 = dma.hbm_to_vmem [thread:$0]  %s0, 256, %s17, [#allocation3], 128, 128, 8
    $region5: #{tpu_custom_call.1} parent=1 // pred_fallthru
      _
    // Predicated region
    $region6: #{tpu_custom_call.1} parent=1 // pred_check
      _
    $region7: #{tpu_custom_call.1} parent=1 // pred_check_branch
      %24 = sbr.rel (0) target = $region9
    $region8: #{tpu_custom_call.1} parent=1 // pred_region
      %s26 = ssub.s32 512, 512
      %27 = vsyncadd [#allocation6], %s26
      %s28 = sshll.u32 [#allocation5], 4
      %s29 = int_to_ptr.vmem [resolvable:$true] %s28
      %34 = dma.hbm_to_vmem [thread:$0]  %s1, 512, %s29, [#allocation6], 128, 128, 8
    $region9: #{tpu_custom_call.1} parent=1 // pred_fallthru
      _
    // Predicated region
    $region10: #{tpu_custom_call.1} parent=1 // pred_check
      _
    $region11: #{tpu_custom_call.1} parent=1 // pred_check_branch
      %36 = sbr.rel (0) target = $region13
    $region12: #{tpu_custom_call.1} parent=1 // pred_region
      %s38 = ssub.s32 1920, 1920
      %39 = vsyncadd [#allocation6], %s38
      %s40 = sshll.u32 [#allocation7], 4
      %s41 = int_to_ptr.vmem [resolvable:$true] %s40
      %46 = dma.hbm_to_vmem [thread:$0]  %s2, 1920, %s41, [#allocation6], 128, 128, 8
    $region13: #{tpu_custom_call.1} parent=1 // pred_fallthru
      _
    // Predicated region
    $region14: #{tpu_custom_call.1} parent=1 // pred_check
      _
    $region15: #{tpu_custom_call.1} parent=1 // pred_check_branch
      %48 = sbr.rel (0) target = $region17
    $region16: #{tpu_custom_call.1} parent=1 // pred_region
      %49 = dma.done [#allocation3], 256
    $region17: #{tpu_custom_call.1} parent=1 // pred_fallthru
      _
    // Predicated region
    $region18: #{tpu_custom_call.1} parent=1 // pred_check
      _
    $region19: #{tpu_custom_call.1} parent=1 // pred_check_branch
      %51 = sbr.rel (0) target = $region21
    $region20: #{tpu_custom_call.1} parent=1 // pred_region
      %52 = dma.done [#allocation6], 512
    $region21: #{tpu_custom_call.1} parent=1 // pred_fallthru
      _
    // Predicated region
    $region22: #{tpu_custom_call.1} parent=1 // pred_check
      _
    $region23: #{tpu_custom_call.1} parent=1 // pred_check_branch
      %54 = sbr.rel (0) target = $region25
    $region24: #{tpu_custom_call.1} parent=1 // pred_region
      %55 = dma.done [#allocation6], 1920
    $region25: #{tpu_custom_call.1} parent=1 // pred_fallthru
      _
    %v56 = vld [vmem:[#allocation2] sm:$0xff]
    %v57 = vld [vmem:[#allocation2 + $0x8] sm:$0xff]
    %v58 = vld [vmem:[#allocation5] sm:$0xff]
    %v59 = vld [vmem:[#allocation5 + $0x8] sm:$0xff]
    %v60 = vld [vmem:[#allocation5 + $0x10] sm:$0xff]
    %v61 = vld [vmem:[#allocation5 + $0x18] sm:$0xff]
    %v62 = vld [vmem:[#allocation7] sm:$0xff]
    %v63 = vld [vmem:[#allocation7 + $0x8] sm:$0xff]
    %v64 = vld [vmem:[#allocation7 + $0x10] sm:$0xff]
    %v65 = vld [vmem:[#allocation7 + $0x18] sm:$0xff]
    %v66 = vld [vmem:[#allocation7 + $0x40] sm:$0xff]
    %v67 = vld [vmem:[#allocation7 + $0x48] sm:$0xff]
    %v68 = vld [vmem:[#allocation7 + $0x50] sm:$0xff]
    %v69 = vld [vmem:[#allocation7 + $0x58] sm:$0xff]
    %v70 = vld [vmem:[#allocation7 + $0x60] sm:$0xff]
    %v71 = vld [vmem:[#allocation7 + $0x68] sm:$0xff]
    %v72 = vld [vmem:[#allocation7 + $0x70] sm:$0xff]
    %v73 = vlaneseq
    %v74 = vshrl.u32 %v73, 7
    %v75 = vsub.s32 0, %v74
    %v76 = vrot.slane %v72, %v75
    %vm77 = vcmask 261120
    %v79 = vsel %vm77, %v56, 0
    %v82 = vsel %vm77, %v57, 0
    %84 = vmatprep.subr.mxu0 0.0
    %v85 = vand.u32 %v62, 4294901760
    %86 = vmatpush1.msra.mxu0 %v85
    %87 = vmatprep.subr.mxu0 0.0
    %v88 = vand.u32 %v63, 4294901760
    %89 = vmatpush1.msra.mxu0 %v88
    %90 = vmatprep.subr.mxu0 0.0
    %v91 = vand.u32 %v64, 4294901760
    %92 = vmatpush1.msra.mxu0 %v91
    %93 = vmatprep.subr.mxu0 0.0
    %v94 = vand.u32 %v65, 4294901760
    %95 = vmatpush1.msra.mxu0 %v94
    %96 = vmatprep.subr.mxu0 0.0
    %97 = vmatpush1.msra.mxu0 0.0
    %98 = vmatprep.subr.mxu0 0.0
    %99 = vmatpush1.msra.mxu0 0.0
    %100 = vmatprep.subr.mxu0 0.0
    %101 = vmatpush1.msra.mxu0 0.0
    %102 = vmatprep.subr.mxu0 0.0
    %103 = vmatpush1.msra.mxu0 0.0
    %104 = vmatprep.subr.mxu0 0.0
    %105 = vmatpush1.msra.mxu0 0.0
    %106 = vmatprep.subr.mxu0 0.0
    %107 = vmatpush1.msra.mxu0 0.0
    %108 = vmatprep.subr.mxu0 0.0
    %109 = vmatpush1.msra.mxu0 0.0
    %110 = vmatprep.subr.mxu0 0.0
    %111 = vmatpush1.msra.mxu0 0.0
    %112 = vmatprep.subr.mxu0 0.0
    %113 = vmatpush1.msra.mxu0 0.0
    %114 = vmatprep.subr.mxu0 0.0
    %115 = vmatpush1.msra.mxu0 0.0
    %116 = vmatprep.subr.mxu0 0.0
    %117 = vmatpush1.msra.mxu0 0.0
    %118 = vmatprep.subr.mxu0 0.0
    %119 = vmatpush1.msra.mxu0 0.0
    %120 = vmatprep.subr.mxu0 0.0
    %121 = vmatpush1.msra.mxu0 0.0
    %122 = vmatprep.subr.mxu0 0.0
    %123 = vmatpush1.msra.mxu0 0.0
    %124 = vmatprep.subr.mxu0 0.0
    %125 = vmatpush1.msra.mxu0 0.0
    %126 = vmatprep.subr.mxu0 0.0
    %127 = vmatpush1.msra.mxu0 0.0
    %128 = vmatprep.subr.mxu0 0.0
    %129 = vmatpush1.msra.mxu0 0.0
    %130 = vmatprep.subr.mxu0 0.0
    %131 = vmatpush1.msra.mxu0 0.0
    %132 = vmatprep.subr.mxu0 0.0
    %133 = vmatpush1.msra.mxu0 0.0
    %134 = vmatprep.subr.mxu0 0.0
    %135 = vmatpush1.msra.mxu0 0.0
    %136 = vmatprep.subr.mxu0 0.0
    %137 = vmatpush1.msra.mxu0 0.0
    %138 = vmatprep.subr.mxu0 0.0
    %139 = vmatpush1.msra.mxu0 0.0
    %140 = vmatprep.subr.mxu0 0.0
    %141 = vmatpush1.msra.mxu0 0.0
    %142 = vmatprep.subr.mxu0 0.0
    %143 = vmatpush1.msra.mxu0 0.0
    %144 = vmatprep.subr.mxu0 0.0
    %145 = vmatpush1.msra.mxu0 0.0
    %146 = vmatprep.subr.mxu0 0.0
    %147 = vmatpush1.msra.mxu0 0.0
    %148 = vmatprep.subr.mxu0 0.0
    %149 = vmatpush1.msra.mxu0 0.0
    %150 = vmatprep.subr.mxu0 0.0
    %151 = vmatpush1.msra.mxu0 0.0
    %152 = vmatprep.mubr.f32.mxu0 0.0
    %v153 = vand.u32 %v79, 4294901760
    %v154 = vsub.f32 %v79, %v153
    %v155 = vand.u32 %v154, 4294901760
    %v156 = vsub.f32 %v154, %v155
    %v157 = vand.u32 %v156, 4294901760
    %158 = vmatmul.mubr.f32.gmra.mrb[0].mxu0 %v157
    %v159 = vpop.f32.mrb[0].mxu0
    %v160 = vadd.f32 %v76, %v159
    %v161 = vpop.f32.mrb[0].mxu0
    %162 = vmatprep.mubr.f32.mxu0 0.0
    %v163 = vand.u32 %v82, 4294901760
    %v164 = vsub.f32 %v82, %v163
    %v165 = vand.u32 %v164, 4294901760
    %v166 = vsub.f32 %v164, %v165
    %v167 = vand.u32 %v166, 4294901760
    %168 = vmatmul.mubr.f32.gmra.mrb[0].mxu0 %v167
    %v169 = vpop.f32.mrb[0].mxu0
    %v170 = vadd.f32 %v76, %v169
    %v171 = vpop.f32.mrb[0].mxu0
    %172 = vdwg.mxu0
    %173 = vmatprep.subr.mxu0 0.0
    %v174 = vand.u32 %v62, 4294901760
    %v175 = vsub.f32 %v62, %v174
    %v176 = vand.u32 %v175, 4294901760
    %v177 = vsub.f32 %v175, %v176
    %v178 = vand.u32 %v177, 4294901760
    %179 = vmatpush1.msra.mxu0 %v178
    %180 = vmatprep.subr.mxu0 0.0
    %v181 = vand.u32 %v63, 4294901760
    %v182 = vsub.f32 %v63, %v181
    %v183 = vand.u32 %v182, 4294901760
    %v184 = vsub.f32 %v182, %v183
    %v185 = vand.u32 %v184, 4294901760
    %186 = vmatpush1.msra.mxu0 %v185
    %187 = vmatprep.subr.mxu0 0.0
    %v188 = vand.u32 %v64, 4294901760
    %v189 = vsub.f32 %v64, %v188
    %v190 = vand.u32 %v189, 4294901760
    %v191 = vsub.f32 %v189, %v190
    %v192 = vand.u32 %v191, 4294901760
    %193 = vmatpush1.msra.mxu0 %v192
    %194 = vmatprep.subr.mxu0 0.0
    %v195 = vand.u32 %v65, 4294901760
    %v196 = vsub.f32 %v65, %v195
    %v197 = vand.u32 %v196, 4294901760
    %v198 = vsub.f32 %v196, %v197
    %v199 = vand.u32 %v198, 4294901760
    %200 = vmatpush1.msra.mxu0 %v199
    %201 = vmatprep.subr.mxu0 0.0
    %202 = vmatpush1.msra.mxu0 0.0
    %203 = vmatprep.subr.mxu0 0.0
    %204 = vmatpush1.msra.mxu0 0.0
    %205 = vmatprep.subr.mxu0 0.0
    %206 = vmatpush1.msra.mxu0 0.0
    %207 = vmatprep.subr.mxu0 0.0
    %208 = vmatpush1.msra.mxu0 0.0
    %209 = vmatprep.subr.mxu0 0.0
    %210 = vmatpush1.msra.mxu0 0.0
    %211 = vmatprep.subr.mxu0 0.0
    %212 = vmatpush1.msra.mxu0 0.0
    %213 = vmatprep.subr.mxu0 0.0
    %214 = vmatpush1.msra.mxu0 0.0
    %215 = vmatprep.subr.mxu0 0.0
    %216 = vmatpush1.msra.mxu0 0.0
    %217 = vmatprep.subr.mxu0 0.0
    %218 = vmatpush1.msra.mxu0 0.0
    %219 = vmatprep.subr.mxu0 0.0
    %220 = vmatpush1.msra.mxu0 0.0
    %221 = vmatprep.subr.mxu0 0.0
    %222 = vmatpush1.msra.mxu0 0.0
    %223 = vmatprep.subr.mxu0 0.0
    %224 = vmatpush1.msra.mxu0 0.0
    %225 = vmatprep.subr.mxu0 0.0
    %226 = vmatpush1.msra.mxu0 0.0
    %227 = vmatprep.subr.mxu0 0.0
    %228 = vmatpush1.msra.mxu0 0.0
    %229 = vmatprep.subr.mxu0 0.0
    %230 = vmatpush1.msra.mxu0 0.0
    %231 = vmatprep.subr.mxu0 0.0
    %232 = vmatpush1.msra.mxu0 0.0
    %233 = vmatprep.subr.mxu0 0.0
    %234 = vmatpush1.msra.mxu0 0.0
    %235 = vmatprep.subr.mxu0 0.0
    %236 = vmatpush1.msra.mxu0 0.0
    %237 = vmatprep.subr.mxu0 0.0
    %238 = vmatpush1.msra.mxu0 0.0
    %239 = vmatprep.subr.mxu0 0.0
    %240 = vmatpush1.msra.mxu0 0.0
    %241 = vmatprep.subr.mxu0 0.0
    %242 = vmatpush1.msra.mxu0 0.0
    %243 = vmatprep.subr.mxu0 0.0
    %244 = vmatpush1.msra.mxu0 0.0
    %245 = vmatprep.subr.mxu0 0.0
    %246 = vmatpush1.msra.mxu0 0.0
    %247 = vmatprep.subr.mxu0 0.0
    %248 = vmatpush1.msra.mxu0 0.0
    %249 = vmatprep.subr.mxu0 0.0
    %250 = vmatpush1.msra.mxu0 0.0
    %251 = vmatprep.subr.mxu0 0.0
    %252 = vmatpush1.msra.mxu0 0.0
    %253 = vmatprep.subr.mxu0 0.0
    %254 = vmatpush1.msra.mxu0 0.0
    %255 = vmatprep.subr.mxu0 0.0
    %256 = vmatpush1.msra.mxu0 0.0
    %257 = vmatprep.mubr.f32.mxu0 0.0
    %v258 = vand.u32 %v79, 4294901760
    %259 = vmatmul.mubr.f32.gmra.mrb[0].mxu0 %v258
    %v260 = vpop.f32.mrb[0].mxu0
    %v261 = vadd.f32 %v160, %v260
    %v262 = vpop.f32.mrb[0].mxu0
    %263 = vmatprep.mubr.f32.mxu0 0.0
    %v264 = vand.u32 %v82, 4294901760
    %265 = vmatmul.mubr.f32.gmra.mrb[0].mxu0 %v264
    %v266 = vpop.f32.mrb[0].mxu0
    %v267 = vadd.f32 %v170, %v266
    %v268 = vpop.f32.mrb[0].mxu0
    %269 = vdwg.mxu0
    %270 = vmatprep.subr.mxu0 0.0
    %v271 = vand.u32 %v62, 4294901760
    %v272 = vsub.f32 %v62, %v271
    %273 = vmatpush1.msra.mxu0 %v272
    %274 = vmatprep.subr.mxu0 0.0
    %v275 = vand.u32 %v63, 4294901760
    %v276 = vsub.f32 %v63, %v275
    %277 = vmatpush1.msra.mxu0 %v276
    %278 = vmatprep.subr.mxu0 0.0
    %v279 = vand.u32 %v64, 4294901760
    %v280 = vsub.f32 %v64, %v279
    %281 = vmatpush1.msra.mxu0 %v280
    %282 = vmatprep.subr.mxu0 0.0
    %v283 = vand.u32 %v65, 4294901760
    %v284 = vsub.f32 %v65, %v283
    %285 = vmatpush1.msra.mxu0 %v284
    %286 = vmatprep.subr.mxu0 0.0
    %287 = vmatpush1.msra.mxu0 0.0
    %288 = vmatprep.subr.mxu0 0.0
    %289 = vmatpush1.msra.mxu0 0.0
    %290 = vmatprep.subr.mxu0 0.0
    %291 = vmatpush1.msra.mxu0 0.0
    %292 = vmatprep.subr.mxu0 0.0
    %293 = vmatpush1.msra.mxu0 0.0
    %294 = vmatprep.subr.mxu0 0.0
    %295 = vmatpush1.msra.mxu0 0.0
    %296 = vmatprep.subr.mxu0 0.0
    %297 = vmatpush1.msra.mxu0 0.0
    %298 = vmatprep.subr.mxu0 0.0
    %299 = vmatpush1.msra.mxu0 0.0
    %300 = vmatprep.subr.mxu0 0.0
    %301 = vmatpush1.msra.mxu0 0.0
    %302 = vmatprep.subr.mxu0 0.0
    %303 = vmatpush1.msra.mxu0 0.0
    %304 = vmatprep.subr.mxu0 0.0
    %305 = vmatpush1.msra.mxu0 0.0
    %306 = vmatprep.subr.mxu0 0.0
    %307 = vmatpush1.msra.mxu0 0.0
    %308 = vmatprep.subr.mxu0 0.0
    %309 = vmatpush1.msra.mxu0 0.0
    %310 = vmatprep.subr.mxu0 0.0
    %311 = vmatpush1.msra.mxu0 0.0
    %312 = vmatprep.subr.mxu0 0.0
    %313 = vmatpush1.msra.mxu0 0.0
    %314 = vmatprep.subr.mxu0 0.0
    %315 = vmatpush1.msra.mxu0 0.0
    %316 = vmatprep.subr.mxu0 0.0
    %317 = vmatpush1.msra.mxu0 0.0
    %318 = vmatprep.subr.mxu0 0.0
    %319 = vmatpush1.msra.mxu0 0.0
    %320 = vmatprep.subr.mxu0 0.0
    %321 = vmatpush1.msra.mxu0 0.0
    %322 = vmatprep.subr.mxu0 0.0
    %323 = vmatpush1.msra.mxu0 0.0
    %324 = vmatprep.subr.mxu0 0.0
    %325 = vmatpush1.msra.mxu0 0.0
    %326 = vmatprep.subr.mxu0 0.0
    %327 = vmatpush1.msra.mxu0 0.0
    %328 = vmatprep.subr.mxu0 0.0
    %329 = vmatpush1.msra.mxu0 0.0
    %330 = vmatprep.subr.mxu0 0.0
    %331 = vmatpush1.msra.mxu0 0.0
    %332 = vmatprep.subr.mxu0 0.0
    %333 = vmatpush1.msra.mxu0 0.0
    %334 = vmatprep.subr.mxu0 0.0
    %335 = vmatpush1.msra.mxu0 0.0
    %336 = vmatprep.subr.mxu0 0.0
    %337 = vmatpush1.msra.mxu0 0.0
    %338 = vmatprep.subr.mxu0 0.0
    %339 = vmatpush1.msra.mxu0 0.0
    %340 = vmatprep.subr.mxu0 0.0
    %341 = vmatpush1.msra.mxu0 0.0
    %342 = vmatprep.mubr.f32.mxu0 0.0
    %v343 = vand.u32 %v79, 4294901760
    %v344 = vsub.f32 %v79, %v343
    %345 = vmatmul.mubr.f32.gmra.mrb[0].mxu0 %v344
    %v346 = vpop.f32.mrb[0].mxu0
    %v347 = vadd.f32 %v261, %v346
    %v348 = vpop.f32.mrb[0].mxu0
    %349 = vmatprep.mubr.f32.mxu0 0.0
    %v350 = vand.u32 %v82, 4294901760
    %v351 = vsub.f32 %v82, %v350
    %352 = vmatmul.mubr.f32.gmra.mrb[0].mxu0 %v351
    %v353 = vpop.f32.mrb[0].mxu0
    %v354 = vadd.f32 %v267, %v353
    %v355 = vpop.f32.mrb[0].mxu0
    %356 = vdwg.mxu0
    %357 = vmatprep.subr.mxu0 0.0
    %v358 = vand.u32 %v62, 4294901760
    %359 = vmatpush1.msra.mxu0 %v358
    %360 = vmatprep.subr.mxu0 0.0
    %v361 = vand.u32 %v63, 4294901760
    %362 = vmatpush1.msra.mxu0 %v361
    %363 = vmatprep.subr.mxu0 0.0
    %v364 = vand.u32 %v64, 4294901760
    %365 = vmatpush1.msra.mxu0 %v364
    %366 = vmatprep.subr.mxu0 0.0
    %v367 = vand.u32 %v65, 4294901760
    %368 = vmatpush1.msra.mxu0 %v367
    %369 = vmatprep.subr.mxu0 0.0
    %370 = vmatpush1.msra.mxu0 0.0
    %371 = vmatprep.subr.mxu0 0.0
    %372 = vmatpush1.msra.mxu0 0.0
    %373 = vmatprep.subr.mxu0 0.0
    %374 = vmatpush1.msra.mxu0 0.0
    %375 = vmatprep.subr.mxu0 0.0
    %376 = vmatpush1.msra.mxu0 0.0
    %377 = vmatprep.subr.mxu0 0.0
    %378 = vmatpush1.msra.mxu0 0.0
    %379 = vmatprep.subr.mxu0 0.0
    %380 = vmatpush1.msra.mxu0 0.0
    %381 = vmatprep.subr.mxu0 0.0
    %382 = vmatpush1.msra.mxu0 0.0
    %383 = vmatprep.subr.mxu0 0.0
    %384 = vmatpush1.msra.mxu0 0.0
    %385 = vmatprep.subr.mxu0 0.0
    %386 = vmatpush1.msra.mxu0 0.0
    %387 = vmatprep.subr.mxu0 0.0
    %388 = vmatpush1.msra.mxu0 0.0
    %389 = vmatprep.subr.mxu0 0.0
    %390 = vmatpush1.msra.mxu0 0.0
    %391 = vmatprep.subr.mxu0 0.0
    %392 = vmatpush1.msra.mxu0 0.0
    %393 = vmatprep.subr.mxu0 0.0
    %394 = vmatpush1.msra.mxu0 0.0
    %395 = vmatprep.subr.mxu0 0.0
    %396 = vmatpush1.msra.mxu0 0.0
    %397 = vmatprep.subr.mxu0 0.0
    %398 = vmatpush1.msra.mxu0 0.0
    %399 = vmatprep.subr.mxu0 0.0
    %400 = vmatpush1.msra.mxu0 0.0
    %401 = vmatprep.subr.mxu0 0.0
    %402 = vmatpush1.msra.mxu0 0.0
    %403 = vmatprep.subr.mxu0 0.0
    %404 = vmatpush1.msra.mxu0 0.0
    %405 = vmatprep.subr.mxu0 0.0
    %406 = vmatpush1.msra.mxu0 0.0
    %407 = vmatprep.subr.mxu0 0.0
    %408 = vmatpush1.msra.mxu0 0.0
    %409 = vmatprep.subr.mxu0 0.0
    %410 = vmatpush1.msra.mxu0 0.0
    %411 = vmatprep.subr.mxu0 0.0
    %412 = vmatpush1.msra.mxu0 0.0
    %413 = vmatprep.subr.mxu0 0.0
    %414 = vmatpush1.msra.mxu0 0.0
    %415 = vmatprep.subr.mxu0 0.0
    %416 = vmatpush1.msra.mxu0 0.0
    %417 = vmatprep.subr.mxu0 0.0
    %418 = vmatpush1.msra.mxu0 0.0
    %419 = vmatprep.subr.mxu0 0.0
    %420 = vmatpush1.msra.mxu0 0.0
    %421 = vmatprep.subr.mxu0 0.0
    %422 = vmatpush1.msra.mxu0 0.0
    %423 = vmatprep.subr.mxu0 0.0
    %424 = vmatpush1.msra.mxu0 0.0
    %425 = vmatprep.mubr.f32.mxu0 0.0
    %v426 = vand.u32 %v79, 4294901760
    %v427 = vsub.f32 %v79, %v426
    %v428 = vand.u32 %v427, 4294901760
    %429 = vmatmul.mubr.f32.gmra.mrb[0].mxu0 %v428
    %v430 = vpop.f32.mrb[0].mxu0
    %v431 = vadd.f32 %v347, %v430
    %v432 = vpop.f32.mrb[0].mxu0
    %433 = vmatprep.mubr.f32.mxu0 0.0
    %v434 = vand.u32 %v82, 4294901760
    %v435 = vsub.f32 %v82, %v434
    %v436 = vand.u32 %v435, 4294901760
    %437 = vmatmul.mubr.f32.gmra.mrb[0].mxu0 %v436
    %v438 = vpop.f32.mrb[0].mxu0
    %v439 = vadd.f32 %v354, %v438
    %v440 = vpop.f32.mrb[0].mxu0
    %441 = vdwg.mxu0
    %442 = vmatprep.subr.mxu0 0.0
    %v443 = vand.u32 %v62, 4294901760
    %v444 = vsub.f32 %v62, %v443
    %v445 = vand.u32 %v444, 4294901760
    %446 = vmatpush1.msra.mxu0 %v445
    %447 = vmatprep.subr.mxu0 0.0
    %v448 = vand.u32 %v63, 4294901760
    %v449 = vsub.f32 %v63, %v448
    %v450 = vand.u32 %v449, 4294901760
    %451 = vmatpush1.msra.mxu0 %v450
    %452 = vmatprep.subr.mxu0 0.0
    %v453 = vand.u32 %v64, 4294901760
    %v454 = vsub.f32 %v64, %v453
    %v455 = vand.u32 %v454, 4294901760
    %456 = vmatpush1.msra.mxu0 %v455
    %457 = vmatprep.subr.mxu0 0.0
    %v458 = vand.u32 %v65, 4294901760
    %v459 = vsub.f32 %v65, %v458
    %v460 = vand.u32 %v459, 4294901760
    %461 = vmatpush1.msra.mxu0 %v460
    %462 = vmatprep.subr.mxu0 0.0
    %463 = vmatpush1.msra.mxu0 0.0
    %464 = vmatprep.subr.mxu0 0.0
    %465 = vmatpush1.msra.mxu0 0.0
    %466 = vmatprep.subr.mxu0 0.0
    %467 = vmatpush1.msra.mxu0 0.0
    %468 = vmatprep.subr.mxu0 0.0
    %469 = vmatpush1.msra.mxu0 0.0
    %470 = vmatprep.subr.mxu0 0.0
    %471 = vmatpush1.msra.mxu0 0.0
    %472 = vmatprep.subr.mxu0 0.0
    %473 = vmatpush1.msra.mxu0 0.0
    %474 = vmatprep.subr.mxu0 0.0
    %475 = vmatpush1.msra.mxu0 0.0
    %476 = vmatprep.subr.mxu0 0.0
    %477 = vmatpush1.msra.mxu0 0.0
    %478 = vmatprep.subr.mxu0 0.0
    %479 = vmatpush1.msra.mxu0 0.0
    %480 = vmatprep.subr.mxu0 0.0
    %481 = vmatpush1.msra.mxu0 0.0
    %482 = vmatprep.subr.mxu0 0.0
    %483 = vmatpush1.msra.mxu0 0.0
    %484 = vmatprep.subr.mxu0 0.0
    %485 = vmatpush1.msra.mxu0 0.0
    %486 = vmatprep.subr.mxu0 0.0
    %487 = vmatpush1.msra.mxu0 0.0
    %488 = vmatprep.subr.mxu0 0.0
    %489 = vmatpush1.msra.mxu0 0.0
    %490 = vmatprep.subr.mxu0 0.0
    %491 = vmatpush1.msra.mxu0 0.0
    %492 = vmatprep.subr.mxu0 0.0
    %493 = vmatpush1.msra.mxu0 0.0
    %494 = vmatprep.subr.mxu0 0.0
    %495 = vmatpush1.msra.mxu0 0.0
    %496 = vmatprep.subr.mxu0 0.0
    %497 = vmatpush1.msra.mxu0 0.0
    %498 = vmatprep.subr.mxu0 0.0
    %499 = vmatpush1.msra.mxu0 0.0
    %500 = vmatprep.subr.mxu0 0.0
    %501 = vmatpush1.msra.mxu0 0.0
    %502 = vmatprep.subr.mxu0 0.0
    %503 = vmatpush1.msra.mxu0 0.0
    %504 = vmatprep.subr.mxu0 0.0
    %505 = vmatpush1.msra.mxu0 0.0
    %506 = vmatprep.subr.mxu0 0.0
    %507 = vmatpush1.msra.mxu0 0.0
    %508 = vmatprep.subr.mxu0 0.0
    %509 = vmatpush1.msra.mxu0 0.0
    %510 = vmatprep.subr.mxu0 0.0
    %511 = vmatpush1.msra.mxu0 0.0
    %512 = vmatprep.subr.mxu0 0.0
    %513 = vmatpush1.msra.mxu0 0.0
    %514 = vmatprep.subr.mxu0 0.0
    %515 = vmatpush1.msra.mxu0 0.0
    %516 = vmatprep.subr.mxu0 0.0
    %517 = vmatpush1.msra.mxu0 0.0
    %518 = vmatprep.mubr.f32.mxu0 0.0
    %v519 = vand.u32 %v79, 4294901760
    %520 = vmatmul.mubr.f32.gmra.mrb[0].mxu0 %v519
    %v521 = vpop.f32.mrb[0].mxu0
    %v522 = vadd.f32 %v431, %v521
    %v523 = vpop.f32.mrb[0].mxu0
    %524 = vmatprep.mubr.f32.mxu0 0.0
    %v525 = vand.u32 %v82, 4294901760
    %526 = vmatmul.mubr.f32.gmra.mrb[0].mxu0 %v525
    %v527 = vpop.f32.mrb[0].mxu0
    %v528 = vadd.f32 %v439, %v527
    %v529 = vpop.f32.mrb[0].mxu0
    %530 = vdwg.mxu0
    %531 = vmatprep.subr.mxu0 0.0
    %v532 = vand.u32 %v62, 4294901760
    %533 = vmatpush1.msra.mxu0 %v532
    %534 = vmatprep.subr.mxu0 0.0
    %v535 = vand.u32 %v63, 4294901760
    %536 = vmatpush1.msra.mxu0 %v535
    %537 = vmatprep.subr.mxu0 0.0
    %v538 = vand.u32 %v64, 4294901760
    %539 = vmatpush1.msra.mxu0 %v538
    %540 = vmatprep.subr.mxu0 0.0
    %v541 = vand.u32 %v65, 4294901760
    %542 = vmatpush1.msra.mxu0 %v541
    %543 = vmatprep.subr.mxu0 0.0
    %544 = vmatpush1.msra.mxu0 0.0
    %545 = vmatprep.subr.mxu0 0.0
    %546 = vmatpush1.msra.mxu0 0.0
    %547 = vmatprep.subr.mxu0 0.0
    %548 = vmatpush1.msra.mxu0 0.0
    %549 = vmatprep.subr.mxu0 0.0
    %550 = vmatpush1.msra.mxu0 0.0
    %551 = vmatprep.subr.mxu0 0.0
    %552 = vmatpush1.msra.mxu0 0.0
    %553 = vmatprep.subr.mxu0 0.0
    %554 = vmatpush1.msra.mxu0 0.0
    %555 = vmatprep.subr.mxu0 0.0
    %556 = vmatpush1.msra.mxu0 0.0
    %557 = vmatprep.subr.mxu0 0.0
    %558 = vmatpush1.msra.mxu0 0.0
    %559 = vmatprep.subr.mxu0 0.0
    %560 = vmatpush1.msra.mxu0 0.0
    %561 = vmatprep.subr.mxu0 0.0
    %562 = vmatpush1.msra.mxu0 0.0
    %563 = vmatprep.subr.mxu0 0.0
    %564 = vmatpush1.msra.mxu0 0.0
    %565 = vmatprep.subr.mxu0 0.0
    %566 = vmatpush1.msra.mxu0 0.0
    %567 = vmatprep.subr.mxu0 0.0
    %568 = vmatpush1.msra.mxu0 0.0
    %569 = vmatprep.subr.mxu0 0.0
    %570 = vmatpush1.msra.mxu0 0.0
    %571 = vmatprep.subr.mxu0 0.0
    %572 = vmatpush1.msra.mxu0 0.0
    %573 = vmatprep.subr.mxu0 0.0
    %574 = vmatpush1.msra.mxu0 0.0
    %575 = vmatprep.subr.mxu0 0.0
    %576 = vmatpush1.msra.mxu0 0.0
    %577 = vmatprep.subr.mxu0 0.0
    %578 = vmatpush1.msra.mxu0 0.0
    %579 = vmatprep.subr.mxu0 0.0
    %580 = vmatpush1.msra.mxu0 0.0
    %581 = vmatprep.subr.mxu0 0.0
    %582 = vmatpush1.msra.mxu0 0.0
    %583 = vmatprep.subr.mxu0 0.0
    %584 = vmatpush1.msra.mxu0 0.0
    %585 = vmatprep.subr.mxu0 0.0
    %586 = vmatpush1.msra.mxu0 0.0
    %587 = vmatprep.subr.mxu0 0.0
    %588 = vmatpush1.msra.mxu0 0.0
    %589 = vmatprep.subr.mxu0 0.0
    %590 = vmatpush1.msra.mxu0 0.0
    %591 = vmatprep.subr.mxu0 0.0
    %592 = vmatpush1.msra.mxu0 0.0
    %593 = vmatprep.subr.mxu0 0.0
    %594 = vmatpush1.msra.mxu0 0.0
    %595 = vmatprep.subr.mxu0 0.0
    %596 = vmatpush1.msra.mxu0 0.0
    %597 = vmatprep.subr.mxu0 0.0
    %598 = vmatpush1.msra.mxu0 0.0
    %599 = vmatprep.mubr.f32.mxu0 0.0
    %v600 = vand.u32 %v79, 4294901760
    %601 = vmatmul.mubr.f32.gmra.mrb[0].mxu0 %v600
    %v602 = vpop.f32.mrb[0].mxu0
    %v603 = vadd.f32 %v522, %v602
    %v604 = vpop.f32.mrb[0].mxu0
    %605 = vmatprep.mubr.f32.mxu0 0.0
    %v606 = vand.u32 %v82, 4294901760
    %607 = vmatmul.mubr.f32.gmra.mrb[0].mxu0 %v606
    %v608 = vpop.f32.mrb[0].mxu0
    %v609 = vadd.f32 %v528, %v608
    %v610 = vpop.f32.mrb[0].mxu0
    %611 = vdwg.mxu0
    %614 = vrot.lane.b32.xlu0 %v603, 112
    %v615 = vpop.permute.xlu0 %614
    %616 = vrot.lane.b32.xlu0 %v609, 112
    %v617 = vpop.permute.xlu0 %616
    %618 = vrot.lane.b32.xlu0 %v603, 96
    %v619 = vpop.permute.xlu0 %618
    %620 = vrot.lane.b32.xlu0 %v609, 96
    %v621 = vpop.permute.xlu0 %620
    %622 = vrot.lane.b32.xlu0 %v615, 96
    %v623 = vpop.permute.xlu0 %622
    %624 = vrot.lane.b32.xlu0 %v617, 96
    %v625 = vpop.permute.xlu0 %624
    %vm626 = vcmask 130048
    %v627 = vsel %vm626, %v603, 0
    %v629 = vsel %vm626, %v609, 0
    %v631 = vsel %vm626, %v615, 0
    %v633 = vsel %vm626, %v617, 0
    %v635 = vsel %vm626, %v619, 0
    %v637 = vsel %vm626, %v621, 0
    %v639 = vsel %vm626, %v623, 0
    %v641 = vsel %vm626, %v625, 0
    %643 = vmatprep.subr.mxu0 0.0
    %v644 = vand.u32 %v635, 4294901760
    %645 = vmatpush1.xpose.msra.mxu0 %v644
    %646 = vmatprep.subr.mxu0 0.0
    %v647 = vand.u32 %v637, 4294901760
    %648 = vmatpush1.xpose.msra.mxu0 %v647
    %649 = vmatprep.subr.mxu0 0.0
    %v650 = vand.u32 %v639, 4294901760
    %651 = vmatpush1.xpose.msra.mxu0 %v650
    %652 = vmatprep.subr.mxu0 0.0
    %v653 = vand.u32 %v641, 4294901760
    %654 = vmatpush1.xpose.msra.mxu0 %v653
    %655 = vmatprep.subr.mxu0 0.0
    %656 = vmatpush1.xpose.msra.mxu0 0.0
    %657 = vmatprep.subr.mxu0 0.0
    %658 = vmatpush1.xpose.msra.mxu0 0.0
    %659 = vmatprep.subr.mxu0 0.0
    %660 = vmatpush1.xpose.msra.mxu0 0.0
    %661 = vmatprep.subr.mxu0 0.0
    %662 = vmatpush1.xpose.msra.mxu0 0.0
    %663 = vmatprep.subr.mxu0 0.0
    %664 = vmatpush1.xpose.msra.mxu0 0.0
    %665 = vmatprep.subr.mxu0 0.0
    %666 = vmatpush1.xpose.msra.mxu0 0.0
    %667 = vmatprep.subr.mxu0 0.0
    %668 = vmatpush1.xpose.msra.mxu0 0.0
    %669 = vmatprep.subr.mxu0 0.0
    %670 = vmatpush1.xpose.msra.mxu0 0.0
    %671 = vmatprep.subr.mxu0 0.0
    %672 = vmatpush1.xpose.msra.mxu0 0.0
    %673 = vmatprep.subr.mxu0 0.0
    %674 = vmatpush1.xpose.msra.mxu0 0.0
    %675 = vmatprep.subr.mxu0 0.0
    %676 = vmatpush1.xpose.msra.mxu0 0.0
    %677 = vmatprep.subr.mxu0 0.0
    %678 = vmatpush1.xpose.msra.mxu0 0.0
    %679 = vmatprep.subr.mxu0 0.0
    %680 = vmatpush1.xpose.msra.mxu0 0.0
    %681 = vmatprep.subr.mxu0 0.0
    %682 = vmatpush1.xpose.msra.mxu0 0.0
    %683 = vmatprep.subr.mxu0 0.0
    %684 = vmatpush1.xpose.msra.mxu0 0.0
    %685 = vmatprep.subr.mxu0 0.0
    %686 = vmatpush1.xpose.msra.mxu0 0.0
    %687 = vmatprep.subr.mxu0 0.0
    %688 = vmatpush1.xpose.msra.mxu0 0.0
    %689 = vmatprep.subr.mxu0 0.0
    %690 = vmatpush1.xpose.msra.mxu0 0.0
    %691 = vmatprep.subr.mxu0 0.0
    %692 = vmatpush1.xpose.msra.mxu0 0.0
    %693 = vmatprep.subr.mxu0 0.0
    %694 = vmatpush1.xpose.msra.mxu0 0.0
    %695 = vmatprep.subr.mxu0 0.0
    %696 = vmatpush1.xpose.msra.mxu0 0.0
    %697 = vmatprep.subr.mxu0 0.0
    %698 = vmatpush1.xpose.msra.mxu0 0.0
    %699 = vmatprep.subr.mxu0 0.0
    %700 = vmatpush1.xpose.msra.mxu0 0.0
    %701 = vmatprep.subr.mxu0 0.0
    %702 = vmatpush1.xpose.msra.mxu0 0.0
    %703 = vmatprep.subr.mxu0 0.0
    %704 = vmatpush1.xpose.msra.mxu0 0.0
    %705 = vmatprep.subr.mxu0 0.0
    %706 = vmatpush1.xpose.msra.mxu0 0.0
    %707 = vmatprep.subr.mxu0 0.0
    %708 = vmatpush1.xpose.msra.mxu0 0.0
    %709 = vmatprep.subr.mxu0 0.0
    %710 = vmatpush1.xpose.msra.mxu0 0.0
    %711 = vmatprep.mubr.f32.mxu0 0.0
    %v712 = vand.u32 %v627, 4294901760
    %v713 = vsub.f32 %v627, %v712
    %v714 = vand.u32 %v713, 4294901760
    %v715 = vsub.f32 %v713, %v714
    %v716 = vand.u32 %v715, 4294901760
    %717 = vmatmul.mubr.f32.gmra.mrb[0].mxu0 %v716
    %v718 = vpop.f32.mrb[0].mxu0
    %v719 = vadd.f32 0.0, %v718
    %v720 = vpop.f32.mrb[0].mxu0
    %721 = vmatprep.mubr.f32.mxu0 0.0
    %v722 = vand.u32 %v629, 4294901760
    %v723 = vsub.f32 %v629, %v722
    %v724 = vand.u32 %v723, 4294901760
    %v725 = vsub.f32 %v723, %v724
    %v726 = vand.u32 %v725, 4294901760
    %727 = vmatmul.mubr.f32.gmra.mrb[0].mxu0 %v726
    %v728 = vpop.f32.mrb[0].mxu0
    %v729 = vadd.f32 0.0, %v728
    %v730 = vpop.f32.mrb[0].mxu0
    %731 = vmatprep.mubr.f32.mxu0 0.0
    %v732 = vand.u32 %v631, 4294901760
    %v733 = vsub.f32 %v631, %v732
    %v734 = vand.u32 %v733, 4294901760
    %v735 = vsub.f32 %v733, %v734
    %v736 = vand.u32 %v735, 4294901760
    %737 = vmatmul.mubr.f32.gmra.mrb[0].mxu0 %v736
    %v738 = vpop.f32.mrb[0].mxu0
    %v739 = vadd.f32 0.0, %v738
    %v740 = vpop.f32.mrb[0].mxu0
    %741 = vmatprep.mubr.f32.mxu0 0.0
    %v742 = vand.u32 %v633, 4294901760
    %v743 = vsub.f32 %v633, %v742
    %v744 = vand.u32 %v743, 4294901760
    %v745 = vsub.f32 %v743, %v744
    %v746 = vand.u32 %v745, 4294901760
    %747 = vmatmul.mubr.f32.gmra.mrb[0].mxu0 %v746
    %v748 = vpop.f32.mrb[0].mxu0
    %v749 = vadd.f32 0.0, %v748
    %v750 = vpop.f32.mrb[0].mxu0
    %751 = vdwg.mxu0
    %752 = vmatprep.subr.mxu0 0.0
    %v753 = vand.u32 %v635, 4294901760
    %v754 = vsub.f32 %v635, %v753
    %v755 = vand.u32 %v754, 4294901760
    %v756 = vsub.f32 %v754, %v755
    %v757 = vand.u32 %v756, 4294901760
    %758 = vmatpush1.xpose.msra.mxu0 %v757
    %759 = vmatprep.subr.mxu0 0.0
    %v760 = vand.u32 %v637, 4294901760
    %v761 = vsub.f32 %v637, %v760
    %v762 = vand.u32 %v761, 4294901760
    %v763 = vsub.f32 %v761, %v762
    %v764 = vand.u32 %v763, 4294901760
    %765 = vmatpush1.xpose.msra.mxu0 %v764
    %766 = vmatprep.subr.mxu0 0.0
    %v767 = vand.u32 %v639, 4294901760
    %v768 = vsub.f32 %v639, %v767
    %v769 = vand.u32 %v768, 4294901760
    %v770 = vsub.f32 %v768, %v769
    %v771 = vand.u32 %v770, 4294901760
    %772 = vmatpush1.xpose.msra.mxu0 %v771
    %773 = vmatprep.subr.mxu0 0.0
    %v774 = vand.u32 %v641, 4294901760
    %v775 = vsub.f32 %v641, %v774
    %v776 = vand.u32 %v775, 4294901760
    %v777 = vsub.f32 %v775, %v776
    %v778 = vand.u32 %v777, 4294901760
    %779 = vmatpush1.xpose.msra.mxu0 %v778
    %780 = vmatprep.subr.mxu0 0.0
    %781 = vmatpush1.xpose.msra.mxu0 0.0
    %782 = vmatprep.subr.mxu0 0.0
    %783 = vmatpush1.xpose.msra.mxu0 0.0
    %784 = vmatprep.subr.mxu0 0.0
    %785 = vmatpush1.xpose.msra.mxu0 0.0
    %786 = vmatprep.subr.mxu0 0.0
    %787 = vmatpush1.xpose.msra.mxu0 0.0
    %788 = vmatprep.subr.mxu0 0.0
    %789 = vmatpush1.xpose.msra.mxu0 0.0
    %790 = vmatprep.subr.mxu0 0.0
    %791 = vmatpush1.xpose.msra.mxu0 0.0
    %792 = vmatprep.subr.mxu0 0.0
    %793 = vmatpush1.xpose.msra.mxu0 0.0
    %794 = vmatprep.subr.mxu0 0.0
    %795 = vmatpush1.xpose.msra.mxu0 0.0
    %796 = vmatprep.subr.mxu0 0.0
    %797 = vmatpush1.xpose.msra.mxu0 0.0
    %798 = vmatprep.subr.mxu0 0.0
    %799 = vmatpush1.xpose.msra.mxu0 0.0
    %800 = vmatprep.subr.mxu0 0.0
    %801 = vmatpush1.xpose.msra.mxu0 0.0
    %802 = vmatprep.subr.mxu0 0.0
    %803 = vmatpush1.xpose.msra.mxu0 0.0
    %804 = vmatprep.subr.mxu0 0.0
    %805 = vmatpush1.xpose.msra.mxu0 0.0
    %806 = vmatprep.subr.mxu0 0.0
    %807 = vmatpush1.xpose.msra.mxu0 0.0
    %808 = vmatprep.subr.mxu0 0.0
    %809 = vmatpush1.xpose.msra.mxu0 0.0
    %810 = vmatprep.subr.mxu0 0.0
    %811 = vmatpush1.xpose.msra.mxu0 0.0
    %812 = vmatprep.subr.mxu0 0.0
    %813 = vmatpush1.xpose.msra.mxu0 0.0
    %814 = vmatprep.subr.mxu0 0.0
    %815 = vmatpush1.xpose.msra.mxu0 0.0
    %816 = vmatprep.subr.mxu0 0.0
    %817 = vmatpush1.xpose.msra.mxu0 0.0
    %818 = vmatprep.subr.mxu0 0.0
    %819 = vmatpush1.xpose.msra.mxu0 0.0
    %820 = vmatprep.subr.mxu0 0.0
    %821 = vmatpush1.xpose.msra.mxu0 0.0
    %822 = vmatprep.subr.mxu0 0.0
    %823 = vmatpush1.xpose.msra.mxu0 0.0
    %824 = vmatprep.subr.mxu0 0.0
    %825 = vmatpush1.xpose.msra.mxu0 0.0
    %826 = vmatprep.subr.mxu0 0.0
    %827 = vmatpush1.xpose.msra.mxu0 0.0
    %828 = vmatprep.subr.mxu0 0.0
    %829 = vmatpush1.xpose.msra.mxu0 0.0
    %830 = vmatprep.subr.mxu0 0.0
    %831 = vmatpush1.xpose.msra.mxu0 0.0
    %832 = vmatprep.subr.mxu0 0.0
    %833 = vmatpush1.xpose.msra.mxu0 0.0
    %834 = vmatprep.subr.mxu0 0.0
    %835 = vmatpush1.xpose.msra.mxu0 0.0
    %836 = vmatprep.mubr.f32.mxu0 0.0
    %v837 = vand.u32 %v627, 4294901760
    %838 = vmatmul.mubr.f32.gmra.mrb[0].mxu0 %v837
    %v839 = vpop.f32.mrb[0].mxu0
    %v840 = vadd.f32 %v719, %v839
    %v841 = vpop.f32.mrb[0].mxu0
    %842 = vmatprep.mubr.f32.mxu0 0.0
    %v843 = vand.u32 %v629, 4294901760
    %844 = vmatmul.mubr.f32.gmra.mrb[0].mxu0 %v843
    %v845 = vpop.f32.mrb[0].mxu0
    %v846 = vadd.f32 %v729, %v845
    %v847 = vpop.f32.mrb[0].mxu0
    %848 = vmatprep.mubr.f32.mxu0 0.0
    %v849 = vand.u32 %v631, 4294901760
    %850 = vmatmul.mubr.f32.gmra.mrb[0].mxu0 %v849
    %v851 = vpop.f32.mrb[0].mxu0
    %v852 = vadd.f32 %v739, %v851
    %v853 = vpop.f32.mrb[0].mxu0
    %854 = vmatprep.mubr.f32.mxu0 0.0
    %v855 = vand.u32 %v633, 4294901760
    %856 = vmatmul.mubr.f32.gmra.mrb[0].mxu0 %v855
    %v857 = vpop.f32.mrb[0].mxu0
    %v858 = vadd.f32 %v749, %v857
    %v859 = vpop.f32.mrb[0].mxu0
    %860 = vdwg.mxu0
    %861 = vmatprep.subr.mxu0 0.0
    %v862 = vand.u32 %v635, 4294901760
    %v863 = vsub.f32 %v635, %v862
    %864 = vmatpush1.xpose.msra.mxu0 %v863
    %865 = vmatprep.subr.mxu0 0.0
    %v866 = vand.u32 %v637, 4294901760
    %v867 = vsub.f32 %v637, %v866
    %868 = vmatpush1.xpose.msra.mxu0 %v867
    %869 = vmatprep.subr.mxu0 0.0
    %v870 = vand.u32 %v639, 4294901760
    %v871 = vsub.f32 %v639, %v870
    %872 = vmatpush1.xpose.msra.mxu0 %v871
    %873 = vmatprep.subr.mxu0 0.0
    %v874 = vand.u32 %v641, 4294901760
    %v875 = vsub.f32 %v641, %v874
    %876 = vmatpush1.xpose.msra.mxu0 %v875
    %877 = vmatprep.subr.mxu0 0.0
    %878 = vmatpush1.xpose.msra.mxu0 0.0
    %879 = vmatprep.subr.mxu0 0.0
    %880 = vmatpush1.xpose.msra.mxu0 0.0
    %881 = vmatprep.subr.mxu0 0.0
    %882 = vmatpush1.xpose.msra.mxu0 0.0
    %883 = vmatprep.subr.mxu0 0.0
    %884 = vmatpush1.xpose.msra.mxu0 0.0
    %885 = vmatprep.subr.mxu0 0.0
    %886 = vmatpush1.xpose.msra.mxu0 0.0
    %887 = vmatprep.subr.mxu0 0.0
    %888 = vmatpush1.xpose.msra.mxu0 0.0
    %889 = vmatprep.subr.mxu0 0.0
    %890 = vmatpush1.xpose.msra.mxu0 0.0
    %891 = vmatprep.subr.mxu0 0.0
    %892 = vmatpush1.xpose.msra.mxu0 0.0
    %893 = vmatprep.subr.mxu0 0.0
    %894 = vmatpush1.xpose.msra.mxu0 0.0
    %895 = vmatprep.subr.mxu0 0.0
    %896 = vmatpush1.xpose.msra.mxu0 0.0
    %897 = vmatprep.subr.mxu0 0.0
    %898 = vmatpush1.xpose.msra.mxu0 0.0
    %899 = vmatprep.subr.mxu0 0.0
    %900 = vmatpush1.xpose.msra.mxu0 0.0
    %901 = vmatprep.subr.mxu0 0.0
    %902 = vmatpush1.xpose.msra.mxu0 0.0
    %903 = vmatprep.subr.mxu0 0.0
    %904 = vmatpush1.xpose.msra.mxu0 0.0
    %905 = vmatprep.subr.mxu0 0.0
    %906 = vmatpush1.xpose.msra.mxu0 0.0
    %907 = vmatprep.subr.mxu0 0.0
    %908 = vmatpush1.xpose.msra.mxu0 0.0
    %909 = vmatprep.subr.mxu0 0.0
    %910 = vmatpush1.xpose.msra.mxu0 0.0
    %911 = vmatprep.subr.mxu0 0.0
    %912 = vmatpush1.xpose.msra.mxu0 0.0
    %913 = vmatprep.subr.mxu0 0.0
    %914 = vmatpush1.xpose.msra.mxu0 0.0
    %915 = vmatprep.subr.mxu0 0.0
    %916 = vmatpush1.xpose.msra.mxu0 0.0
    %917 = vmatprep.subr.mxu0 0.0
    %918 = vmatpush1.xpose.msra.mxu0 0.0
    %919 = vmatprep.subr.mxu0 0.0
    %920 = vmatpush1.xpose.msra.mxu0 0.0
    %921 = vmatprep.subr.mxu0 0.0
    %922 = vmatpush1.xpose.msra.mxu0 0.0
    %923 = vmatprep.subr.mxu0 0.0
    %924 = vmatpush1.xpose.msra.mxu0 0.0
    %925 = vmatprep.subr.mxu0 0.0
    %926 = vmatpush1.xpose.msra.mxu0 0.0
    %927 = vmatprep.subr.mxu0 0.0
    %928 = vmatpush1.xpose.msra.mxu0 0.0
    %929 = vmatprep.subr.mxu0 0.0
    %930 = vmatpush1.xpose.msra.mxu0 0.0
    %931 = vmatprep.subr.mxu0 0.0
    %932 = vmatpush1.xpose.msra.mxu0 0.0
    %933 = vmatprep.mubr.f32.mxu0 0.0
    %v934 = vand.u32 %v627, 4294901760
    %v935 = vsub.f32 %v627, %v934
    %936 = vmatmul.mubr.f32.gmra.mrb[0].mxu0 %v935
    %v937 = vpop.f32.mrb[0].mxu0
    %v938 = vadd.f32 %v840, %v937
    %v939 = vpop.f32.mrb[0].mxu0
    %940 = vmatprep.mubr.f32.mxu0 0.0
    %v941 = vand.u32 %v629, 4294901760
    %v942 = vsub.f32 %v629, %v941
    %943 = vmatmul.mubr.f32.gmra.mrb[0].mxu0 %v942
    %v944 = vpop.f32.mrb[0].mxu0
    %v945 = vadd.f32 %v846, %v944
    %v946 = vpop.f32.mrb[0].mxu0
    %947 = vmatprep.mubr.f32.mxu0 0.0
    %v948 = vand.u32 %v631, 4294901760
    %v949 = vsub.f32 %v631, %v948
    %950 = vmatmul.mubr.f32.gmra.mrb[0].mxu0 %v949
    %v951 = vpop.f32.mrb[0].mxu0
    %v952 = vadd.f32 %v852, %v951
    %v953 = vpop.f32.mrb[0].mxu0
    %954 = vmatprep.mubr.f32.mxu0 0.0
    %v955 = vand.u32 %v633, 4294901760
    %v956 = vsub.f32 %v633, %v955
    %957 = vmatmul.mubr.f32.gmra.mrb[0].mxu0 %v956
    %v958 = vpop.f32.mrb[0].mxu0
    %v959 = vadd.f32 %v858, %v958
    %v960 = vpop.f32.mrb[0].mxu0
    %961 = vdwg.mxu0
    %962 = vmatprep.subr.mxu0 0.0
    %v963 = vand.u32 %v635, 4294901760
    %964 = vmatpush1.xpose.msra.mxu0 %v963
    %965 = vmatprep.subr.mxu0 0.0
    %v966 = vand.u32 %v637, 4294901760
    %967 = vmatpush1.xpose.msra.mxu0 %v966
    %968 = vmatprep.subr.mxu0 0.0
    %v969 = vand.u32 %v639, 4294901760
    %970 = vmatpush1.xpose.msra.mxu0 %v969
    %971 = vmatprep.subr.mxu0 0.0
    %v972 = vand.u32 %v641, 4294901760
    %973 = vmatpush1.xpose.msra.mxu0 %v972
    %974 = vmatprep.subr.mxu0 0.0
    %975 = vmatpush1.xpose.msra.mxu0 0.0
    %976 = vmatprep.subr.mxu0 0.0
    %977 = vmatpush1.xpose.msra.mxu0 0.0
    %978 = vmatprep.subr.mxu0 0.0
    %979 = vmatpush1.xpose.msra.mxu0 0.0
    %980 = vmatprep.subr.mxu0 0.0
    %981 = vmatpush1.xpose.msra.mxu0 0.0
    %982 = vmatprep.subr.mxu0 0.0
    %983 = vmatpush1.xpose.msra.mxu0 0.0
    %984 = vmatprep.subr.mxu0 0.0
    %985 = vmatpush1.xpose.msra.mxu0 0.0
    %986 = vmatprep.subr.mxu0 0.0
    %987 = vmatpush1.xpose.msra.mxu0 0.0
    %988 = vmatprep.subr.mxu0 0.0
    %989 = vmatpush1.xpose.msra.mxu0 0.0
    %990 = vmatprep.subr.mxu0 0.0
    %991 = vmatpush1.xpose.msra.mxu0 0.0
    %992 = vmatprep.subr.mxu0 0.0
    %993 = vmatpush1.xpose.msra.mxu0 0.0
    %994 = vmatprep.subr.mxu0 0.0
    %995 = vmatpush1.xpose.msra.mxu0 0.0
    %996 = vmatprep.subr.mxu0 0.0
    %997 = vmatpush1.xpose.msra.mxu0 0.0
    %998 = vmatprep.subr.mxu0 0.0
    %999 = vmatpush1.xpose.msra.mxu0 0.0
    %1000 = vmatprep.subr.mxu0 0.0
    %1001 = vmatpush1.xpose.msra.mxu0 0.0
    %1002 = vmatprep.subr.mxu0 0.0
    %1003 = vmatpush1.xpose.msra.mxu0 0.0
    %1004 = vmatprep.subr.mxu0 0.0
    %1005 = vmatpush1.xpose.msra.mxu0 0.0
    %1006 = vmatprep.subr.mxu0 0.0
    %1007 = vmatpush1.xpose.msra.mxu0 0.0
    %1008 = vmatprep.subr.mxu0 0.0
    %1009 = vmatpush1.xpose.msra.mxu0 0.0
    %1010 = vmatprep.subr.mxu0 0.0
    %1011 = vmatpush1.xpose.msra.mxu0 0.0
    %1012 = vmatprep.subr.mxu0 0.0
    %1013 = vmatpush1.xpose.msra.mxu0 0.0
    %1014 = vmatprep.subr.mxu0 0.0
    %1015 = vmatpush1.xpose.msra.mxu0 0.0
    %1016 = vmatprep.subr.mxu0 0.0
    %1017 = vmatpush1.xpose.msra.mxu0 0.0
    %1018 = vmatprep.subr.mxu0 0.0
    %1019 = vmatpush1.xpose.msra.mxu0 0.0
    %1020 = vmatprep.subr.mxu0 0.0
    %1021 = vmatpush1.xpose.msra.mxu0 0.0
    %1022 = vmatprep.subr.mxu0 0.0
    %1023 = vmatpush1.xpose.msra.mxu0 0.0
    %1024 = vmatprep.subr.mxu0 0.0
    %1025 = vmatpush1.xpose.msra.mxu0 0.0
    %1026 = vmatprep.subr.mxu0 0.0
    %1027 = vmatpush1.xpose.msra.mxu0 0.0
    %1028 = vmatprep.subr.mxu0 0.0
    %1029 = vmatpush1.xpose.msra.mxu0 0.0
    %1030 = vmatprep.mubr.f32.mxu0 0.0
    %v1031 = vand.u32 %v627, 4294901760
    %v1032 = vsub.f32 %v627, %v1031
    %v1033 = vand.u32 %v1032, 4294901760
    %1034 = vmatmul.mubr.f32.gmra.mrb[0].mxu0 %v1033
    %v1035 = vpop.f32.mrb[0].mxu0
    %v1036 = vadd.f32 %v938, %v1035
    %v1037 = vpop.f32.mrb[0].mxu0
    %1038 = vmatprep.mubr.f32.mxu0 0.0
    %v1039 = vand.u32 %v629, 4294901760
    %v1040 = vsub.f32 %v629, %v1039
    %v1041 = vand.u32 %v1040, 4294901760
    %1042 = vmatmul.mubr.f32.gmra.mrb[0].mxu0 %v1041
    %v1043 = vpop.f32.mrb[0].mxu0
    %v1044 = vadd.f32 %v945, %v1043
    %v1045 = vpop.f32.mrb[0].mxu0
    %1046 = vmatprep.mubr.f32.mxu0 0.0
    %v1047 = vand.u32 %v631, 4294901760
    %v1048 = vsub.f32 %v631, %v1047
    %v1049 = vand.u32 %v1048, 4294901760
    %1050 = vmatmul.mubr.f32.gmra.mrb[0].mxu0 %v1049
    %v1051 = vpop.f32.mrb[0].mxu0
    %v1052 = vadd.f32 %v952, %v1051
    %v1053 = vpop.f32.mrb[0].mxu0
    %1054 = vmatprep.mubr.f32.mxu0 0.0
    %v1055 = vand.u32 %v633, 4294901760
    %v1056 = vsub.f32 %v633, %v1055
    %v1057 = vand.u32 %v1056, 4294901760
    %1058 = vmatmul.mubr.f32.gmra.mrb[0].mxu0 %v1057
    %v1059 = vpop.f32.mrb[0].mxu0
    %v1060 = vadd.f32 %v959, %v1059
    %v1061 = vpop.f32.mrb[0].mxu0
    %1062 = vdwg.mxu0
    %1063 = vmatprep.subr.mxu0 0.0
    %v1064 = vand.u32 %v635, 4294901760
    %v1065 = vsub.f32 %v635, %v1064
    %v1066 = vand.u32 %v1065, 4294901760
    %1067 = vmatpush1.xpose.msra.mxu0 %v1066
    %1068 = vmatprep.subr.mxu0 0.0
    %v1069 = vand.u32 %v637, 4294901760
    %v1070 = vsub.f32 %v637, %v1069
    %v1071 = vand.u32 %v1070, 4294901760
    %1072 = vmatpush1.xpose.msra.mxu0 %v1071
    %1073 = vmatprep.subr.mxu0 0.0
    %v1074 = vand.u32 %v639, 4294901760
    %v1075 = vsub.f32 %v639, %v1074
    %v1076 = vand.u32 %v1075, 4294901760
    %1077 = vmatpush1.xpose.msra.mxu0 %v1076
    %1078 = vmatprep.subr.mxu0 0.0
    %v1079 = vand.u32 %v641, 4294901760
    %v1080 = vsub.f32 %v641, %v1079
    %v1081 = vand.u32 %v1080, 4294901760
    %1082 = vmatpush1.xpose.msra.mxu0 %v1081
    %1083 = vmatprep.subr.mxu0 0.0
    %1084 = vmatpush1.xpose.msra.mxu0 0.0
    %1085 = vmatprep.subr.mxu0 0.0
    %1086 = vmatpush1.xpose.msra.mxu0 0.0
    %1087 = vmatprep.subr.mxu0 0.0
    %1088 = vmatpush1.xpose.msra.mxu0 0.0
    %1089 = vmatprep.subr.mxu0 0.0
    %1090 = vmatpush1.xpose.msra.mxu0 0.0
    %1091 = vmatprep.subr.mxu0 0.0
    %1092 = vmatpush1.xpose.msra.mxu0 0.0
    %1093 = vmatprep.subr.mxu0 0.0
    %1094 = vmatpush1.xpose.msra.mxu0 0.0
    %1095 = vmatprep.subr.mxu0 0.0
    %1096 = vmatpush1.xpose.msra.mxu0 0.0
    %1097 = vmatprep.subr.mxu0 0.0
    %1098 = vmatpush1.xpose.msra.mxu0 0.0
    %1099 = vmatprep.subr.mxu0 0.0
    %1100 = vmatpush1.xpose.msra.mxu0 0.0
    %1101 = vmatprep.subr.mxu0 0.0
    %1102 = vmatpush1.xpose.msra.mxu0 0.0
    %1103 = vmatprep.subr.mxu0 0.0
    %1104 = vmatpush1.xpose.msra.mxu0 0.0
    %1105 = vmatprep.subr.mxu0 0.0
    %1106 = vmatpush1.xpose.msra.mxu0 0.0
    %1107 = vmatprep.subr.mxu0 0.0
    %1108 = vmatpush1.xpose.msra.mxu0 0.0
    %1109 = vmatprep.subr.mxu0 0.0
    %1110 = vmatpush1.xpose.msra.mxu0 0.0
    %1111 = vmatprep.subr.mxu0 0.0
    %1112 = vmatpush1.xpose.msra.mxu0 0.0
    %1113 = vmatprep.subr.mxu0 0.0
    %1114 = vmatpush1.xpose.msra.mxu0 0.0
    %1115 = vmatprep.subr.mxu0 0.0
    %1116 = vmatpush1.xpose.msra.mxu0 0.0
    %1117 = vmatprep.subr.mxu0 0.0
    %1118 = vmatpush1.xpose.msra.mxu0 0.0
    %1119 = vmatprep.subr.mxu0 0.0
    %1120 = vmatpush1.xpose.msra.mxu0 0.0
    %1121 = vmatprep.subr.mxu0 0.0
    %1122 = vmatpush1.xpose.msra.mxu0 0.0
    %1123 = vmatprep.subr.mxu0 0.0
    %1124 = vmatpush1.xpose.msra.mxu0 0.0
    %1125 = vmatprep.subr.mxu0 0.0
    %1126 = vmatpush1.xpose.msra.mxu0 0.0
    %1127 = vmatprep.subr.mxu0 0.0
    %1128 = vmatpush1.xpose.msra.mxu0 0.0
    %1129 = vmatprep.subr.mxu0 0.0
    %1130 = vmatpush1.xpose.msra.mxu0 0.0
    %1131 = vmatprep.subr.mxu0 0.0
    %1132 = vmatpush1.xpose.msra.mxu0 0.0
    %1133 = vmatprep.subr.mxu0 0.0
    %1134 = vmatpush1.xpose.msra.mxu0 0.0
    %1135 = vmatprep.subr.mxu0 0.0
    %1136 = vmatpush1.xpose.msra.mxu0 0.0
    %1137 = vmatprep.subr.mxu0 0.0
    %1138 = vmatpush1.xpose.msra.mxu0 0.0
    %1139 = vmatprep.mubr.f32.mxu0 0.0
    %v1140 = vand.u32 %v627, 4294901760
    %1141 = vmatmul.mubr.f32.gmra.mrb[0].mxu0 %v1140
    %v1142 = vpop.f32.mrb[0].mxu0
    %v1143 = vadd.f32 %v1036, %v1142
    %v1144 = vpop.f32.mrb[0].mxu0
    %1145 = vmatprep.mubr.f32.mxu0 0.0
    %v1146 = vand.u32 %v629, 4294901760
    %1147 = vmatmul.mubr.f32.gmra.mrb[0].mxu0 %v1146
    %v1148 = vpop.f32.mrb[0].mxu0
    %v1149 = vadd.f32 %v1044, %v1148
    %v1150 = vpop.f32.mrb[0].mxu0
    %1151 = vmatprep.mubr.f32.mxu0 0.0
    %v1152 = vand.u32 %v631, 4294901760
    %1153 = vmatmul.mubr.f32.gmra.mrb[0].mxu0 %v1152
    %v1154 = vpop.f32.mrb[0].mxu0
    %v1155 = vadd.f32 %v1052, %v1154
    %v1156 = vpop.f32.mrb[0].mxu0
    %1157 = vmatprep.mubr.f32.mxu0 0.0
    %v1158 = vand.u32 %v633, 4294901760
    %1159 = vmatmul.mubr.f32.gmra.mrb[0].mxu0 %v1158
    %v1160 = vpop.f32.mrb[0].mxu0
    %v1161 = vadd.f32 %v1060, %v1160
    %v1162 = vpop.f32.mrb[0].mxu0
    %1163 = vdwg.mxu0
    %1164 = vmatprep.subr.mxu0 0.0
    %v1165 = vand.u32 %v635, 4294901760
    %1166 = vmatpush1.xpose.msra.mxu0 %v1165
    %1167 = vmatprep.subr.mxu0 0.0
    %v1168 = vand.u32 %v637, 4294901760
    %1169 = vmatpush1.xpose.msra.mxu0 %v1168
    %1170 = vmatprep.subr.mxu0 0.0
    %v1171 = vand.u32 %v639, 4294901760
    %1172 = vmatpush1.xpose.msra.mxu0 %v1171
    %1173 = vmatprep.subr.mxu0 0.0
    %v1174 = vand.u32 %v641, 4294901760
    %1175 = vmatpush1.xpose.msra.mxu0 %v1174
    %1176 = vmatprep.subr.mxu0 0.0
    %1177 = vmatpush1.xpose.msra.mxu0 0.0
    %1178 = vmatprep.subr.mxu0 0.0
    %1179 = vmatpush1.xpose.msra.mxu0 0.0
    %1180 = vmatprep.subr.mxu0 0.0
    %1181 = vmatpush1.xpose.msra.mxu0 0.0
    %1182 = vmatprep.subr.mxu0 0.0
    %1183 = vmatpush1.xpose.msra.mxu0 0.0
    %1184 = vmatprep.subr.mxu0 0.0
    %1185 = vmatpush1.xpose.msra.mxu0 0.0
    %1186 = vmatprep.subr.mxu0 0.0
    %1187 = vmatpush1.xpose.msra.mxu0 0.0
    %1188 = vmatprep.subr.mxu0 0.0
    %1189 = vmatpush1.xpose.msra.mxu0 0.0
    %1190 = vmatprep.subr.mxu0 0.0
    %1191 = vmatpush1.xpose.msra.mxu0 0.0
    %1192 = vmatprep.subr.mxu0 0.0
    %1193 = vmatpush1.xpose.msra.mxu0 0.0
    %1194 = vmatprep.subr.mxu0 0.0
    %1195 = vmatpush1.xpose.msra.mxu0 0.0
    %1196 = vmatprep.subr.mxu0 0.0
    %1197 = vmatpush1.xpose.msra.mxu0 0.0
    %1198 = vmatprep.subr.mxu0 0.0
    %1199 = vmatpush1.xpose.msra.mxu0 0.0
    %1200 = vmatprep.subr.mxu0 0.0
    %1201 = vmatpush1.xpose.msra.mxu0 0.0
    %1202 = vmatprep.subr.mxu0 0.0
    %1203 = vmatpush1.xpose.msra.mxu0 0.0
    %1204 = vmatprep.subr.mxu0 0.0
    %1205 = vmatpush1.xpose.msra.mxu0 0.0
    %1206 = vmatprep.subr.mxu0 0.0
    %1207 = vmatpush1.xpose.msra.mxu0 0.0
    %1208 = vmatprep.subr.mxu0 0.0
    %1209 = vmatpush1.xpose.msra.mxu0 0.0
    %1210 = vmatprep.subr.mxu0 0.0
    %1211 = vmatpush1.xpose.msra.mxu0 0.0
    %1212 = vmatprep.subr.mxu0 0.0
    %1213 = vmatpush1.xpose.msra.mxu0 0.0
    %1214 = vmatprep.subr.mxu0 0.0
    %1215 = vmatpush1.xpose.msra.mxu0 0.0
    %1216 = vmatprep.subr.mxu0 0.0
    %1217 = vmatpush1.xpose.msra.mxu0 0.0
    %1218 = vmatprep.subr.mxu0 0.0
    %1219 = vmatpush1.xpose.msra.mxu0 0.0
    %1220 = vmatprep.subr.mxu0 0.0
    %1221 = vmatpush1.xpose.msra.mxu0 0.0
    %1222 = vmatprep.subr.mxu0 0.0
    %1223 = vmatpush1.xpose.msra.mxu0 0.0
    %1224 = vmatprep.subr.mxu0 0.0
    %1225 = vmatpush1.xpose.msra.mxu0 0.0
    %1226 = vmatprep.subr.mxu0 0.0
    %1227 = vmatpush1.xpose.msra.mxu0 0.0
    %1228 = vmatprep.subr.mxu0 0.0
    %1229 = vmatpush1.xpose.msra.mxu0 0.0
    %1230 = vmatprep.subr.mxu0 0.0
    %1231 = vmatpush1.xpose.msra.mxu0 0.0
    %1232 = vmatprep.mubr.f32.mxu0 0.0
    %v1233 = vand.u32 %v627, 4294901760
    %1234 = vmatmul.mubr.f32.gmra.mrb[0].mxu0 %v1233
    %v1235 = vpop.f32.mrb[0].mxu0
    %v1236 = vadd.f32 %v1143, %v1235
    %v1237 = vpop.f32.mrb[0].mxu0
    %1238 = vmatprep.mubr.f32.mxu0 0.0
    %v1239 = vand.u32 %v629, 4294901760
    %1240 = vmatmul.mubr.f32.gmra.mrb[0].mxu0 %v1239
    %v1241 = vpop.f32.mrb[0].mxu0
    %v1242 = vadd.f32 %v1149, %v1241
    %v1243 = vpop.f32.mrb[0].mxu0
    %1244 = vmatprep.mubr.f32.mxu0 0.0
    %v1245 = vand.u32 %v631, 4294901760
    %1246 = vmatmul.mubr.f32.gmra.mrb[0].mxu0 %v1245
    %v1247 = vpop.f32.mrb[0].mxu0
    %v1248 = vadd.f32 %v1155, %v1247
    %v1249 = vpop.f32.mrb[0].mxu0
    %1250 = vmatprep.mubr.f32.mxu0 0.0
    %v1251 = vand.u32 %v633, 4294901760
    %1252 = vmatmul.mubr.f32.gmra.mrb[0].mxu0 %v1251
    %v1253 = vpop.f32.mrb[0].mxu0
    %v1254 = vadd.f32 %v1161, %v1253
    %v1255 = vpop.f32.mrb[0].mxu0
    %1256 = vdwg.mxu0
    %v1257 = vmul.f32 %v1236, 0.25
    %v1258 = vmul.f32 %v1242, 0.25
    %v1259 = vmul.f32 %v1248, 0.25
    %v1260 = vmul.f32 %v1254, 0.25
    %v1261 = vadd.f32 %v1257, %v58
    %v1262 = vadd.f32 %v1258, %v59
    %v1263 = vadd.f32 %v1259, %v60
    %v1264 = vadd.f32 %v1260, %v61
    %v1265 = vsel %vm77, %v1261, -inf
    %1266 = vmax.xlane.f32.xlu0 %v1265
    %v1267 = vpop.xlane.xlu0 %1266
    %v1268 = vsel %vm77, %v1262, -inf
    %1269 = vmax.xlane.f32.xlu0 %v1268
    %v1270 = vpop.xlane.xlu0 %1269
    %v1271 = vsel %vm77, %v1263, -inf
    %1272 = vmax.xlane.f32.xlu0 %v1271
    %v1273 = vpop.xlane.xlu0 %1272
    %v1274 = vsel %vm77, %v1264, -inf
    %1275 = vmax.xlane.f32.xlu0 %v1274
    %v1276 = vpop.xlane.xlu0 %1275
    %v1277 = vsub.f32 %v1261, %v1267
    %v1278 = vsub.f32 %v1262, %v1270
    %v1279 = vsub.f32 %v1263, %v1273
    %v1280 = vsub.f32 %v1264, %v1276
    %v1281 = vmul.f32 %v1277, 1.442695
    %v1282 = vpow.pop %v1281
    %v1283 = vmul.f32 %v1278, 1.442695
    %v1284 = vpow.pop %v1283
    %v1285 = vmul.f32 %v1279, 1.442695
    %v1286 = vpow.pop %v1285
    %v1287 = vmul.f32 %v1280, 1.442695
    %v1288 = vpow.pop %v1287
    %v1289 = vsel %vm77, %v1282, 0.0
    %1290 = vadd.xlane.f32.xlu0 %v1289
    %v1291 = vpop.xlane.xlu0 %1290
    %v1292 = vsel %vm77, %v1284, 0.0
    %1293 = vadd.xlane.f32.xlu0 %v1292
    %v1294 = vpop.xlane.xlu0 %1293
    %v1295 = vsel %vm77, %v1286, 0.0
    %1296 = vadd.xlane.f32.xlu0 %v1295
    %v1297 = vpop.xlane.xlu0 %1296
    %v1298 = vsel %vm77, %v1288, 0.0
    %1299 = vadd.xlane.f32.xlu0 %v1298
    %v1300 = vpop.xlane.xlu0 %1299
    %v1301 = vrcp.pop %v1291
    %v1302 = vmul.f32 %v1282, %v1301
    %v1303 = vrcp.pop %v1294
    %v1304 = vmul.f32 %v1284, %v1303
    %v1305 = vrcp.pop %v1297
    %v1306 = vmul.f32 %v1286, %v1305
    %v1307 = vrcp.pop %v1300
    %v1308 = vmul.f32 %v1288, %v1307
    %1309 = vrot.lane.b32.xlu0 %v603, 64
    %v1310 = vpop.permute.xlu0 %1309
    %1311 = vrot.lane.b32.xlu0 %v609, 64
    %v1312 = vpop.permute.xlu0 %1311
    %1313 = vrot.lane.b32.xlu0 %v615, 64
    %v1314 = vpop.permute.xlu0 %1313
    %1315 = vrot.lane.b32.xlu0 %v617, 64
    %v1316 = vpop.permute.xlu0 %1315
    %v1322 = vsel %vm77, %v1302, 0
    %v1325 = vsel %vm77, %v1304, 0
    %v1328 = vsel %vm77, %v1306, 0
    %v1331 = vsel %vm77, %v1308, 0
    %1333 = vmatprep.subr.mxu0 0.0
    %v1334 = vand.u32 %v1310, 4294901760
    %1335 = vmatpush1.msra.mxu0 %v1334
    %1336 = vmatprep.subr.mxu0 0.0
    %v1337 = vand.u32 %v1312, 4294901760
    %1338 = vmatpush1.msra.mxu0 %v1337
    %1339 = vmatprep.subr.mxu0 0.0
    %v1340 = vand.u32 %v1314, 4294901760
    %1341 = vmatpush1.msra.mxu0 %v1340
    %1342 = vmatprep.subr.mxu0 0.0
    %v1343 = vand.u32 %v1316, 4294901760
    %1344 = vmatpush1.msra.mxu0 %v1343
    %1345 = vmatprep.subr.mxu0 0.0
    %1346 = vmatpush1.msra.mxu0 0.0
    %1347 = vmatprep.subr.mxu0 0.0
    %1348 = vmatpush1.msra.mxu0 0.0
    %1349 = vmatprep.subr.mxu0 0.0
    %1350 = vmatpush1.msra.mxu0 0.0
    %1351 = vmatprep.subr.mxu0 0.0
    %1352 = vmatpush1.msra.mxu0 0.0
    %1353 = vmatprep.subr.mxu0 0.0
    %1354 = vmatpush1.msra.mxu0 0.0
    %1355 = vmatprep.subr.mxu0 0.0
    %1356 = vmatpush1.msra.mxu0 0.0
    %1357 = vmatprep.subr.mxu0 0.0
    %1358 = vmatpush1.msra.mxu0 0.0
    %1359 = vmatprep.subr.mxu0 0.0
    %1360 = vmatpush1.msra.mxu0 0.0
    %1361 = vmatprep.subr.mxu0 0.0
    %1362 = vmatpush1.msra.mxu0 0.0
    %1363 = vmatprep.subr.mxu0 0.0
    %1364 = vmatpush1.msra.mxu0 0.0
    %1365 = vmatprep.subr.mxu0 0.0
    %1366 = vmatpush1.msra.mxu0 0.0
    %1367 = vmatprep.subr.mxu0 0.0
    %1368 = vmatpush1.msra.mxu0 0.0
    %1369 = vmatprep.subr.mxu0 0.0
    %1370 = vmatpush1.msra.mxu0 0.0
    %1371 = vmatprep.subr.mxu0 0.0
    %1372 = vmatpush1.msra.mxu0 0.0
    %1373 = vmatprep.subr.mxu0 0.0
    %1374 = vmatpush1.msra.mxu0 0.0
    %1375 = vmatprep.subr.mxu0 0.0
    %1376 = vmatpush1.msra.mxu0 0.0
    %1377 = vmatprep.subr.mxu0 0.0
    %1378 = vmatpush1.msra.mxu0 0.0
    %1379 = vmatprep.subr.mxu0 0.0
    %1380 = vmatpush1.msra.mxu0 0.0
    %1381 = vmatprep.subr.mxu0 0.0
    %1382 = vmatpush1.msra.mxu0 0.0
    %1383 = vmatprep.subr.mxu0 0.0
    %1384 = vmatpush1.msra.mxu0 0.0
    %1385 = vmatprep.subr.mxu0 0.0
    %1386 = vmatpush1.msra.mxu0 0.0
    %1387 = vmatprep.subr.mxu0 0.0
    %1388 = vmatpush1.msra.mxu0 0.0
    %1389 = vmatprep.subr.mxu0 0.0
    %1390 = vmatpush1.msra.mxu0 0.0
    %1391 = vmatprep.subr.mxu0 0.0
    %1392 = vmatpush1.msra.mxu0 0.0
    %1393 = vmatprep.subr.mxu0 0.0
    %1394 = vmatpush1.msra.mxu0 0.0
    %1395 = vmatprep.subr.mxu0 0.0
    %1396 = vmatpush1.msra.mxu0 0.0
    %1397 = vmatprep.subr.mxu0 0.0
    %1398 = vmatpush1.msra.mxu0 0.0
    %1399 = vmatprep.subr.mxu0 0.0
    %1400 = vmatpush1.msra.mxu0 0.0
    %1401 = vmatprep.mubr.f32.mxu0 0.0
    %v1402 = vand.u32 %v1322, 4294901760
    %v1403 = vsub.f32 %v1322, %v1402
    %v1404 = vand.u32 %v1403, 4294901760
    %v1405 = vsub.f32 %v1403, %v1404
    %v1406 = vand.u32 %v1405, 4294901760
    %1407 = vmatmul.mubr.f32.gmra.mrb[0].mxu0 %v1406
    %v1408 = vpop.f32.mrb[0].mxu0
    %v1409 = vadd.f32 0.0, %v1408
    %v1410 = vpop.f32.mrb[0].mxu0
    %1411 = vmatprep.mubr.f32.mxu0 0.0
    %v1412 = vand.u32 %v1325, 4294901760
    %v1413 = vsub.f32 %v1325, %v1412
    %v1414 = vand.u32 %v1413, 4294901760
    %v1415 = vsub.f32 %v1413, %v1414
    %v1416 = vand.u32 %v1415, 4294901760
    %1417 = vmatmul.mubr.f32.gmra.mrb[0].mxu0 %v1416
    %v1418 = vpop.f32.mrb[0].mxu0
    %v1419 = vadd.f32 0.0, %v1418
    %v1420 = vpop.f32.mrb[0].mxu0
    %1421 = vmatprep.mubr.f32.mxu0 0.0
    %v1422 = vand.u32 %v1328, 4294901760
    %v1423 = vsub.f32 %v1328, %v1422
    %v1424 = vand.u32 %v1423, 4294901760
    %v1425 = vsub.f32 %v1423, %v1424
    %v1426 = vand.u32 %v1425, 4294901760
    %1427 = vmatmul.mubr.f32.gmra.mrb[0].mxu0 %v1426
    %v1428 = vpop.f32.mrb[0].mxu0
    %v1429 = vadd.f32 0.0, %v1428
    %v1430 = vpop.f32.mrb[0].mxu0
    %1431 = vmatprep.mubr.f32.mxu0 0.0
    %v1432 = vand.u32 %v1331, 4294901760
    %v1433 = vsub.f32 %v1331, %v1432
    %v1434 = vand.u32 %v1433, 4294901760
    %v1435 = vsub.f32 %v1433, %v1434
    %v1436 = vand.u32 %v1435, 4294901760
    %1437 = vmatmul.mubr.f32.gmra.mrb[0].mxu0 %v1436
    %v1438 = vpop.f32.mrb[0].mxu0
    %v1439 = vadd.f32 0.0, %v1438
    %v1440 = vpop.f32.mrb[0].mxu0
    %1441 = vdwg.mxu0
    %1442 = vmatprep.subr.mxu0 0.0
    %v1443 = vand.u32 %v1310, 4294901760
    %v1444 = vsub.f32 %v1310, %v1443
    %v1445 = vand.u32 %v1444, 4294901760
    %v1446 = vsub.f32 %v1444, %v1445
    %v1447 = vand.u32 %v1446, 4294901760
    %1448 = vmatpush1.msra.mxu0 %v1447
    %1449 = vmatprep.subr.mxu0 0.0
    %v1450 = vand.u32 %v1312, 4294901760
    %v1451 = vsub.f32 %v1312, %v1450
    %v1452 = vand.u32 %v1451, 4294901760
    %v1453 = vsub.f32 %v1451, %v1452
    %v1454 = vand.u32 %v1453, 4294901760
    %1455 = vmatpush1.msra.mxu0 %v1454
    %1456 = vmatprep.subr.mxu0 0.0
    %v1457 = vand.u32 %v1314, 4294901760
    %v1458 = vsub.f32 %v1314, %v1457
    %v1459 = vand.u32 %v1458, 4294901760
    %v1460 = vsub.f32 %v1458, %v1459
    %v1461 = vand.u32 %v1460, 4294901760
    %1462 = vmatpush1.msra.mxu0 %v1461
    %1463 = vmatprep.subr.mxu0 0.0
    %v1464 = vand.u32 %v1316, 4294901760
    %v1465 = vsub.f32 %v1316, %v1464
    %v1466 = vand.u32 %v1465, 4294901760
    %v1467 = vsub.f32 %v1465, %v1466
    %v1468 = vand.u32 %v1467, 4294901760
    %1469 = vmatpush1.msra.mxu0 %v1468
    %1470 = vmatprep.subr.mxu0 0.0
    %1471 = vmatpush1.msra.mxu0 0.0
    %1472 = vmatprep.subr.mxu0 0.0
    %1473 = vmatpush1.msra.mxu0 0.0
    %1474 = vmatprep.subr.mxu0 0.0
    %1475 = vmatpush1.msra.mxu0 0.0
    %1476 = vmatprep.subr.mxu0 0.0
    %1477 = vmatpush1.msra.mxu0 0.0
    %1478 = vmatprep.subr.mxu0 0.0
    %1479 = vmatpush1.msra.mxu0 0.0
    %1480 = vmatprep.subr.mxu0 0.0
    %1481 = vmatpush1.msra.mxu0 0.0
    %1482 = vmatprep.subr.mxu0 0.0
    %1483 = vmatpush1.msra.mxu0 0.0
    %1484 = vmatprep.subr.mxu0 0.0
    %1485 = vmatpush1.msra.mxu0 0.0
    %1486 = vmatprep.subr.mxu0 0.0
    %1487 = vmatpush1.msra.mxu0 0.0
    %1488 = vmatprep.subr.mxu0 0.0
    %1489 = vmatpush1.msra.mxu0 0.0
    %1490 = vmatprep.subr.mxu0 0.0
    %1491 = vmatpush1.msra.mxu0 0.0
    %1492 = vmatprep.subr.mxu0 0.0
    %1493 = vmatpush1.msra.mxu0 0.0
    %1494 = vmatprep.subr.mxu0 0.0
    %1495 = vmatpush1.msra.mxu0 0.0
    %1496 = vmatprep.subr.mxu0 0.0
    %1497 = vmatpush1.msra.mxu0 0.0
    %1498 = vmatprep.subr.mxu0 0.0
    %1499 = vmatpush1.msra.mxu0 0.0
    %1500 = vmatprep.subr.mxu0 0.0
    %1501 = vmatpush1.msra.mxu0 0.0
    %1502 = vmatprep.subr.mxu0 0.0
    %1503 = vmatpush1.msra.mxu0 0.0
    %1504 = vmatprep.subr.mxu0 0.0
    %1505 = vmatpush1.msra.mxu0 0.0
    %1506 = vmatprep.subr.mxu0 0.0
    %1507 = vmatpush1.msra.mxu0 0.0
    %1508 = vmatprep.subr.mxu0 0.0
    %1509 = vmatpush1.msra.mxu0 0.0
    %1510 = vmatprep.subr.mxu0 0.0
    %1511 = vmatpush1.msra.mxu0 0.0
    %1512 = vmatprep.subr.mxu0 0.0
    %1513 = vmatpush1.msra.mxu0 0.0
    %1514 = vmatprep.subr.mxu0 0.0
    %1515 = vmatpush1.msra.mxu0 0.0
    %1516 = vmatprep.subr.mxu0 0.0
    %1517 = vmatpush1.msra.mxu0 0.0
    %1518 = vmatprep.subr.mxu0 0.0
    %1519 = vmatpush1.msra.mxu0 0.0
    %1520 = vmatprep.subr.mxu0 0.0
    %1521 = vmatpush1.msra.mxu0 0.0
    %1522 = vmatprep.subr.mxu0 0.0
    %1523 = vmatpush1.msra.mxu0 0.0
    %1524 = vmatprep.subr.mxu0 0.0
    %1525 = vmatpush1.msra.mxu0 0.0
    %1526 = vmatprep.mubr.f32.mxu0 0.0
    %v1527 = vand.u32 %v1322, 4294901760
    %1528 = vmatmul.mubr.f32.gmra.mrb[0].mxu0 %v1527
    %v1529 = vpop.f32.mrb[0].mxu0
    %v1530 = vadd.f32 %v1409, %v1529
    %v1531 = vpop.f32.mrb[0].mxu0
    %1532 = vmatprep.mubr.f32.mxu0 0.0
    %v1533 = vand.u32 %v1325, 4294901760
    %1534 = vmatmul.mubr.f32.gmra.mrb[0].mxu0 %v1533
    %v1535 = vpop.f32.mrb[0].mxu0
    %v1536 = vadd.f32 %v1419, %v1535
    %v1537 = vpop.f32.mrb[0].mxu0
    %1538 = vmatprep.mubr.f32.mxu0 0.0
    %v1539 = vand.u32 %v1328, 4294901760
    %1540 = vmatmul.mubr.f32.gmra.mrb[0].mxu0 %v1539
    %v1541 = vpop.f32.mrb[0].mxu0
    %v1542 = vadd.f32 %v1429, %v1541
    %v1543 = vpop.f32.mrb[0].mxu0
    %1544 = vmatprep.mubr.f32.mxu0 0.0
    %v1545 = vand.u32 %v1331, 4294901760
    %1546 = vmatmul.mubr.f32.gmra.mrb[0].mxu0 %v1545
    %v1547 = vpop.f32.mrb[0].mxu0
    %v1548 = vadd.f32 %v1439, %v1547
    %v1549 = vpop.f32.mrb[0].mxu0
    %1550 = vdwg.mxu0
    %1551 = vmatprep.subr.mxu0 0.0
    %v1552 = vand.u32 %v1310, 4294901760
    %v1553 = vsub.f32 %v1310, %v1552
    %1554 = vmatpush1.msra.mxu0 %v1553
    %1555 = vmatprep.subr.mxu0 0.0
    %v1556 = vand.u32 %v1312, 4294901760
    %v1557 = vsub.f32 %v1312, %v1556
    %1558 = vmatpush1.msra.mxu0 %v1557
    %1559 = vmatprep.subr.mxu0 0.0
    %v1560 = vand.u32 %v1314, 4294901760
    %v1561 = vsub.f32 %v1314, %v1560
    %1562 = vmatpush1.msra.mxu0 %v1561
    %1563 = vmatprep.subr.mxu0 0.0
    %v1564 = vand.u32 %v1316, 4294901760
    %v1565 = vsub.f32 %v1316, %v1564
    %1566 = vmatpush1.msra.mxu0 %v1565
    %1567 = vmatprep.subr.mxu0 0.0
    %1568 = vmatpush1.msra.mxu0 0.0
    %1569 = vmatprep.subr.mxu0 0.0
    %1570 = vmatpush1.msra.mxu0 0.0
    %1571 = vmatprep.subr.mxu0 0.0
    %1572 = vmatpush1.msra.mxu0 0.0
    %1573 = vmatprep.subr.mxu0 0.0
    %1574 = vmatpush1.msra.mxu0 0.0
    %1575 = vmatprep.subr.mxu0 0.0
    %1576 = vmatpush1.msra.mxu0 0.0
    %1577 = vmatprep.subr.mxu0 0.0
    %1578 = vmatpush1.msra.mxu0 0.0
    %1579 = vmatprep.subr.mxu0 0.0
    %1580 = vmatpush1.msra.mxu0 0.0
    %1581 = vmatprep.subr.mxu0 0.0
    %1582 = vmatpush1.msra.mxu0 0.0
    %1583 = vmatprep.subr.mxu0 0.0
    %1584 = vmatpush1.msra.mxu0 0.0
    %1585 = vmatprep.subr.mxu0 0.0
    %1586 = vmatpush1.msra.mxu0 0.0
    %1587 = vmatprep.subr.mxu0 0.0
    %1588 = vmatpush1.msra.mxu0 0.0
    %1589 = vmatprep.subr.mxu0 0.0
    %1590 = vmatpush1.msra.mxu0 0.0
    %1591 = vmatprep.subr.mxu0 0.0
    %1592 = vmatpush1.msra.mxu0 0.0
    %1593 = vmatprep.subr.mxu0 0.0
    %1594 = vmatpush1.msra.mxu0 0.0
    %1595 = vmatprep.subr.mxu0 0.0
    %1596 = vmatpush1.msra.mxu0 0.0
    %1597 = vmatprep.subr.mxu0 0.0
    %1598 = vmatpush1.msra.mxu0 0.0
    %1599 = vmatprep.subr.mxu0 0.0
    %1600 = vmatpush1.msra.mxu0 0.0
    %1601 = vmatprep.subr.mxu0 0.0
    %1602 = vmatpush1.msra.mxu0 0.0
    %1603 = vmatprep.subr.mxu0 0.0
    %1604 = vmatpush1.msra.mxu0 0.0
    %1605 = vmatprep.subr.mxu0 0.0
    %1606 = vmatpush1.msra.mxu0 0.0
    %1607 = vmatprep.subr.mxu0 0.0
    %1608 = vmatpush1.msra.mxu0 0.0
    %1609 = vmatprep.subr.mxu0 0.0
    %1610 = vmatpush1.msra.mxu0 0.0
    %1611 = vmatprep.subr.mxu0 0.0
    %1612 = vmatpush1.msra.mxu0 0.0
    %1613 = vmatprep.subr.mxu0 0.0
    %1614 = vmatpush1.msra.mxu0 0.0
    %1615 = vmatprep.subr.mxu0 0.0
    %1616 = vmatpush1.msra.mxu0 0.0
    %1617 = vmatprep.subr.mxu0 0.0
    %1618 = vmatpush1.msra.mxu0 0.0
    %1619 = vmatprep.subr.mxu0 0.0
    %1620 = vmatpush1.msra.mxu0 0.0
    %1621 = vmatprep.subr.mxu0 0.0
    %1622 = vmatpush1.msra.mxu0 0.0
    %1623 = vmatprep.mubr.f32.mxu0 0.0
    %v1624 = vand.u32 %v1322, 4294901760
    %v1625 = vsub.f32 %v1322, %v1624
    %1626 = vmatmul.mubr.f32.gmra.mrb[0].mxu0 %v1625
    %v1627 = vpop.f32.mrb[0].mxu0
    %v1628 = vadd.f32 %v1530, %v1627
    %v1629 = vpop.f32.mrb[0].mxu0
    %1630 = vmatprep.mubr.f32.mxu0 0.0
    %v1631 = vand.u32 %v1325, 4294901760
    %v1632 = vsub.f32 %v1325, %v1631
    %1633 = vmatmul.mubr.f32.gmra.mrb[0].mxu0 %v1632
    %v1634 = vpop.f32.mrb[0].mxu0
    %v1635 = vadd.f32 %v1536, %v1634
    %v1636 = vpop.f32.mrb[0].mxu0
    %1637 = vmatprep.mubr.f32.mxu0 0.0
    %v1638 = vand.u32 %v1328, 4294901760
    %v1639 = vsub.f32 %v1328, %v1638
    %1640 = vmatmul.mubr.f32.gmra.mrb[0].mxu0 %v1639
    %v1641 = vpop.f32.mrb[0].mxu0
    %v1642 = vadd.f32 %v1542, %v1641
    %v1643 = vpop.f32.mrb[0].mxu0
    %1644 = vmatprep.mubr.f32.mxu0 0.0
    %v1645 = vand.u32 %v1331, 4294901760
    %v1646 = vsub.f32 %v1331, %v1645
    %1647 = vmatmul.mubr.f32.gmra.mrb[0].mxu0 %v1646
    %v1648 = vpop.f32.mrb[0].mxu0
    %v1649 = vadd.f32 %v1548, %v1648
    %v1650 = vpop.f32.mrb[0].mxu0
    %1651 = vdwg.mxu0
    %1652 = vmatprep.subr.mxu0 0.0
    %v1653 = vand.u32 %v1310, 4294901760
    %1654 = vmatpush1.msra.mxu0 %v1653
    %1655 = vmatprep.subr.mxu0 0.0
    %v1656 = vand.u32 %v1312, 4294901760
    %1657 = vmatpush1.msra.mxu0 %v1656
    %1658 = vmatprep.subr.mxu0 0.0
    %v1659 = vand.u32 %v1314, 4294901760
    %1660 = vmatpush1.msra.mxu0 %v1659
    %1661 = vmatprep.subr.mxu0 0.0
    %v1662 = vand.u32 %v1316, 4294901760
    %1663 = vmatpush1.msra.mxu0 %v1662
    %1664 = vmatprep.subr.mxu0 0.0
    %1665 = vmatpush1.msra.mxu0 0.0
    %1666 = vmatprep.subr.mxu0 0.0
    %1667 = vmatpush1.msra.mxu0 0.0
    %1668 = vmatprep.subr.mxu0 0.0
    %1669 = vmatpush1.msra.mxu0 0.0
    %1670 = vmatprep.subr.mxu0 0.0
    %1671 = vmatpush1.msra.mxu0 0.0
    %1672 = vmatprep.subr.mxu0 0.0
    %1673 = vmatpush1.msra.mxu0 0.0
    %1674 = vmatprep.subr.mxu0 0.0
    %1675 = vmatpush1.msra.mxu0 0.0
    %1676 = vmatprep.subr.mxu0 0.0
    %1677 = vmatpush1.msra.mxu0 0.0
    %1678 = vmatprep.subr.mxu0 0.0
    %1679 = vmatpush1.msra.mxu0 0.0
    %1680 = vmatprep.subr.mxu0 0.0
    %1681 = vmatpush1.msra.mxu0 0.0
    %1682 = vmatprep.subr.mxu0 0.0
    %1683 = vmatpush1.msra.mxu0 0.0
    %1684 = vmatprep.subr.mxu0 0.0
    %1685 = vmatpush1.msra.mxu0 0.0
    %1686 = vmatprep.subr.mxu0 0.0
    %1687 = vmatpush1.msra.mxu0 0.0
    %1688 = vmatprep.subr.mxu0 0.0
    %1689 = vmatpush1.msra.mxu0 0.0
    %1690 = vmatprep.subr.mxu0 0.0
    %1691 = vmatpush1.msra.mxu0 0.0
    %1692 = vmatprep.subr.mxu0 0.0
    %1693 = vmatpush1.msra.mxu0 0.0
    %1694 = vmatprep.subr.mxu0 0.0
    %1695 = vmatpush1.msra.mxu0 0.0
    %1696 = vmatprep.subr.mxu0 0.0
    %1697 = vmatpush1.msra.mxu0 0.0
    %1698 = vmatprep.subr.mxu0 0.0
    %1699 = vmatpush1.msra.mxu0 0.0
    %1700 = vmatprep.subr.mxu0 0.0
    %1701 = vmatpush1.msra.mxu0 0.0
    %1702 = vmatprep.subr.mxu0 0.0
    %1703 = vmatpush1.msra.mxu0 0.0
    %1704 = vmatprep.subr.mxu0 0.0
    %1705 = vmatpush1.msra.mxu0 0.0
    %1706 = vmatprep.subr.mxu0 0.0
    %1707 = vmatpush1.msra.mxu0 0.0
    %1708 = vmatprep.subr.mxu0 0.0
    %1709 = vmatpush1.msra.mxu0 0.0
    %1710 = vmatprep.subr.mxu0 0.0
    %1711 = vmatpush1.msra.mxu0 0.0
    %1712 = vmatprep.subr.mxu0 0.0
    %1713 = vmatpush1.msra.mxu0 0.0
    %1714 = vmatprep.subr.mxu0 0.0
    %1715 = vmatpush1.msra.mxu0 0.0
    %1716 = vmatprep.subr.mxu0 0.0
    %1717 = vmatpush1.msra.mxu0 0.0
    %1718 = vmatprep.subr.mxu0 0.0
    %1719 = vmatpush1.msra.mxu0 0.0
    %1720 = vmatprep.mubr.f32.mxu0 0.0
    %v1721 = vand.u32 %v1322, 4294901760
    %v1722 = vsub.f32 %v1322, %v1721
    %v1723 = vand.u32 %v1722, 4294901760
    %1724 = vmatmul.mubr.f32.gmra.mrb[0].mxu0 %v1723
    %v1725 = vpop.f32.mrb[0].mxu0
    %v1726 = vadd.f32 %v1628, %v1725
    %v1727 = vpop.f32.mrb[0].mxu0
    %1728 = vmatprep.mubr.f32.mxu0 0.0
    %v1729 = vand.u32 %v1325, 4294901760
    %v1730 = vsub.f32 %v1325, %v1729
    %v1731 = vand.u32 %v1730, 4294901760
    %1732 = vmatmul.mubr.f32.gmra.mrb[0].mxu0 %v1731
    %v1733 = vpop.f32.mrb[0].mxu0
    %v1734 = vadd.f32 %v1635, %v1733
    %v1735 = vpop.f32.mrb[0].mxu0
    %1736 = vmatprep.mubr.f32.mxu0 0.0
    %v1737 = vand.u32 %v1328, 4294901760
    %v1738 = vsub.f32 %v1328, %v1737
    %v1739 = vand.u32 %v1738, 4294901760
    %1740 = vmatmul.mubr.f32.gmra.mrb[0].mxu0 %v1739
    %v1741 = vpop.f32.mrb[0].mxu0
    %v1742 = vadd.f32 %v1642, %v1741
    %v1743 = vpop.f32.mrb[0].mxu0
    %1744 = vmatprep.mubr.f32.mxu0 0.0
    %v1745 = vand.u32 %v1331, 4294901760
    %v1746 = vsub.f32 %v1331, %v1745
    %v1747 = vand.u32 %v1746, 4294901760
    %1748 = vmatmul.mubr.f32.gmra.mrb[0].mxu0 %v1747
    %v1749 = vpop.f32.mrb[0].mxu0
    %v1750 = vadd.f32 %v1649, %v1749
    %v1751 = vpop.f32.mrb[0].mxu0
    %1752 = vdwg.mxu0
    %1753 = vmatprep.subr.mxu0 0.0
    %v1754 = vand.u32 %v1310, 4294901760
    %v1755 = vsub.f32 %v1310, %v1754
    %v1756 = vand.u32 %v1755, 4294901760
    %1757 = vmatpush1.msra.mxu0 %v1756
    %1758 = vmatprep.subr.mxu0 0.0
    %v1759 = vand.u32 %v1312, 4294901760
    %v1760 = vsub.f32 %v1312, %v1759
    %v1761 = vand.u32 %v1760, 4294901760
    %1762 = vmatpush1.msra.mxu0 %v1761
    %1763 = vmatprep.subr.mxu0 0.0
    %v1764 = vand.u32 %v1314, 4294901760
    %v1765 = vsub.f32 %v1314, %v1764
    %v1766 = vand.u32 %v1765, 4294901760
    %1767 = vmatpush1.msra.mxu0 %v1766
    %1768 = vmatprep.subr.mxu0 0.0
    %v1769 = vand.u32 %v1316, 4294901760
    %v1770 = vsub.f32 %v1316, %v1769
    %v1771 = vand.u32 %v1770, 4294901760
    %1772 = vmatpush1.msra.mxu0 %v1771
    %1773 = vmatprep.subr.mxu0 0.0
    %1774 = vmatpush1.msra.mxu0 0.0
    %1775 = vmatprep.subr.mxu0 0.0
    %1776 = vmatpush1.msra.mxu0 0.0
    %1777 = vmatprep.subr.mxu0 0.0
    %1778 = vmatpush1.msra.mxu0 0.0
    %1779 = vmatprep.subr.mxu0 0.0
    %1780 = vmatpush1.msra.mxu0 0.0
    %1781 = vmatprep.subr.mxu0 0.0
    %1782 = vmatpush1.msra.mxu0 0.0
    %1783 = vmatprep.subr.mxu0 0.0
    %1784 = vmatpush1.msra.mxu0 0.0
    %1785 = vmatprep.subr.mxu0 0.0
    %1786 = vmatpush1.msra.mxu0 0.0
    %1787 = vmatprep.subr.mxu0 0.0
    %1788 = vmatpush1.msra.mxu0 0.0
    %1789 = vmatprep.subr.mxu0 0.0
    %1790 = vmatpush1.msra.mxu0 0.0
    %1791 = vmatprep.subr.mxu0 0.0
    %1792 = vmatpush1.msra.mxu0 0.0
    %1793 = vmatprep.subr.mxu0 0.0
    %1794 = vmatpush1.msra.mxu0 0.0
    %1795 = vmatprep.subr.mxu0 0.0
    %1796 = vmatpush1.msra.mxu0 0.0
    %1797 = vmatprep.subr.mxu0 0.0
    %1798 = vmatpush1.msra.mxu0 0.0
    %1799 = vmatprep.subr.mxu0 0.0
    %1800 = vmatpush1.msra.mxu0 0.0
    %1801 = vmatprep.subr.mxu0 0.0
    %1802 = vmatpush1.msra.mxu0 0.0
    %1803 = vmatprep.subr.mxu0 0.0
    %1804 = vmatpush1.msra.mxu0 0.0
    %1805 = vmatprep.subr.mxu0 0.0
    %1806 = vmatpush1.msra.mxu0 0.0
    %1807 = vmatprep.subr.mxu0 0.0
    %1808 = vmatpush1.msra.mxu0 0.0
    %1809 = vmatprep.subr.mxu0 0.0
    %1810 = vmatpush1.msra.mxu0 0.0
    %1811 = vmatprep.subr.mxu0 0.0
    %1812 = vmatpush1.msra.mxu0 0.0
    %1813 = vmatprep.subr.mxu0 0.0
    %1814 = vmatpush1.msra.mxu0 0.0
    %1815 = vmatprep.subr.mxu0 0.0
    %1816 = vmatpush1.msra.mxu0 0.0
    %1817 = vmatprep.subr.mxu0 0.0
    %1818 = vmatpush1.msra.mxu0 0.0
    %1819 = vmatprep.subr.mxu0 0.0
    %1820 = vmatpush1.msra.mxu0 0.0
    %1821 = vmatprep.subr.mxu0 0.0
    %1822 = vmatpush1.msra.mxu0 0.0
    %1823 = vmatprep.subr.mxu0 0.0
    %1824 = vmatpush1.msra.mxu0 0.0
    %1825 = vmatprep.subr.mxu0 0.0
    %1826 = vmatpush1.msra.mxu0 0.0
    %1827 = vmatprep.subr.mxu0 0.0
    %1828 = vmatpush1.msra.mxu0 0.0
    %1829 = vmatprep.mubr.f32.mxu0 0.0
    %v1830 = vand.u32 %v1322, 4294901760
    %1831 = vmatmul.mubr.f32.gmra.mrb[0].mxu0 %v1830
    %v1832 = vpop.f32.mrb[0].mxu0
    %v1833 = vadd.f32 %v1726, %v1832
    %v1834 = vpop.f32.mrb[0].mxu0
    %1835 = vmatprep.mubr.f32.mxu0 0.0
    %v1836 = vand.u32 %v1325, 4294901760
    %1837 = vmatmul.mubr.f32.gmra.mrb[0].mxu0 %v1836
    %v1838 = vpop.f32.mrb[0].mxu0
    %v1839 = vadd.f32 %v1734, %v1838
    %v1840 = vpop.f32.mrb[0].mxu0
    %1841 = vmatprep.mubr.f32.mxu0 0.0
    %v1842 = vand.u32 %v1328, 4294901760
    %1843 = vmatmul.mubr.f32.gmra.mrb[0].mxu0 %v1842
    %v1844 = vpop.f32.mrb[0].mxu0
    %v1845 = vadd.f32 %v1742, %v1844
    %v1846 = vpop.f32.mrb[0].mxu0
    %1847 = vmatprep.mubr.f32.mxu0 0.0
    %v1848 = vand.u32 %v1331, 4294901760
    %1849 = vmatmul.mubr.f32.gmra.mrb[0].mxu0 %v1848
    %v1850 = vpop.f32.mrb[0].mxu0
    %v1851 = vadd.f32 %v1750, %v1850
    %v1852 = vpop.f32.mrb[0].mxu0
    %1853 = vdwg.mxu0
    %1854 = vmatprep.subr.mxu0 0.0
    %v1855 = vand.u32 %v1310, 4294901760
    %1856 = vmatpush1.msra.mxu0 %v1855
    %1857 = vmatprep.subr.mxu0 0.0
    %v1858 = vand.u32 %v1312, 4294901760
    %1859 = vmatpush1.msra.mxu0 %v1858
    %1860 = vmatprep.subr.mxu0 0.0
    %v1861 = vand.u32 %v1314, 4294901760
    %1862 = vmatpush1.msra.mxu0 %v1861
    %1863 = vmatprep.subr.mxu0 0.0
    %v1864 = vand.u32 %v1316, 4294901760
    %1865 = vmatpush1.msra.mxu0 %v1864
    %1866 = vmatprep.subr.mxu0 0.0
    %1867 = vmatpush1.msra.mxu0 0.0
    %1868 = vmatprep.subr.mxu0 0.0
    %1869 = vmatpush1.msra.mxu0 0.0
    %1870 = vmatprep.subr.mxu0 0.0
    %1871 = vmatpush1.msra.mxu0 0.0
    %1872 = vmatprep.subr.mxu0 0.0
    %1873 = vmatpush1.msra.mxu0 0.0
    %1874 = vmatprep.subr.mxu0 0.0
    %1875 = vmatpush1.msra.mxu0 0.0
    %1876 = vmatprep.subr.mxu0 0.0
    %1877 = vmatpush1.msra.mxu0 0.0
    %1878 = vmatprep.subr.mxu0 0.0
    %1879 = vmatpush1.msra.mxu0 0.0
    %1880 = vmatprep.subr.mxu0 0.0
    %1881 = vmatpush1.msra.mxu0 0.0
    %1882 = vmatprep.subr.mxu0 0.0
    %1883 = vmatpush1.msra.mxu0 0.0
    %1884 = vmatprep.subr.mxu0 0.0
    %1885 = vmatpush1.msra.mxu0 0.0
    %1886 = vmatprep.subr.mxu0 0.0
    %1887 = vmatpush1.msra.mxu0 0.0
    %1888 = vmatprep.subr.mxu0 0.0
    %1889 = vmatpush1.msra.mxu0 0.0
    %1890 = vmatprep.subr.mxu0 0.0
    %1891 = vmatpush1.msra.mxu0 0.0
    %1892 = vmatprep.subr.mxu0 0.0
    %1893 = vmatpush1.msra.mxu0 0.0
    %1894 = vmatprep.subr.mxu0 0.0
    %1895 = vmatpush1.msra.mxu0 0.0
    %1896 = vmatprep.subr.mxu0 0.0
    %1897 = vmatpush1.msra.mxu0 0.0
    %1898 = vmatprep.subr.mxu0 0.0
    %1899 = vmatpush1.msra.mxu0 0.0
    %1900 = vmatprep.subr.mxu0 0.0
    %1901 = vmatpush1.msra.mxu0 0.0
    %1902 = vmatprep.subr.mxu0 0.0
    %1903 = vmatpush1.msra.mxu0 0.0
    %1904 = vmatprep.subr.mxu0 0.0
    %1905 = vmatpush1.msra.mxu0 0.0
    %1906 = vmatprep.subr.mxu0 0.0
    %1907 = vmatpush1.msra.mxu0 0.0
    %1908 = vmatprep.subr.mxu0 0.0
    %1909 = vmatpush1.msra.mxu0 0.0
    %1910 = vmatprep.subr.mxu0 0.0
    %1911 = vmatpush1.msra.mxu0 0.0
    %1912 = vmatprep.subr.mxu0 0.0
    %1913 = vmatpush1.msra.mxu0 0.0
    %1914 = vmatprep.subr.mxu0 0.0
    %1915 = vmatpush1.msra.mxu0 0.0
    %1916 = vmatprep.subr.mxu0 0.0
    %1917 = vmatpush1.msra.mxu0 0.0
    %1918 = vmatprep.subr.mxu0 0.0
    %1919 = vmatpush1.msra.mxu0 0.0
    %1920 = vmatprep.subr.mxu0 0.0
    %1921 = vmatpush1.msra.mxu0 0.0
    %1922 = vmatprep.mubr.f32.mxu0 0.0
    %v1923 = vand.u32 %v1322, 4294901760
    %1924 = vmatmul.mubr.f32.gmra.mrb[0].mxu0 %v1923
    %v1925 = vpop.f32.mrb[0].mxu0
    %v1926 = vadd.f32 %v1833, %v1925
    %v1927 = vpop.f32.mrb[0].mxu0
    %1928 = vmatprep.mubr.f32.mxu0 0.0
    %v1929 = vand.u32 %v1325, 4294901760
    %1930 = vmatmul.mubr.f32.gmra.mrb[0].mxu0 %v1929
    %v1931 = vpop.f32.mrb[0].mxu0
    %v1932 = vadd.f32 %v1839, %v1931
    %v1933 = vpop.f32.mrb[0].mxu0
    %1934 = vmatprep.mubr.f32.mxu0 0.0
    %v1935 = vand.u32 %v1328, 4294901760
    %1936 = vmatmul.mubr.f32.gmra.mrb[0].mxu0 %v1935
    %v1937 = vpop.f32.mrb[0].mxu0
    %v1938 = vadd.f32 %v1845, %v1937
    %v1939 = vpop.f32.mrb[0].mxu0
    %1940 = vmatprep.mubr.f32.mxu0 0.0
    %v1941 = vand.u32 %v1331, 4294901760
    %1942 = vmatmul.mubr.f32.gmra.mrb[0].mxu0 %v1941
    %v1943 = vpop.f32.mrb[0].mxu0
    %v1944 = vadd.f32 %v1851, %v1943
    %v1945 = vpop.f32.mrb[0].mxu0
    %1946 = vdwg.mxu0
    %v1947 = vld [vmem:[#allocation7 + $0x20] sm:$0xff]
    %v1948 = vld [vmem:[#allocation7 + $0x28] sm:$0xff]
    %v1949 = vld [vmem:[#allocation7 + $0x30] sm:$0xff]
    %v1950 = vld [vmem:[#allocation7 + $0x38] sm:$0xff]
    %v1952 = vsel %vm626, %v1938, 0
    %v1955 = vsel %vm626, %v1944, 0
    %1957 = vmatprep.subr.mxu0 0.0
    %v1958 = vand.u32 %v1949, 4294901760
    %1959 = vmatpush1.msra.mxu0 %v1958
    %1960 = vmatprep.subr.mxu0 0.0
    %v1961 = vand.u32 %v1950, 4294901760
    %1962 = vmatpush1.msra.mxu0 %v1961
    %1963 = vmatprep.subr.mxu0 0.0
    %1964 = vmatpush1.msra.mxu0 0.0
    %1965 = vmatprep.subr.mxu0 0.0
    %1966 = vmatpush1.msra.mxu0 0.0
    %1967 = vmatprep.subr.mxu0 0.0
    %1968 = vmatpush1.msra.mxu0 0.0
    %1969 = vmatprep.subr.mxu0 0.0
    %1970 = vmatpush1.msra.mxu0 0.0
    %1971 = vmatprep.subr.mxu0 0.0
    %1972 = vmatpush1.msra.mxu0 0.0
    %1973 = vmatprep.subr.mxu0 0.0
    %1974 = vmatpush1.msra.mxu0 0.0
    %1975 = vmatprep.subr.mxu0 0.0
    %1976 = vmatpush1.msra.mxu0 0.0
    %1977 = vmatprep.subr.mxu0 0.0
    %1978 = vmatpush1.msra.mxu0 0.0
    %1979 = vmatprep.subr.mxu0 0.0
    %1980 = vmatpush1.msra.mxu0 0.0
    %1981 = vmatprep.subr.mxu0 0.0
    %1982 = vmatpush1.msra.mxu0 0.0
    %1983 = vmatprep.subr.mxu0 0.0
    %1984 = vmatpush1.msra.mxu0 0.0
    %1985 = vmatprep.subr.mxu0 0.0
    %1986 = vmatpush1.msra.mxu0 0.0
    %1987 = vmatprep.subr.mxu0 0.0
    %1988 = vmatpush1.msra.mxu0 0.0
    %1989 = vmatprep.subr.mxu0 0.0
    %1990 = vmatpush1.msra.mxu0 0.0
    %1991 = vmatprep.subr.mxu0 0.0
    %1992 = vmatpush1.msra.mxu0 0.0
    %1993 = vmatprep.subr.mxu0 0.0
    %1994 = vmatpush1.msra.mxu0 0.0
    %1995 = vmatprep.subr.mxu0 0.0
    %1996 = vmatpush1.msra.mxu0 0.0
    %1997 = vmatprep.subr.mxu0 0.0
    %1998 = vmatpush1.msra.mxu0 0.0
    %1999 = vmatprep.subr.mxu0 0.0
    %2000 = vmatpush1.msra.mxu0 0.0
    %2001 = vmatprep.subr.mxu0 0.0
    %2002 = vmatpush1.msra.mxu0 0.0
    %2003 = vmatprep.subr.mxu0 0.0
    %2004 = vmatpush1.msra.mxu0 0.0
    %2005 = vmatprep.subr.mxu0 0.0
    %2006 = vmatpush1.msra.mxu0 0.0
    %2007 = vmatprep.subr.mxu0 0.0
    %2008 = vmatpush1.msra.mxu0 0.0
    %2009 = vmatprep.subr.mxu0 0.0
    %2010 = vmatpush1.msra.mxu0 0.0
    %2011 = vmatprep.subr.mxu0 0.0
    %2012 = vmatpush1.msra.mxu0 0.0
    %2013 = vmatprep.subr.mxu0 0.0
    %2014 = vmatpush1.msra.mxu0 0.0
    %2015 = vmatprep.subr.mxu0 0.0
    %2016 = vmatpush1.msra.mxu0 0.0
    %2017 = vmatprep.subr.mxu0 0.0
    %2018 = vmatpush1.msra.mxu0 0.0
    %2019 = vmatprep.subr.mxu0 0.0
    %2020 = vmatpush1.msra.mxu0 0.0
    %2021 = vmatprep.subr.mxu0 0.0
    %2022 = vmatpush1.msra.mxu0 0.0
    %2023 = vmatprep.mubr.f32.mxu0 0.0
    %v2024 = vand.u32 %v1952, 4294901760
    %v2025 = vsub.f32 %v1952, %v2024
    %v2026 = vand.u32 %v2025, 4294901760
    %v2027 = vsub.f32 %v2025, %v2026
    %v2028 = vand.u32 %v2027, 4294901760
    %2029 = vmatmul.mubr.f32.gmra.mrb[0].mxu0 %v2028
    %v2030 = vpop.f32.mrb[0].mxu0
    %v2031 = vadd.f32 0.0, %v2030
    %v2032 = vpop.f32.mrb[0].mxu0
    %2033 = vmatprep.mubr.f32.mxu0 0.0
    %v2034 = vand.u32 %v1955, 4294901760
    %v2035 = vsub.f32 %v1955, %v2034
    %v2036 = vand.u32 %v2035, 4294901760
    %v2037 = vsub.f32 %v2035, %v2036
    %v2038 = vand.u32 %v2037, 4294901760
    %2039 = vmatmul.mubr.f32.gmra.mrb[0].mxu0 %v2038
    %v2040 = vpop.f32.mrb[0].mxu0
    %v2041 = vadd.f32 0.0, %v2040
    %v2042 = vpop.f32.mrb[0].mxu0
    %2043 = vdwg.mxu0
    %2044 = vmatprep.subr.mxu0 0.0
    %v2045 = vand.u32 %v1949, 4294901760
    %v2046 = vsub.f32 %v1949, %v2045
    %v2047 = vand.u32 %v2046, 4294901760
    %v2048 = vsub.f32 %v2046, %v2047
    %v2049 = vand.u32 %v2048, 4294901760
    %2050 = vmatpush1.msra.mxu0 %v2049
    %2051 = vmatprep.subr.mxu0 0.0
    %v2052 = vand.u32 %v1950, 4294901760
    %v2053 = vsub.f32 %v1950, %v2052
    %v2054 = vand.u32 %v2053, 4294901760
    %v2055 = vsub.f32 %v2053, %v2054
    %v2056 = vand.u32 %v2055, 4294901760
    %2057 = vmatpush1.msra.mxu0 %v2056
    %2058 = vmatprep.subr.mxu0 0.0
    %2059 = vmatpush1.msra.mxu0 0.0
    %2060 = vmatprep.subr.mxu0 0.0
    %2061 = vmatpush1.msra.mxu0 0.0
    %2062 = vmatprep.subr.mxu0 0.0
    %2063 = vmatpush1.msra.mxu0 0.0
    %2064 = vmatprep.subr.mxu0 0.0
    %2065 = vmatpush1.msra.mxu0 0.0
    %2066 = vmatprep.subr.mxu0 0.0
    %2067 = vmatpush1.msra.mxu0 0.0
    %2068 = vmatprep.subr.mxu0 0.0
    %2069 = vmatpush1.msra.mxu0 0.0
    %2070 = vmatprep.subr.mxu0 0.0
    %2071 = vmatpush1.msra.mxu0 0.0
    %2072 = vmatprep.subr.mxu0 0.0
    %2073 = vmatpush1.msra.mxu0 0.0
    %2074 = vmatprep.subr.mxu0 0.0
    %2075 = vmatpush1.msra.mxu0 0.0
    %2076 = vmatprep.subr.mxu0 0.0
    %2077 = vmatpush1.msra.mxu0 0.0
    %2078 = vmatprep.subr.mxu0 0.0
    %2079 = vmatpush1.msra.mxu0 0.0
    %2080 = vmatprep.subr.mxu0 0.0
    %2081 = vmatpush1.msra.mxu0 0.0
    %2082 = vmatprep.subr.mxu0 0.0
    %2083 = vmatpush1.msra.mxu0 0.0
    %2084 = vmatprep.subr.mxu0 0.0
    %2085 = vmatpush1.msra.mxu0 0.0
    %2086 = vmatprep.subr.mxu0 0.0
    %2087 = vmatpush1.msra.mxu0 0.0
    %2088 = vmatprep.subr.mxu0 0.0
    %2089 = vmatpush1.msra.mxu0 0.0
    %2090 = vmatprep.subr.mxu0 0.0
    %2091 = vmatpush1.msra.mxu0 0.0
    %2092 = vmatprep.subr.mxu0 0.0
    %2093 = vmatpush1.msra.mxu0 0.0
    %2094 = vmatprep.subr.mxu0 0.0
    %2095 = vmatpush1.msra.mxu0 0.0
    %2096 = vmatprep.subr.mxu0 0.0
    %2097 = vmatpush1.msra.mxu0 0.0
    %2098 = vmatprep.subr.mxu0 0.0
    %2099 = vmatpush1.msra.mxu0 0.0
    %2100 = vmatprep.subr.mxu0 0.0
    %2101 = vmatpush1.msra.mxu0 0.0
    %2102 = vmatprep.subr.mxu0 0.0
    %2103 = vmatpush1.msra.mxu0 0.0
    %2104 = vmatprep.subr.mxu0 0.0
    %2105 = vmatpush1.msra.mxu0 0.0
    %2106 = vmatprep.subr.mxu0 0.0
    %2107 = vmatpush1.msra.mxu0 0.0
    %2108 = vmatprep.subr.mxu0 0.0
    %2109 = vmatpush1.msra.mxu0 0.0
    %2110 = vmatprep.subr.mxu0 0.0
    %2111 = vmatpush1.msra.mxu0 0.0
    %2112 = vmatprep.subr.mxu0 0.0
    %2113 = vmatpush1.msra.mxu0 0.0
    %2114 = vmatprep.subr.mxu0 0.0
    %2115 = vmatpush1.msra.mxu0 0.0
    %2116 = vmatprep.subr.mxu0 0.0
    %2117 = vmatpush1.msra.mxu0 0.0
    %2118 = vmatprep.mubr.f32.mxu0 0.0
    %v2119 = vand.u32 %v1952, 4294901760
    %2120 = vmatmul.mubr.f32.gmra.mrb[0].mxu0 %v2119
    %v2121 = vpop.f32.mrb[0].mxu0
    %v2122 = vadd.f32 %v2031, %v2121
    %v2123 = vpop.f32.mrb[0].mxu0
    %2124 = vmatprep.mubr.f32.mxu0 0.0
    %v2125 = vand.u32 %v1955, 4294901760
    %2126 = vmatmul.mubr.f32.gmra.mrb[0].mxu0 %v2125
    %v2127 = vpop.f32.mrb[0].mxu0
    %v2128 = vadd.f32 %v2041, %v2127
    %v2129 = vpop.f32.mrb[0].mxu0
    %2130 = vdwg.mxu0
    %2131 = vmatprep.subr.mxu0 0.0
    %v2132 = vand.u32 %v1949, 4294901760
    %v2133 = vsub.f32 %v1949, %v2132
    %2134 = vmatpush1.msra.mxu0 %v2133
    %2135 = vmatprep.subr.mxu0 0.0
    %v2136 = vand.u32 %v1950, 4294901760
    %v2137 = vsub.f32 %v1950, %v2136
    %2138 = vmatpush1.msra.mxu0 %v2137
    %2139 = vmatprep.subr.mxu0 0.0
    %2140 = vmatpush1.msra.mxu0 0.0
    %2141 = vmatprep.subr.mxu0 0.0
    %2142 = vmatpush1.msra.mxu0 0.0
    %2143 = vmatprep.subr.mxu0 0.0
    %2144 = vmatpush1.msra.mxu0 0.0
    %2145 = vmatprep.subr.mxu0 0.0
    %2146 = vmatpush1.msra.mxu0 0.0
    %2147 = vmatprep.subr.mxu0 0.0
    %2148 = vmatpush1.msra.mxu0 0.0
    %2149 = vmatprep.subr.mxu0 0.0
    %2150 = vmatpush1.msra.mxu0 0.0
    %2151 = vmatprep.subr.mxu0 0.0
    %2152 = vmatpush1.msra.mxu0 0.0
    %2153 = vmatprep.subr.mxu0 0.0
    %2154 = vmatpush1.msra.mxu0 0.0
    %2155 = vmatprep.subr.mxu0 0.0
    %2156 = vmatpush1.msra.mxu0 0.0
    %2157 = vmatprep.subr.mxu0 0.0
    %2158 = vmatpush1.msra.mxu0 0.0
    %2159 = vmatprep.subr.mxu0 0.0
    %2160 = vmatpush1.msra.mxu0 0.0
    %2161 = vmatprep.subr.mxu0 0.0
    %2162 = vmatpush1.msra.mxu0 0.0
    %2163 = vmatprep.subr.mxu0 0.0
    %2164 = vmatpush1.msra.mxu0 0.0
    %2165 = vmatprep.subr.mxu0 0.0
    %2166 = vmatpush1.msra.mxu0 0.0
    %2167 = vmatprep.subr.mxu0 0.0
    %2168 = vmatpush1.msra.mxu0 0.0
    %2169 = vmatprep.subr.mxu0 0.0
    %2170 = vmatpush1.msra.mxu0 0.0
    %2171 = vmatprep.subr.mxu0 0.0
    %2172 = vmatpush1.msra.mxu0 0.0
    %2173 = vmatprep.subr.mxu0 0.0
    %2174 = vmatpush1.msra.mxu0 0.0
    %2175 = vmatprep.subr.mxu0 0.0
    %2176 = vmatpush1.msra.mxu0 0.0
    %2177 = vmatprep.subr.mxu0 0.0
    %2178 = vmatpush1.msra.mxu0 0.0
    %2179 = vmatprep.subr.mxu0 0.0
    %2180 = vmatpush1.msra.mxu0 0.0
    %2181 = vmatprep.subr.mxu0 0.0
    %2182 = vmatpush1.msra.mxu0 0.0
    %2183 = vmatprep.subr.mxu0 0.0
    %2184 = vmatpush1.msra.mxu0 0.0
    %2185 = vmatprep.subr.mxu0 0.0
    %2186 = vmatpush1.msra.mxu0 0.0
    %2187 = vmatprep.subr.mxu0 0.0
    %2188 = vmatpush1.msra.mxu0 0.0
    %2189 = vmatprep.subr.mxu0 0.0
    %2190 = vmatpush1.msra.mxu0 0.0
    %2191 = vmatprep.subr.mxu0 0.0
    %2192 = vmatpush1.msra.mxu0 0.0
    %2193 = vmatprep.subr.mxu0 0.0
    %2194 = vmatpush1.msra.mxu0 0.0
    %2195 = vmatprep.subr.mxu0 0.0
    %2196 = vmatpush1.msra.mxu0 0.0
    %2197 = vmatprep.subr.mxu0 0.0
    %2198 = vmatpush1.msra.mxu0 0.0
    %2199 = vmatprep.mubr.f32.mxu0 0.0
    %v2200 = vand.u32 %v1952, 4294901760
    %v2201 = vsub.f32 %v1952, %v2200
    %2202 = vmatmul.mubr.f32.gmra.mrb[0].mxu0 %v2201
    %v2203 = vpop.f32.mrb[0].mxu0
    %v2204 = vadd.f32 %v2122, %v2203
    %v2205 = vpop.f32.mrb[0].mxu0
    %2206 = vmatprep.mubr.f32.mxu0 0.0
    %v2207 = vand.u32 %v1955, 4294901760
    %v2208 = vsub.f32 %v1955, %v2207
    %2209 = vmatmul.mubr.f32.gmra.mrb[0].mxu0 %v2208
    %v2210 = vpop.f32.mrb[0].mxu0
    %v2211 = vadd.f32 %v2128, %v2210
    %v2212 = vpop.f32.mrb[0].mxu0
    %2213 = vdwg.mxu0
    %2214 = vmatprep.subr.mxu0 0.0
    %v2215 = vand.u32 %v1949, 4294901760
    %2216 = vmatpush1.msra.mxu0 %v2215
    %2217 = vmatprep.subr.mxu0 0.0
    %v2218 = vand.u32 %v1950, 4294901760
    %2219 = vmatpush1.msra.mxu0 %v2218
    %2220 = vmatprep.subr.mxu0 0.0
    %2221 = vmatpush1.msra.mxu0 0.0
    %2222 = vmatprep.subr.mxu0 0.0
    %2223 = vmatpush1.msra.mxu0 0.0
    %2224 = vmatprep.subr.mxu0 0.0
    %2225 = vmatpush1.msra.mxu0 0.0
    %2226 = vmatprep.subr.mxu0 0.0
    %2227 = vmatpush1.msra.mxu0 0.0
    %2228 = vmatprep.subr.mxu0 0.0
    %2229 = vmatpush1.msra.mxu0 0.0
    %2230 = vmatprep.subr.mxu0 0.0
    %2231 = vmatpush1.msra.mxu0 0.0
    %2232 = vmatprep.subr.mxu0 0.0
    %2233 = vmatpush1.msra.mxu0 0.0
    %2234 = vmatprep.subr.mxu0 0.0
    %2235 = vmatpush1.msra.mxu0 0.0
    %2236 = vmatprep.subr.mxu0 0.0
    %2237 = vmatpush1.msra.mxu0 0.0
    %2238 = vmatprep.subr.mxu0 0.0
    %2239 = vmatpush1.msra.mxu0 0.0
    %2240 = vmatprep.subr.mxu0 0.0
    %2241 = vmatpush1.msra.mxu0 0.0
    %2242 = vmatprep.subr.mxu0 0.0
    %2243 = vmatpush1.msra.mxu0 0.0
    %2244 = vmatprep.subr.mxu0 0.0
    %2245 = vmatpush1.msra.mxu0 0.0
    %2246 = vmatprep.subr.mxu0 0.0
    %2247 = vmatpush1.msra.mxu0 0.0
    %2248 = vmatprep.subr.mxu0 0.0
    %2249 = vmatpush1.msra.mxu0 0.0
    %2250 = vmatprep.subr.mxu0 0.0
    %2251 = vmatpush1.msra.mxu0 0.0
    %2252 = vmatprep.subr.mxu0 0.0
    %2253 = vmatpush1.msra.mxu0 0.0
    %2254 = vmatprep.subr.mxu0 0.0
    %2255 = vmatpush1.msra.mxu0 0.0
    %2256 = vmatprep.subr.mxu0 0.0
    %2257 = vmatpush1.msra.mxu0 0.0
    %2258 = vmatprep.subr.mxu0 0.0
    %2259 = vmatpush1.msra.mxu0 0.0
    %2260 = vmatprep.subr.mxu0 0.0
    %2261 = vmatpush1.msra.mxu0 0.0
    %2262 = vmatprep.subr.mxu0 0.0
    %2263 = vmatpush1.msra.mxu0 0.0
    %2264 = vmatprep.subr.mxu0 0.0
    %2265 = vmatpush1.msra.mxu0 0.0
    %2266 = vmatprep.subr.mxu0 0.0
    %2267 = vmatpush1.msra.mxu0 0.0
    %2268 = vmatprep.subr.mxu0 0.0
    %2269 = vmatpush1.msra.mxu0 0.0
    %2270 = vmatprep.subr.mxu0 0.0
    %2271 = vmatpush1.msra.mxu0 0.0
    %2272 = vmatprep.subr.mxu0 0.0
    %2273 = vmatpush1.msra.mxu0 0.0
    %2274 = vmatprep.subr.mxu0 0.0
    %2275 = vmatpush1.msra.mxu0 0.0
    %2276 = vmatprep.subr.mxu0 0.0
    %2277 = vmatpush1.msra.mxu0 0.0
    %2278 = vmatprep.subr.mxu0 0.0
    %2279 = vmatpush1.msra.mxu0 0.0
    %2280 = vmatprep.mubr.f32.mxu0 0.0
    %v2281 = vand.u32 %v1952, 4294901760
    %v2282 = vsub.f32 %v1952, %v2281
    %v2283 = vand.u32 %v2282, 4294901760
    %2284 = vmatmul.mubr.f32.gmra.mrb[0].mxu0 %v2283
    %v2285 = vpop.f32.mrb[0].mxu0
    %v2286 = vadd.f32 %v2204, %v2285
    %v2287 = vpop.f32.mrb[0].mxu0
    %2288 = vmatprep.mubr.f32.mxu0 0.0
    %v2289 = vand.u32 %v1955, 4294901760
    %v2290 = vsub.f32 %v1955, %v2289
    %v2291 = vand.u32 %v2290, 4294901760
    %2292 = vmatmul.mubr.f32.gmra.mrb[0].mxu0 %v2291
    %v2293 = vpop.f32.mrb[0].mxu0
    %v2294 = vadd.f32 %v2211, %v2293
    %v2295 = vpop.f32.mrb[0].mxu0
    %2296 = vdwg.mxu0
    %2297 = vmatprep.subr.mxu0 0.0
    %v2298 = vand.u32 %v1949, 4294901760
    %v2299 = vsub.f32 %v1949, %v2298
    %v2300 = vand.u32 %v2299, 4294901760
    %2301 = vmatpush1.msra.mxu0 %v2300
    %2302 = vmatprep.subr.mxu0 0.0
    %v2303 = vand.u32 %v1950, 4294901760
    %v2304 = vsub.f32 %v1950, %v2303
    %v2305 = vand.u32 %v2304, 4294901760
    %2306 = vmatpush1.msra.mxu0 %v2305
    %2307 = vmatprep.subr.mxu0 0.0
    %2308 = vmatpush1.msra.mxu0 0.0
    %2309 = vmatprep.subr.mxu0 0.0
    %2310 = vmatpush1.msra.mxu0 0.0
    %2311 = vmatprep.subr.mxu0 0.0
    %2312 = vmatpush1.msra.mxu0 0.0
    %2313 = vmatprep.subr.mxu0 0.0
    %2314 = vmatpush1.msra.mxu0 0.0
    %2315 = vmatprep.subr.mxu0 0.0
    %2316 = vmatpush1.msra.mxu0 0.0
    %2317 = vmatprep.subr.mxu0 0.0
    %2318 = vmatpush1.msra.mxu0 0.0
    %2319 = vmatprep.subr.mxu0 0.0
    %2320 = vmatpush1.msra.mxu0 0.0
    %2321 = vmatprep.subr.mxu0 0.0
    %2322 = vmatpush1.msra.mxu0 0.0
    %2323 = vmatprep.subr.mxu0 0.0
    %2324 = vmatpush1.msra.mxu0 0.0
    %2325 = vmatprep.subr.mxu0 0.0
    %2326 = vmatpush1.msra.mxu0 0.0
    %2327 = vmatprep.subr.mxu0 0.0
    %2328 = vmatpush1.msra.mxu0 0.0
    %2329 = vmatprep.subr.mxu0 0.0
    %2330 = vmatpush1.msra.mxu0 0.0
    %2331 = vmatprep.subr.mxu0 0.0
    %2332 = vmatpush1.msra.mxu0 0.0
    %2333 = vmatprep.subr.mxu0 0.0
    %2334 = vmatpush1.msra.mxu0 0.0
    %2335 = vmatprep.subr.mxu0 0.0
    %2336 = vmatpush1.msra.mxu0 0.0
    %2337 = vmatprep.subr.mxu0 0.0
    %2338 = vmatpush1.msra.mxu0 0.0
    %2339 = vmatprep.subr.mxu0 0.0
    %2340 = vmatpush1.msra.mxu0 0.0
    %2341 = vmatprep.subr.mxu0 0.0
    %2342 = vmatpush1.msra.mxu0 0.0
    %2343 = vmatprep.subr.mxu0 0.0
    %2344 = vmatpush1.msra.mxu0 0.0
    %2345 = vmatprep.subr.mxu0 0.0
    %2346 = vmatpush1.msra.mxu0 0.0
    %2347 = vmatprep.subr.mxu0 0.0
    %2348 = vmatpush1.msra.mxu0 0.0
    %2349 = vmatprep.subr.mxu0 0.0
    %2350 = vmatpush1.msra.mxu0 0.0
    %2351 = vmatprep.subr.mxu0 0.0
    %2352 = vmatpush1.msra.mxu0 0.0
    %2353 = vmatprep.subr.mxu0 0.0
    %2354 = vmatpush1.msra.mxu0 0.0
    %2355 = vmatprep.subr.mxu0 0.0
    %2356 = vmatpush1.msra.mxu0 0.0
    %2357 = vmatprep.subr.mxu0 0.0
    %2358 = vmatpush1.msra.mxu0 0.0
    %2359 = vmatprep.subr.mxu0 0.0
    %2360 = vmatpush1.msra.mxu0 0.0
    %2361 = vmatprep.subr.mxu0 0.0
    %2362 = vmatpush1.msra.mxu0 0.0
    %2363 = vmatprep.subr.mxu0 0.0
    %2364 = vmatpush1.msra.mxu0 0.0
    %2365 = vmatprep.subr.mxu0 0.0
    %2366 = vmatpush1.msra.mxu0 0.0
    %2367 = vmatprep.mubr.f32.mxu0 0.0
    %v2368 = vand.u32 %v1952, 4294901760
    %2369 = vmatmul.mubr.f32.gmra.mrb[0].mxu0 %v2368
    %v2370 = vpop.f32.mrb[0].mxu0
    %v2371 = vadd.f32 %v2286, %v2370
    %v2372 = vpop.f32.mrb[0].mxu0
    %2373 = vmatprep.mubr.f32.mxu0 0.0
    %v2374 = vand.u32 %v1955, 4294901760
    %2375 = vmatmul.mubr.f32.gmra.mrb[0].mxu0 %v2374
    %v2376 = vpop.f32.mrb[0].mxu0
    %v2377 = vadd.f32 %v2294, %v2376
    %v2378 = vpop.f32.mrb[0].mxu0
    %2379 = vdwg.mxu0
    %2380 = vmatprep.subr.mxu0 0.0
    %v2381 = vand.u32 %v1949, 4294901760
    %2382 = vmatpush1.msra.mxu0 %v2381
    %2383 = vmatprep.subr.mxu0 0.0
    %v2384 = vand.u32 %v1950, 4294901760
    %2385 = vmatpush1.msra.mxu0 %v2384
    %2386 = vmatprep.subr.mxu0 0.0
    %2387 = vmatpush1.msra.mxu0 0.0
    %2388 = vmatprep.subr.mxu0 0.0
    %2389 = vmatpush1.msra.mxu0 0.0
    %2390 = vmatprep.subr.mxu0 0.0
    %2391 = vmatpush1.msra.mxu0 0.0
    %2392 = vmatprep.subr.mxu0 0.0
    %2393 = vmatpush1.msra.mxu0 0.0
    %2394 = vmatprep.subr.mxu0 0.0
    %2395 = vmatpush1.msra.mxu0 0.0
    %2396 = vmatprep.subr.mxu0 0.0
    %2397 = vmatpush1.msra.mxu0 0.0
    %2398 = vmatprep.subr.mxu0 0.0
    %2399 = vmatpush1.msra.mxu0 0.0
    %2400 = vmatprep.subr.mxu0 0.0
    %2401 = vmatpush1.msra.mxu0 0.0
    %2402 = vmatprep.subr.mxu0 0.0
    %2403 = vmatpush1.msra.mxu0 0.0
    %2404 = vmatprep.subr.mxu0 0.0
    %2405 = vmatpush1.msra.mxu0 0.0
    %2406 = vmatprep.subr.mxu0 0.0
    %2407 = vmatpush1.msra.mxu0 0.0
    %2408 = vmatprep.subr.mxu0 0.0
    %2409 = vmatpush1.msra.mxu0 0.0
    %2410 = vmatprep.subr.mxu0 0.0
    %2411 = vmatpush1.msra.mxu0 0.0
    %2412 = vmatprep.subr.mxu0 0.0
    %2413 = vmatpush1.msra.mxu0 0.0
    %2414 = vmatprep.subr.mxu0 0.0
    %2415 = vmatpush1.msra.mxu0 0.0
    %2416 = vmatprep.subr.mxu0 0.0
    %2417 = vmatpush1.msra.mxu0 0.0
    %2418 = vmatprep.subr.mxu0 0.0
    %2419 = vmatpush1.msra.mxu0 0.0
    %2420 = vmatprep.subr.mxu0 0.0
    %2421 = vmatpush1.msra.mxu0 0.0
    %2422 = vmatprep.subr.mxu0 0.0
    %2423 = vmatpush1.msra.mxu0 0.0
    %2424 = vmatprep.subr.mxu0 0.0
    %2425 = vmatpush1.msra.mxu0 0.0
    %2426 = vmatprep.subr.mxu0 0.0
    %2427 = vmatpush1.msra.mxu0 0.0
    %2428 = vmatprep.subr.mxu0 0.0
    %2429 = vmatpush1.msra.mxu0 0.0
    %2430 = vmatprep.subr.mxu0 0.0
    %2431 = vmatpush1.msra.mxu0 0.0
    %2432 = vmatprep.subr.mxu0 0.0
    %2433 = vmatpush1.msra.mxu0 0.0
    %2434 = vmatprep.subr.mxu0 0.0
    %2435 = vmatpush1.msra.mxu0 0.0
    %2436 = vmatprep.subr.mxu0 0.0
    %2437 = vmatpush1.msra.mxu0 0.0
    %2438 = vmatprep.subr.mxu0 0.0
    %2439 = vmatpush1.msra.mxu0 0.0
    %2440 = vmatprep.subr.mxu0 0.0
    %2441 = vmatpush1.msra.mxu0 0.0
    %2442 = vmatprep.subr.mxu0 0.0
    %2443 = vmatpush1.msra.mxu0 0.0
    %2444 = vmatprep.subr.mxu0 0.0
    %2445 = vmatpush1.msra.mxu0 0.0
    %2446 = vmatprep.mubr.f32.mxu0 0.0
    %v2447 = vand.u32 %v1952, 4294901760
    %2448 = vmatmul.mubr.f32.gmra.mrb[0].mxu0 %v2447
    %v2449 = vpop.f32.mrb[0].mxu0
    %v2450 = vadd.f32 %v2371, %v2449
    %v2451 = vpop.f32.mrb[0].mxu0
    %2452 = vmatprep.mubr.f32.mxu0 0.0
    %v2453 = vand.u32 %v1955, 4294901760
    %2454 = vmatmul.mubr.f32.gmra.mrb[0].mxu0 %v2453
    %v2455 = vpop.f32.mrb[0].mxu0
    %v2456 = vadd.f32 %v2377, %v2455
    %v2457 = vpop.f32.mrb[0].mxu0
    %2458 = vdwg.mxu0
    %v2460 = vsel %vm626, %v1926, 0
    %v2463 = vsel %vm626, %v1932, 0
    %2465 = vmatprep.subr.mxu0 0.0
    %v2466 = vand.u32 %v1947, 4294901760
    %2467 = vmatpush1.msra.mxu0 %v2466
    %2468 = vmatprep.subr.mxu0 0.0
    %v2469 = vand.u32 %v1948, 4294901760
    %2470 = vmatpush1.msra.mxu0 %v2469
    %2471 = vmatprep.subr.mxu0 0.0
    %2472 = vmatpush1.msra.mxu0 0.0
    %2473 = vmatprep.subr.mxu0 0.0
    %2474 = vmatpush1.msra.mxu0 0.0
    %2475 = vmatprep.subr.mxu0 0.0
    %2476 = vmatpush1.msra.mxu0 0.0
    %2477 = vmatprep.subr.mxu0 0.0
    %2478 = vmatpush1.msra.mxu0 0.0
    %2479 = vmatprep.subr.mxu0 0.0
    %2480 = vmatpush1.msra.mxu0 0.0
    %2481 = vmatprep.subr.mxu0 0.0
    %2482 = vmatpush1.msra.mxu0 0.0
    %2483 = vmatprep.subr.mxu0 0.0
    %2484 = vmatpush1.msra.mxu0 0.0
    %2485 = vmatprep.subr.mxu0 0.0
    %2486 = vmatpush1.msra.mxu0 0.0
    %2487 = vmatprep.subr.mxu0 0.0
    %2488 = vmatpush1.msra.mxu0 0.0
    %2489 = vmatprep.subr.mxu0 0.0
    %2490 = vmatpush1.msra.mxu0 0.0
    %2491 = vmatprep.subr.mxu0 0.0
    %2492 = vmatpush1.msra.mxu0 0.0
    %2493 = vmatprep.subr.mxu0 0.0
    %2494 = vmatpush1.msra.mxu0 0.0
    %2495 = vmatprep.subr.mxu0 0.0
    %2496 = vmatpush1.msra.mxu0 0.0
    %2497 = vmatprep.subr.mxu0 0.0
    %2498 = vmatpush1.msra.mxu0 0.0
    %2499 = vmatprep.subr.mxu0 0.0
    %2500 = vmatpush1.msra.mxu0 0.0
    %2501 = vmatprep.subr.mxu0 0.0
    %2502 = vmatpush1.msra.mxu0 0.0
    %2503 = vmatprep.subr.mxu0 0.0
    %2504 = vmatpush1.msra.mxu0 0.0
    %2505 = vmatprep.subr.mxu0 0.0
    %2506 = vmatpush1.msra.mxu0 0.0
    %2507 = vmatprep.subr.mxu0 0.0
    %2508 = vmatpush1.msra.mxu0 0.0
    %2509 = vmatprep.subr.mxu0 0.0
    %2510 = vmatpush1.msra.mxu0 0.0
    %2511 = vmatprep.subr.mxu0 0.0
    %2512 = vmatpush1.msra.mxu0 0.0
    %2513 = vmatprep.subr.mxu0 0.0
    %2514 = vmatpush1.msra.mxu0 0.0
    %2515 = vmatprep.subr.mxu0 0.0
    %2516 = vmatpush1.msra.mxu0 0.0
    %2517 = vmatprep.subr.mxu0 0.0
    %2518 = vmatpush1.msra.mxu0 0.0
    %2519 = vmatprep.subr.mxu0 0.0
    %2520 = vmatpush1.msra.mxu0 0.0
    %2521 = vmatprep.subr.mxu0 0.0
    %2522 = vmatpush1.msra.mxu0 0.0
    %2523 = vmatprep.subr.mxu0 0.0
    %2524 = vmatpush1.msra.mxu0 0.0
    %2525 = vmatprep.subr.mxu0 0.0
    %2526 = vmatpush1.msra.mxu0 0.0
    %2527 = vmatprep.subr.mxu0 0.0
    %2528 = vmatpush1.msra.mxu0 0.0
    %2529 = vmatprep.subr.mxu0 0.0
    %2530 = vmatpush1.msra.mxu0 0.0
    %2531 = vmatprep.mubr.f32.mxu0 0.0
    %v2532 = vand.u32 %v2460, 4294901760
    %v2533 = vsub.f32 %v2460, %v2532
    %v2534 = vand.u32 %v2533, 4294901760
    %v2535 = vsub.f32 %v2533, %v2534
    %v2536 = vand.u32 %v2535, 4294901760
    %2537 = vmatmul.mubr.f32.gmra.mrb[0].mxu0 %v2536
    %v2538 = vpop.f32.mrb[0].mxu0
    %v2539 = vadd.f32 %v2450, %v2538
    %v2540 = vpop.f32.mrb[0].mxu0
    %2541 = vmatprep.mubr.f32.mxu0 0.0
    %v2542 = vand.u32 %v2463, 4294901760
    %v2543 = vsub.f32 %v2463, %v2542
    %v2544 = vand.u32 %v2543, 4294901760
    %v2545 = vsub.f32 %v2543, %v2544
    %v2546 = vand.u32 %v2545, 4294901760
    %2547 = vmatmul.mubr.f32.gmra.mrb[0].mxu0 %v2546
    %v2548 = vpop.f32.mrb[0].mxu0
    %v2549 = vadd.f32 %v2456, %v2548
    %v2550 = vpop.f32.mrb[0].mxu0
    %2551 = vdwg.mxu0
    %2552 = vmatprep.subr.mxu0 0.0
    %v2553 = vand.u32 %v1947, 4294901760
    %v2554 = vsub.f32 %v1947, %v2553
    %v2555 = vand.u32 %v2554, 4294901760
    %v2556 = vsub.f32 %v2554, %v2555
    %v2557 = vand.u32 %v2556, 4294901760
    %2558 = vmatpush1.msra.mxu0 %v2557
    %2559 = vmatprep.subr.mxu0 0.0
    %v2560 = vand.u32 %v1948, 4294901760
    %v2561 = vsub.f32 %v1948, %v2560
    %v2562 = vand.u32 %v2561, 4294901760
    %v2563 = vsub.f32 %v2561, %v2562
    %v2564 = vand.u32 %v2563, 4294901760
    %2565 = vmatpush1.msra.mxu0 %v2564
    %2566 = vmatprep.subr.mxu0 0.0
    %2567 = vmatpush1.msra.mxu0 0.0
    %2568 = vmatprep.subr.mxu0 0.0
    %2569 = vmatpush1.msra.mxu0 0.0
    %2570 = vmatprep.subr.mxu0 0.0
    %2571 = vmatpush1.msra.mxu0 0.0
    %2572 = vmatprep.subr.mxu0 0.0
    %2573 = vmatpush1.msra.mxu0 0.0
    %2574 = vmatprep.subr.mxu0 0.0
    %2575 = vmatpush1.msra.mxu0 0.0
    %2576 = vmatprep.subr.mxu0 0.0
    %2577 = vmatpush1.msra.mxu0 0.0
    %2578 = vmatprep.subr.mxu0 0.0
    %2579 = vmatpush1.msra.mxu0 0.0
    %2580 = vmatprep.subr.mxu0 0.0
    %2581 = vmatpush1.msra.mxu0 0.0
    %2582 = vmatprep.subr.mxu0 0.0
    %2583 = vmatpush1.msra.mxu0 0.0
    %2584 = vmatprep.subr.mxu0 0.0
    %2585 = vmatpush1.msra.mxu0 0.0
    %2586 = vmatprep.subr.mxu0 0.0
    %2587 = vmatpush1.msra.mxu0 0.0
    %2588 = vmatprep.subr.mxu0 0.0
    %2589 = vmatpush1.msra.mxu0 0.0
    %2590 = vmatprep.subr.mxu0 0.0
    %2591 = vmatpush1.msra.mxu0 0.0
    %2592 = vmatprep.subr.mxu0 0.0
    %2593 = vmatpush1.msra.mxu0 0.0
    %2594 = vmatprep.subr.mxu0 0.0
    %2595 = vmatpush1.msra.mxu0 0.0
    %2596 = vmatprep.subr.mxu0 0.0
    %2597 = vmatpush1.msra.mxu0 0.0
    %2598 = vmatprep.subr.mxu0 0.0
    %2599 = vmatpush1.msra.mxu0 0.0
    %2600 = vmatprep.subr.mxu0 0.0
    %2601 = vmatpush1.msra.mxu0 0.0
    %2602 = vmatprep.subr.mxu0 0.0
    %2603 = vmatpush1.msra.mxu0 0.0
    %2604 = vmatprep.subr.mxu0 0.0
    %2605 = vmatpush1.msra.mxu0 0.0
    %2606 = vmatprep.subr.mxu0 0.0
    %2607 = vmatpush1.msra.mxu0 0.0
    %2608 = vmatprep.subr.mxu0 0.0
    %2609 = vmatpush1.msra.mxu0 0.0
    %2610 = vmatprep.subr.mxu0 0.0
    %2611 = vmatpush1.msra.mxu0 0.0
    %2612 = vmatprep.subr.mxu0 0.0
    %2613 = vmatpush1.msra.mxu0 0.0
    %2614 = vmatprep.subr.mxu0 0.0
    %2615 = vmatpush1.msra.mxu0 0.0
    %2616 = vmatprep.subr.mxu0 0.0
    %2617 = vmatpush1.msra.mxu0 0.0
    %2618 = vmatprep.subr.mxu0 0.0
    %2619 = vmatpush1.msra.mxu0 0.0
    %2620 = vmatprep.subr.mxu0 0.0
    %2621 = vmatpush1.msra.mxu0 0.0
    %2622 = vmatprep.subr.mxu0 0.0
    %2623 = vmatpush1.msra.mxu0 0.0
    %2624 = vmatprep.subr.mxu0 0.0
    %2625 = vmatpush1.msra.mxu0 0.0
    %2626 = vmatprep.mubr.f32.mxu0 0.0
    %v2627 = vand.u32 %v2460, 4294901760
    %2628 = vmatmul.mubr.f32.gmra.mrb[0].mxu0 %v2627
    %v2629 = vpop.f32.mrb[0].mxu0
    %v2630 = vadd.f32 %v2539, %v2629
    %v2631 = vpop.f32.mrb[0].mxu0
    %2632 = vmatprep.mubr.f32.mxu0 0.0
    %v2633 = vand.u32 %v2463, 4294901760
    %2634 = vmatmul.mubr.f32.gmra.mrb[0].mxu0 %v2633
    %v2635 = vpop.f32.mrb[0].mxu0
    %v2636 = vadd.f32 %v2549, %v2635
    %v2637 = vpop.f32.mrb[0].mxu0
    %2638 = vdwg.mxu0
    %2639 = vmatprep.subr.mxu0 0.0
    %v2640 = vand.u32 %v1947, 4294901760
    %v2641 = vsub.f32 %v1947, %v2640
    %2642 = vmatpush1.msra.mxu0 %v2641
    %2643 = vmatprep.subr.mxu0 0.0
    %v2644 = vand.u32 %v1948, 4294901760
    %v2645 = vsub.f32 %v1948, %v2644
    %2646 = vmatpush1.msra.mxu0 %v2645
    %2647 = vmatprep.subr.mxu0 0.0
    %2648 = vmatpush1.msra.mxu0 0.0
    %2649 = vmatprep.subr.mxu0 0.0
    %2650 = vmatpush1.msra.mxu0 0.0
    %2651 = vmatprep.subr.mxu0 0.0
    %2652 = vmatpush1.msra.mxu0 0.0
    %2653 = vmatprep.subr.mxu0 0.0
    %2654 = vmatpush1.msra.mxu0 0.0
    %2655 = vmatprep.subr.mxu0 0.0
    %2656 = vmatpush1.msra.mxu0 0.0
    %2657 = vmatprep.subr.mxu0 0.0
    %2658 = vmatpush1.msra.mxu0 0.0
    %2659 = vmatprep.subr.mxu0 0.0
    %2660 = vmatpush1.msra.mxu0 0.0
    %2661 = vmatprep.subr.mxu0 0.0
    %2662 = vmatpush1.msra.mxu0 0.0
    %2663 = vmatprep.subr.mxu0 0.0
    %2664 = vmatpush1.msra.mxu0 0.0
    %2665 = vmatprep.subr.mxu0 0.0
    %2666 = vmatpush1.msra.mxu0 0.0
    %2667 = vmatprep.subr.mxu0 0.0
    %2668 = vmatpush1.msra.mxu0 0.0
    %2669 = vmatprep.subr.mxu0 0.0
    %2670 = vmatpush1.msra.mxu0 0.0
    %2671 = vmatprep.subr.mxu0 0.0
    %2672 = vmatpush1.msra.mxu0 0.0
    %2673 = vmatprep.subr.mxu0 0.0
    %2674 = vmatpush1.msra.mxu0 0.0
    %2675 = vmatprep.subr.mxu0 0.0
    %2676 = vmatpush1.msra.mxu0 0.0
    %2677 = vmatprep.subr.mxu0 0.0
    %2678 = vmatpush1.msra.mxu0 0.0
    %2679 = vmatprep.subr.mxu0 0.0
    %2680 = vmatpush1.msra.mxu0 0.0
    %2681 = vmatprep.subr.mxu0 0.0
    %2682 = vmatpush1.msra.mxu0 0.0
    %2683 = vmatprep.subr.mxu0 0.0
    %2684 = vmatpush1.msra.mxu0 0.0
    %2685 = vmatprep.subr.mxu0 0.0
    %2686 = vmatpush1.msra.mxu0 0.0
    %2687 = vmatprep.subr.mxu0 0.0
    %2688 = vmatpush1.msra.mxu0 0.0
    %2689 = vmatprep.subr.mxu0 0.0
    %2690 = vmatpush1.msra.mxu0 0.0
    %2691 = vmatprep.subr.mxu0 0.0
    %2692 = vmatpush1.msra.mxu0 0.0
    %2693 = vmatprep.subr.mxu0 0.0
    %2694 = vmatpush1.msra.mxu0 0.0
    %2695 = vmatprep.subr.mxu0 0.0
    %2696 = vmatpush1.msra.mxu0 0.0
    %2697 = vmatprep.subr.mxu0 0.0
    %2698 = vmatpush1.msra.mxu0 0.0
    %2699 = vmatprep.subr.mxu0 0.0
    %2700 = vmatpush1.msra.mxu0 0.0
    %2701 = vmatprep.subr.mxu0 0.0
    %2702 = vmatpush1.msra.mxu0 0.0
    %2703 = vmatprep.subr.mxu0 0.0
    %2704 = vmatpush1.msra.mxu0 0.0
    %2705 = vmatprep.subr.mxu0 0.0
    %2706 = vmatpush1.msra.mxu0 0.0
    %2707 = vmatprep.mubr.f32.mxu0 0.0
    %v2708 = vand.u32 %v2460, 4294901760
    %v2709 = vsub.f32 %v2460, %v2708
    %2710 = vmatmul.mubr.f32.gmra.mrb[0].mxu0 %v2709
    %v2711 = vpop.f32.mrb[0].mxu0
    %v2712 = vadd.f32 %v2630, %v2711
    %v2713 = vpop.f32.mrb[0].mxu0
    %2714 = vmatprep.mubr.f32.mxu0 0.0
    %v2715 = vand.u32 %v2463, 4294901760
    %v2716 = vsub.f32 %v2463, %v2715
    %2717 = vmatmul.mubr.f32.gmra.mrb[0].mxu0 %v2716
    %v2718 = vpop.f32.mrb[0].mxu0
    %v2719 = vadd.f32 %v2636, %v2718
    %v2720 = vpop.f32.mrb[0].mxu0
    %2721 = vdwg.mxu0
    %2722 = vmatprep.subr.mxu0 0.0
    %v2723 = vand.u32 %v1947, 4294901760
    %2724 = vmatpush1.msra.mxu0 %v2723
    %2725 = vmatprep.subr.mxu0 0.0
    %v2726 = vand.u32 %v1948, 4294901760
    %2727 = vmatpush1.msra.mxu0 %v2726
    %2728 = vmatprep.subr.mxu0 0.0
    %2729 = vmatpush1.msra.mxu0 0.0
    %2730 = vmatprep.subr.mxu0 0.0
    %2731 = vmatpush1.msra.mxu0 0.0
    %2732 = vmatprep.subr.mxu0 0.0
    %2733 = vmatpush1.msra.mxu0 0.0
    %2734 = vmatprep.subr.mxu0 0.0
    %2735 = vmatpush1.msra.mxu0 0.0
    %2736 = vmatprep.subr.mxu0 0.0
    %2737 = vmatpush1.msra.mxu0 0.0
    %2738 = vmatprep.subr.mxu0 0.0
    %2739 = vmatpush1.msra.mxu0 0.0
    %2740 = vmatprep.subr.mxu0 0.0
    %2741 = vmatpush1.msra.mxu0 0.0
    %2742 = vmatprep.subr.mxu0 0.0
    %2743 = vmatpush1.msra.mxu0 0.0
    %2744 = vmatprep.subr.mxu0 0.0
    %2745 = vmatpush1.msra.mxu0 0.0
    %2746 = vmatprep.subr.mxu0 0.0
    %2747 = vmatpush1.msra.mxu0 0.0
    %2748 = vmatprep.subr.mxu0 0.0
    %2749 = vmatpush1.msra.mxu0 0.0
    %2750 = vmatprep.subr.mxu0 0.0
    %2751 = vmatpush1.msra.mxu0 0.0
    %2752 = vmatprep.subr.mxu0 0.0
    %2753 = vmatpush1.msra.mxu0 0.0
    %2754 = vmatprep.subr.mxu0 0.0
    %2755 = vmatpush1.msra.mxu0 0.0
    %2756 = vmatprep.subr.mxu0 0.0
    %2757 = vmatpush1.msra.mxu0 0.0
    %2758 = vmatprep.subr.mxu0 0.0
    %2759 = vmatpush1.msra.mxu0 0.0
    %2760 = vmatprep.subr.mxu0 0.0
    %2761 = vmatpush1.msra.mxu0 0.0
    %2762 = vmatprep.subr.mxu0 0.0
    %2763 = vmatpush1.msra.mxu0 0.0
    %2764 = vmatprep.subr.mxu0 0.0
    %2765 = vmatpush1.msra.mxu0 0.0
    %2766 = vmatprep.subr.mxu0 0.0
    %2767 = vmatpush1.msra.mxu0 0.0
    %2768 = vmatprep.subr.mxu0 0.0
    %2769 = vmatpush1.msra.mxu0 0.0
    %2770 = vmatprep.subr.mxu0 0.0
    %2771 = vmatpush1.msra.mxu0 0.0
    %2772 = vmatprep.subr.mxu0 0.0
    %2773 = vmatpush1.msra.mxu0 0.0
    %2774 = vmatprep.subr.mxu0 0.0
    %2775 = vmatpush1.msra.mxu0 0.0
    %2776 = vmatprep.subr.mxu0 0.0
    %2777 = vmatpush1.msra.mxu0 0.0
    %2778 = vmatprep.subr.mxu0 0.0
    %2779 = vmatpush1.msra.mxu0 0.0
    %2780 = vmatprep.subr.mxu0 0.0
    %2781 = vmatpush1.msra.mxu0 0.0
    %2782 = vmatprep.subr.mxu0 0.0
    %2783 = vmatpush1.msra.mxu0 0.0
    %2784 = vmatprep.subr.mxu0 0.0
    %2785 = vmatpush1.msra.mxu0 0.0
    %2786 = vmatprep.subr.mxu0 0.0
    %2787 = vmatpush1.msra.mxu0 0.0
    %2788 = vmatprep.mubr.f32.mxu0 0.0
    %v2789 = vand.u32 %v2460, 4294901760
    %v2790 = vsub.f32 %v2460, %v2789
    %v2791 = vand.u32 %v2790, 4294901760
    %2792 = vmatmul.mubr.f32.gmra.mrb[0].mxu0 %v2791
    %v2793 = vpop.f32.mrb[0].mxu0
    %v2794 = vadd.f32 %v2712, %v2793
    %v2795 = vpop.f32.mrb[0].mxu0
    %2796 = vmatprep.mubr.f32.mxu0 0.0
    %v2797 = vand.u32 %v2463, 4294901760
    %v2798 = vsub.f32 %v2463, %v2797
    %v2799 = vand.u32 %v2798, 4294901760
    %2800 = vmatmul.mubr.f32.gmra.mrb[0].mxu0 %v2799
    %v2801 = vpop.f32.mrb[0].mxu0
    %v2802 = vadd.f32 %v2719, %v2801
    %v2803 = vpop.f32.mrb[0].mxu0
    %2804 = vdwg.mxu0
    %2805 = vmatprep.subr.mxu0 0.0
    %v2806 = vand.u32 %v1947, 4294901760
    %v2807 = vsub.f32 %v1947, %v2806
    %v2808 = vand.u32 %v2807, 4294901760
    %2809 = vmatpush1.msra.mxu0 %v2808
    %2810 = vmatprep.subr.mxu0 0.0
    %v2811 = vand.u32 %v1948, 4294901760
    %v2812 = vsub.f32 %v1948, %v2811
    %v2813 = vand.u32 %v2812, 4294901760
    %2814 = vmatpush1.msra.mxu0 %v2813
    %2815 = vmatprep.subr.mxu0 0.0
    %2816 = vmatpush1.msra.mxu0 0.0
    %2817 = vmatprep.subr.mxu0 0.0
    %2818 = vmatpush1.msra.mxu0 0.0
    %2819 = vmatprep.subr.mxu0 0.0
    %2820 = vmatpush1.msra.mxu0 0.0
    %2821 = vmatprep.subr.mxu0 0.0
    %2822 = vmatpush1.msra.mxu0 0.0
    %2823 = vmatprep.subr.mxu0 0.0
    %2824 = vmatpush1.msra.mxu0 0.0
    %2825 = vmatprep.subr.mxu0 0.0
    %2826 = vmatpush1.msra.mxu0 0.0
    %2827 = vmatprep.subr.mxu0 0.0
    %2828 = vmatpush1.msra.mxu0 0.0
    %2829 = vmatprep.subr.mxu0 0.0
    %2830 = vmatpush1.msra.mxu0 0.0
    %2831 = vmatprep.subr.mxu0 0.0
    %2832 = vmatpush1.msra.mxu0 0.0
    %2833 = vmatprep.subr.mxu0 0.0
    %2834 = vmatpush1.msra.mxu0 0.0
    %2835 = vmatprep.subr.mxu0 0.0
    %2836 = vmatpush1.msra.mxu0 0.0
    %2837 = vmatprep.subr.mxu0 0.0
    %2838 = vmatpush1.msra.mxu0 0.0
    %2839 = vmatprep.subr.mxu0 0.0
    %2840 = vmatpush1.msra.mxu0 0.0
    %2841 = vmatprep.subr.mxu0 0.0
    %2842 = vmatpush1.msra.mxu0 0.0
    %2843 = vmatprep.subr.mxu0 0.0
    %2844 = vmatpush1.msra.mxu0 0.0
    %2845 = vmatprep.subr.mxu0 0.0
    %2846 = vmatpush1.msra.mxu0 0.0
    %2847 = vmatprep.subr.mxu0 0.0
    %2848 = vmatpush1.msra.mxu0 0.0
    %2849 = vmatprep.subr.mxu0 0.0
    %2850 = vmatpush1.msra.mxu0 0.0
    %2851 = vmatprep.subr.mxu0 0.0
    %2852 = vmatpush1.msra.mxu0 0.0
    %2853 = vmatprep.subr.mxu0 0.0
    %2854 = vmatpush1.msra.mxu0 0.0
    %2855 = vmatprep.subr.mxu0 0.0
    %2856 = vmatpush1.msra.mxu0 0.0
    %2857 = vmatprep.subr.mxu0 0.0
    %2858 = vmatpush1.msra.mxu0 0.0
    %2859 = vmatprep.subr.mxu0 0.0
    %2860 = vmatpush1.msra.mxu0 0.0
    %2861 = vmatprep.subr.mxu0 0.0
    %2862 = vmatpush1.msra.mxu0 0.0
    %2863 = vmatprep.subr.mxu0 0.0
    %2864 = vmatpush1.msra.mxu0 0.0
    %2865 = vmatprep.subr.mxu0 0.0
    %2866 = vmatpush1.msra.mxu0 0.0
    %2867 = vmatprep.subr.mxu0 0.0
    %2868 = vmatpush1.msra.mxu0 0.0
    %2869 = vmatprep.subr.mxu0 0.0
    %2870 = vmatpush1.msra.mxu0 0.0
    %2871 = vmatprep.subr.mxu0 0.0
    %2872 = vmatpush1.msra.mxu0 0.0
    %2873 = vmatprep.subr.mxu0 0.0
    %2874 = vmatpush1.msra.mxu0 0.0
    %2875 = vmatprep.mubr.f32.mxu0 0.0
    %v2876 = vand.u32 %v2460, 4294901760
    %2877 = vmatmul.mubr.f32.gmra.mrb[0].mxu0 %v2876
    %v2878 = vpop.f32.mrb[0].mxu0
    %v2879 = vadd.f32 %v2794, %v2878
    %v2880 = vpop.f32.mrb[0].mxu0
    %2881 = vmatprep.mubr.f32.mxu0 0.0
    %v2882 = vand.u32 %v2463, 4294901760
    %2883 = vmatmul.mubr.f32.gmra.mrb[0].mxu0 %v2882
    %v2884 = vpop.f32.mrb[0].mxu0
    %v2885 = vadd.f32 %v2802, %v2884
    %v2886 = vpop.f32.mrb[0].mxu0
    %2887 = vdwg.mxu0
    %2888 = vmatprep.subr.mxu0 0.0
    %v2889 = vand.u32 %v1947, 4294901760
    %2890 = vmatpush1.msra.mxu0 %v2889
    %2891 = vmatprep.subr.mxu0 0.0
    %v2892 = vand.u32 %v1948, 4294901760
    %2893 = vmatpush1.msra.mxu0 %v2892
    %2894 = vmatprep.subr.mxu0 0.0
    %2895 = vmatpush1.msra.mxu0 0.0
    %2896 = vmatprep.subr.mxu0 0.0
    %2897 = vmatpush1.msra.mxu0 0.0
    %2898 = vmatprep.subr.mxu0 0.0
    %2899 = vmatpush1.msra.mxu0 0.0
    %2900 = vmatprep.subr.mxu0 0.0
    %2901 = vmatpush1.msra.mxu0 0.0
    %2902 = vmatprep.subr.mxu0 0.0
    %2903 = vmatpush1.msra.mxu0 0.0
    %2904 = vmatprep.subr.mxu0 0.0
    %2905 = vmatpush1.msra.mxu0 0.0
    %2906 = vmatprep.subr.mxu0 0.0
    %2907 = vmatpush1.msra.mxu0 0.0
    %2908 = vmatprep.subr.mxu0 0.0
    %2909 = vmatpush1.msra.mxu0 0.0
    %2910 = vmatprep.subr.mxu0 0.0
    %2911 = vmatpush1.msra.mxu0 0.0
    %2912 = vmatprep.subr.mxu0 0.0
    %2913 = vmatpush1.msra.mxu0 0.0
    %2914 = vmatprep.subr.mxu0 0.0
    %2915 = vmatpush1.msra.mxu0 0.0
    %2916 = vmatprep.subr.mxu0 0.0
    %2917 = vmatpush1.msra.mxu0 0.0
    %2918 = vmatprep.subr.mxu0 0.0
    %2919 = vmatpush1.msra.mxu0 0.0
    %2920 = vmatprep.subr.mxu0 0.0
    %2921 = vmatpush1.msra.mxu0 0.0
    %2922 = vmatprep.subr.mxu0 0.0
    %2923 = vmatpush1.msra.mxu0 0.0
    %2924 = vmatprep.subr.mxu0 0.0
    %2925 = vmatpush1.msra.mxu0 0.0
    %2926 = vmatprep.subr.mxu0 0.0
    %2927 = vmatpush1.msra.mxu0 0.0
    %2928 = vmatprep.subr.mxu0 0.0
    %2929 = vmatpush1.msra.mxu0 0.0
    %2930 = vmatprep.subr.mxu0 0.0
    %2931 = vmatpush1.msra.mxu0 0.0
    %2932 = vmatprep.subr.mxu0 0.0
    %2933 = vmatpush1.msra.mxu0 0.0
    %2934 = vmatprep.subr.mxu0 0.0
    %2935 = vmatpush1.msra.mxu0 0.0
    %2936 = vmatprep.subr.mxu0 0.0
    %2937 = vmatpush1.msra.mxu0 0.0
    %2938 = vmatprep.subr.mxu0 0.0
    %2939 = vmatpush1.msra.mxu0 0.0
    %2940 = vmatprep.subr.mxu0 0.0
    %2941 = vmatpush1.msra.mxu0 0.0
    %2942 = vmatprep.subr.mxu0 0.0
    %2943 = vmatpush1.msra.mxu0 0.0
    %2944 = vmatprep.subr.mxu0 0.0
    %2945 = vmatpush1.msra.mxu0 0.0
    %2946 = vmatprep.subr.mxu0 0.0
    %2947 = vmatpush1.msra.mxu0 0.0
    %2948 = vmatprep.subr.mxu0 0.0
    %2949 = vmatpush1.msra.mxu0 0.0
    %2950 = vmatprep.subr.mxu0 0.0
    %2951 = vmatpush1.msra.mxu0 0.0
    %2952 = vmatprep.subr.mxu0 0.0
    %2953 = vmatpush1.msra.mxu0 0.0
    %2954 = vmatprep.mubr.f32.mxu0 0.0
    %v2955 = vand.u32 %v2460, 4294901760
    %2956 = vmatmul.mubr.f32.gmra.mrb[0].mxu0 %v2955
    %v2957 = vpop.f32.mrb[0].mxu0
    %v2958 = vadd.f32 %v2879, %v2957
    %v2959 = vpop.f32.mrb[0].mxu0
    %2960 = vmatprep.mubr.f32.mxu0 0.0
    %v2961 = vand.u32 %v2463, 4294901760
    %2962 = vmatmul.mubr.f32.gmra.mrb[0].mxu0 %v2961
    %v2963 = vpop.f32.mrb[0].mxu0
    %v2964 = vadd.f32 %v2885, %v2963
    %v2965 = vpop.f32.mrb[0].mxu0
    %2966 = vdwg.mxu0
    %v2967 = vlaneseq
    %v2968 = vshrl.u32 %v2967, 7
    %v2969 = vsub.s32 1, %v2968
    %v2970 = vrot.slane %v72, %v2969
    %v2971 = vadd.f32 %v2958, %v2970
    %v2972 = vadd.f32 %v2964, %v2970
    %v2973 = vadd.f32 %v2971, %v56
    %v2974 = vadd.f32 %v2972, %v57
    %v2975 = vsel %vm77, %v2973, 0.0
    %2976 = vadd.xlane.f32.xlu0 %v2975
    %v2977 = vpop.xlane.xlu0 %2976
    %v2978 = vsel %vm77, %v2974, 0.0
    %2979 = vadd.xlane.f32.xlu0 %v2978
    %v2980 = vpop.xlane.xlu0 %2979
    %v2981 = vrcp.pop 32.0
    %v2982 = vmul.f32 %v2977, %v2981
    %v2983 = vmul.f32 %v2980, %v2981
    %v2984 = vsub.f32 %v2973, %v2982
    %v2985 = vsub.f32 %v2974, %v2983
    %v2986 = vmul.f32 %v2984, %v2984
    %v2987 = vmul.f32 %v2985, %v2985
    %v2988 = vsel %vm77, %v2986, 0.0
    %2989 = vadd.xlane.f32.xlu0 %v2988
    %v2990 = vpop.xlane.xlu0 %2989
    %v2991 = vsel %vm77, %v2987, 0.0
    %2992 = vadd.xlane.f32.xlu0 %v2991
    %v2993 = vpop.xlane.xlu0 %2992
    %v2994 = vmul.f32 %v2990, %v2981
    %v2995 = vmul.f32 %v2993, %v2981
    %v2996 = vadd.f32 %v2994, 1e-08
    %v2997 = vadd.f32 %v2995, 1e-08
    %v2998 = vrsqrt.pop %v2996
    %v2999 = vrsqrt.pop %v2997
    %v3000 = vmul.f32 %v2984, %v2998
    %v3001 = vmul.f32 %v2985, %v2999
    %v3002 = vlaneseq
    %v3003 = vshrl.u32 %v3002, 7
    %v3004 = vsub.s32 2, %v3003
    %v3005 = vrot.slane %v72, %v3004
    %v3006 = vmul.f32 %v3000, %v3005
    %v3007 = vmul.f32 %v3001, %v3005
    %v3008 = vlaneseq
    %v3009 = vshrl.u32 %v3008, 7
    %v3010 = vsub.s32 3, %v3009
    %v3011 = vrot.slane %v72, %v3010
    %v3012 = vadd.f32 %v3006, %v3011
    %v3013 = vadd.f32 %v3007, %v3011
    %v3014 = vlaneseq
    %v3015 = vshrl.u32 %v3014, 7
    %v3016 = vsub.s32 4, %v3015
    %v3017 = vrot.slane %v72, %v3016
    %v3019 = vsel %vm77, %v3012, 0
    %v3022 = vsel %vm77, %v3013, 0
    %3024 = vmatprep.subr.mxu0 0.0
    %v3025 = vand.u32 %v66, 4294901760
    %3026 = vmatpush1.msra.mxu0 %v3025
    %3027 = vmatprep.subr.mxu0 0.0
    %v3028 = vand.u32 %v67, 4294901760
    %3029 = vmatpush1.msra.mxu0 %v3028
    %3030 = vmatprep.subr.mxu0 0.0
    %v3031 = vand.u32 %v68, 4294901760
    %3032 = vmatpush1.msra.mxu0 %v3031
    %3033 = vmatprep.subr.mxu0 0.0
    %v3034 = vand.u32 %v69, 4294901760
    %3035 = vmatpush1.msra.mxu0 %v3034
    %3036 = vmatprep.subr.mxu0 0.0
    %3037 = vmatpush1.msra.mxu0 0.0
    %3038 = vmatprep.subr.mxu0 0.0
    %3039 = vmatpush1.msra.mxu0 0.0
    %3040 = vmatprep.subr.mxu0 0.0
    %3041 = vmatpush1.msra.mxu0 0.0
    %3042 = vmatprep.subr.mxu0 0.0
    %3043 = vmatpush1.msra.mxu0 0.0
    %3044 = vmatprep.subr.mxu0 0.0
    %3045 = vmatpush1.msra.mxu0 0.0
    %3046 = vmatprep.subr.mxu0 0.0
    %3047 = vmatpush1.msra.mxu0 0.0
    %3048 = vmatprep.subr.mxu0 0.0
    %3049 = vmatpush1.msra.mxu0 0.0
    %3050 = vmatprep.subr.mxu0 0.0
    %3051 = vmatpush1.msra.mxu0 0.0
    %3052 = vmatprep.subr.mxu0 0.0
    %3053 = vmatpush1.msra.mxu0 0.0
    %3054 = vmatprep.subr.mxu0 0.0
    %3055 = vmatpush1.msra.mxu0 0.0
    %3056 = vmatprep.subr.mxu0 0.0
    %3057 = vmatpush1.msra.mxu0 0.0
    %3058 = vmatprep.subr.mxu0 0.0
    %3059 = vmatpush1.msra.mxu0 0.0
    %3060 = vmatprep.subr.mxu0 0.0
    %3061 = vmatpush1.msra.mxu0 0.0
    %3062 = vmatprep.subr.mxu0 0.0
    %3063 = vmatpush1.msra.mxu0 0.0
    %3064 = vmatprep.subr.mxu0 0.0
    %3065 = vmatpush1.msra.mxu0 0.0
    %3066 = vmatprep.subr.mxu0 0.0
    %3067 = vmatpush1.msra.mxu0 0.0
    %3068 = vmatprep.subr.mxu0 0.0
    %3069 = vmatpush1.msra.mxu0 0.0
    %3070 = vmatprep.subr.mxu0 0.0
    %3071 = vmatpush1.msra.mxu0 0.0
    %3072 = vmatprep.subr.mxu0 0.0
    %3073 = vmatpush1.msra.mxu0 0.0
    %3074 = vmatprep.subr.mxu0 0.0
    %3075 = vmatpush1.msra.mxu0 0.0
    %3076 = vmatprep.subr.mxu0 0.0
    %3077 = vmatpush1.msra.mxu0 0.0
    %3078 = vmatprep.subr.mxu0 0.0
    %3079 = vmatpush1.msra.mxu0 0.0
    %3080 = vmatprep.subr.mxu0 0.0
    %3081 = vmatpush1.msra.mxu0 0.0
    %3082 = vmatprep.subr.mxu0 0.0
    %3083 = vmatpush1.msra.mxu0 0.0
    %3084 = vmatprep.subr.mxu0 0.0
    %3085 = vmatpush1.msra.mxu0 0.0
    %3086 = vmatprep.subr.mxu0 0.0
    %3087 = vmatpush1.msra.mxu0 0.0
    %3088 = vmatprep.subr.mxu0 0.0
    %3089 = vmatpush1.msra.mxu0 0.0
    %3090 = vmatprep.subr.mxu0 0.0
    %3091 = vmatpush1.msra.mxu0 0.0
    %3092 = vmatprep.mubr.f32.mxu0 0.0
    %v3093 = vand.u32 %v3019, 4294901760
    %v3094 = vsub.f32 %v3019, %v3093
    %v3095 = vand.u32 %v3094, 4294901760
    %v3096 = vsub.f32 %v3094, %v3095
    %v3097 = vand.u32 %v3096, 4294901760
    %3098 = vmatmul.mubr.f32.gmra.mrb[0].mxu0 %v3097
    %v3099 = vpop.f32.mrb[0].mxu0
    %v3100 = vadd.f32 %v3017, %v3099
    %v3101 = vpop.f32.mrb[0].mxu0
    %3102 = vmatprep.mubr.f32.mxu0 0.0
    %v3103 = vand.u32 %v3022, 4294901760
    %v3104 = vsub.f32 %v3022, %v3103
    %v3105 = vand.u32 %v3104, 4294901760
    %v3106 = vsub.f32 %v3104, %v3105
    %v3107 = vand.u32 %v3106, 4294901760
    %3108 = vmatmul.mubr.f32.gmra.mrb[0].mxu0 %v3107
    %v3109 = vpop.f32.mrb[0].mxu0
    %v3110 = vadd.f32 %v3017, %v3109
    %v3111 = vpop.f32.mrb[0].mxu0
    %3112 = vdwg.mxu0
    %3113 = vmatprep.subr.mxu0 0.0
    %v3114 = vand.u32 %v66, 4294901760
    %v3115 = vsub.f32 %v66, %v3114
    %v3116 = vand.u32 %v3115, 4294901760
    %v3117 = vsub.f32 %v3115, %v3116
    %v3118 = vand.u32 %v3117, 4294901760
    %3119 = vmatpush1.msra.mxu0 %v3118
    %3120 = vmatprep.subr.mxu0 0.0
    %v3121 = vand.u32 %v67, 4294901760
    %v3122 = vsub.f32 %v67, %v3121
    %v3123 = vand.u32 %v3122, 4294901760
    %v3124 = vsub.f32 %v3122, %v3123
    %v3125 = vand.u32 %v3124, 4294901760
    %3126 = vmatpush1.msra.mxu0 %v3125
    %3127 = vmatprep.subr.mxu0 0.0
    %v3128 = vand.u32 %v68, 4294901760
    %v3129 = vsub.f32 %v68, %v3128
    %v3130 = vand.u32 %v3129, 4294901760
    %v3131 = vsub.f32 %v3129, %v3130
    %v3132 = vand.u32 %v3131, 4294901760
    %3133 = vmatpush1.msra.mxu0 %v3132
    %3134 = vmatprep.subr.mxu0 0.0
    %v3135 = vand.u32 %v69, 4294901760
    %v3136 = vsub.f32 %v69, %v3135
    %v3137 = vand.u32 %v3136, 4294901760
    %v3138 = vsub.f32 %v3136, %v3137
    %v3139 = vand.u32 %v3138, 4294901760
    %3140 = vmatpush1.msra.mxu0 %v3139
    %3141 = vmatprep.subr.mxu0 0.0
    %3142 = vmatpush1.msra.mxu0 0.0
    %3143 = vmatprep.subr.mxu0 0.0
    %3144 = vmatpush1.msra.mxu0 0.0
    %3145 = vmatprep.subr.mxu0 0.0
    %3146 = vmatpush1.msra.mxu0 0.0
    %3147 = vmatprep.subr.mxu0 0.0
    %3148 = vmatpush1.msra.mxu0 0.0
    %3149 = vmatprep.subr.mxu0 0.0
    %3150 = vmatpush1.msra.mxu0 0.0
    %3151 = vmatprep.subr.mxu0 0.0
    %3152 = vmatpush1.msra.mxu0 0.0
    %3153 = vmatprep.subr.mxu0 0.0
    %3154 = vmatpush1.msra.mxu0 0.0
    %3155 = vmatprep.subr.mxu0 0.0
    %3156 = vmatpush1.msra.mxu0 0.0
    %3157 = vmatprep.subr.mxu0 0.0
    %3158 = vmatpush1.msra.mxu0 0.0
    %3159 = vmatprep.subr.mxu0 0.0
    %3160 = vmatpush1.msra.mxu0 0.0
    %3161 = vmatprep.subr.mxu0 0.0
    %3162 = vmatpush1.msra.mxu0 0.0
    %3163 = vmatprep.subr.mxu0 0.0
    %3164 = vmatpush1.msra.mxu0 0.0
    %3165 = vmatprep.subr.mxu0 0.0
    %3166 = vmatpush1.msra.mxu0 0.0
    %3167 = vmatprep.subr.mxu0 0.0
    %3168 = vmatpush1.msra.mxu0 0.0
    %3169 = vmatprep.subr.mxu0 0.0
    %3170 = vmatpush1.msra.mxu0 0.0
    %3171 = vmatprep.subr.mxu0 0.0
    %3172 = vmatpush1.msra.mxu0 0.0
    %3173 = vmatprep.subr.mxu0 0.0
    %3174 = vmatpush1.msra.mxu0 0.0
    %3175 = vmatprep.subr.mxu0 0.0
    %3176 = vmatpush1.msra.mxu0 0.0
    %3177 = vmatprep.subr.mxu0 0.0
    %3178 = vmatpush1.msra.mxu0 0.0
    %3179 = vmatprep.subr.mxu0 0.0
    %3180 = vmatpush1.msra.mxu0 0.0
    %3181 = vmatprep.subr.mxu0 0.0
    %3182 = vmatpush1.msra.mxu0 0.0
    %3183 = vmatprep.subr.mxu0 0.0
    %3184 = vmatpush1.msra.mxu0 0.0
    %3185 = vmatprep.subr.mxu0 0.0
    %3186 = vmatpush1.msra.mxu0 0.0
    %3187 = vmatprep.subr.mxu0 0.0
    %3188 = vmatpush1.msra.mxu0 0.0
    %3189 = vmatprep.subr.mxu0 0.0
    %3190 = vmatpush1.msra.mxu0 0.0
    %3191 = vmatprep.subr.mxu0 0.0
    %3192 = vmatpush1.msra.mxu0 0.0
    %3193 = vmatprep.subr.mxu0 0.0
    %3194 = vmatpush1.msra.mxu0 0.0
    %3195 = vmatprep.subr.mxu0 0.0
    %3196 = vmatpush1.msra.mxu0 0.0
    %3197 = vmatprep.mubr.f32.mxu0 0.0
    %v3198 = vand.u32 %v3019, 4294901760
    %3199 = vmatmul.mubr.f32.gmra.mrb[0].mxu0 %v3198
    %v3200 = vpop.f32.mrb[0].mxu0
    %v3201 = vadd.f32 %v3100, %v3200
    %v3202 = vpop.f32.mrb[0].mxu0
    %3203 = vmatprep.mubr.f32.mxu0 0.0
    %v3204 = vand.u32 %v3022, 4294901760
    %3205 = vmatmul.mubr.f32.gmra.mrb[0].mxu0 %v3204
    %v3206 = vpop.f32.mrb[0].mxu0
    %v3207 = vadd.f32 %v3110, %v3206
    %v3208 = vpop.f32.mrb[0].mxu0
    %3209 = vdwg.mxu0
    %3210 = vmatprep.subr.mxu0 0.0
    %v3211 = vand.u32 %v66, 4294901760
    %v3212 = vsub.f32 %v66, %v3211
    %3213 = vmatpush1.msra.mxu0 %v3212
    %3214 = vmatprep.subr.mxu0 0.0
    %v3215 = vand.u32 %v67, 4294901760
    %v3216 = vsub.f32 %v67, %v3215
    %3217 = vmatpush1.msra.mxu0 %v3216
    %3218 = vmatprep.subr.mxu0 0.0
    %v3219 = vand.u32 %v68, 4294901760
    %v3220 = vsub.f32 %v68, %v3219
    %3221 = vmatpush1.msra.mxu0 %v3220
    %3222 = vmatprep.subr.mxu0 0.0
    %v3223 = vand.u32 %v69, 4294901760
    %v3224 = vsub.f32 %v69, %v3223
    %3225 = vmatpush1.msra.mxu0 %v3224
    %3226 = vmatprep.subr.mxu0 0.0
    %3227 = vmatpush1.msra.mxu0 0.0
    %3228 = vmatprep.subr.mxu0 0.0
    %3229 = vmatpush1.msra.mxu0 0.0
    %3230 = vmatprep.subr.mxu0 0.0
    %3231 = vmatpush1.msra.mxu0 0.0
    %3232 = vmatprep.subr.mxu0 0.0
    %3233 = vmatpush1.msra.mxu0 0.0
    %3234 = vmatprep.subr.mxu0 0.0
    %3235 = vmatpush1.msra.mxu0 0.0
    %3236 = vmatprep.subr.mxu0 0.0
    %3237 = vmatpush1.msra.mxu0 0.0
    %3238 = vmatprep.subr.mxu0 0.0
    %3239 = vmatpush1.msra.mxu0 0.0
    %3240 = vmatprep.subr.mxu0 0.0
    %3241 = vmatpush1.msra.mxu0 0.0
    %3242 = vmatprep.subr.mxu0 0.0
    %3243 = vmatpush1.msra.mxu0 0.0
    %3244 = vmatprep.subr.mxu0 0.0
    %3245 = vmatpush1.msra.mxu0 0.0
    %3246 = vmatprep.subr.mxu0 0.0
    %3247 = vmatpush1.msra.mxu0 0.0
    %3248 = vmatprep.subr.mxu0 0.0
    %3249 = vmatpush1.msra.mxu0 0.0
    %3250 = vmatprep.subr.mxu0 0.0
    %3251 = vmatpush1.msra.mxu0 0.0
    %3252 = vmatprep.subr.mxu0 0.0
    %3253 = vmatpush1.msra.mxu0 0.0
    %3254 = vmatprep.subr.mxu0 0.0
    %3255 = vmatpush1.msra.mxu0 0.0
    %3256 = vmatprep.subr.mxu0 0.0
    %3257 = vmatpush1.msra.mxu0 0.0
    %3258 = vmatprep.subr.mxu0 0.0
    %3259 = vmatpush1.msra.mxu0 0.0
    %3260 = vmatprep.subr.mxu0 0.0
    %3261 = vmatpush1.msra.mxu0 0.0
    %3262 = vmatprep.subr.mxu0 0.0
    %3263 = vmatpush1.msra.mxu0 0.0
    %3264 = vmatprep.subr.mxu0 0.0
    %3265 = vmatpush1.msra.mxu0 0.0
    %3266 = vmatprep.subr.mxu0 0.0
    %3267 = vmatpush1.msra.mxu0 0.0
    %3268 = vmatprep.subr.mxu0 0.0
    %3269 = vmatpush1.msra.mxu0 0.0
    %3270 = vmatprep.subr.mxu0 0.0
    %3271 = vmatpush1.msra.mxu0 0.0
    %3272 = vmatprep.subr.mxu0 0.0
    %3273 = vmatpush1.msra.mxu0 0.0
    %3274 = vmatprep.subr.mxu0 0.0
    %3275 = vmatpush1.msra.mxu0 0.0
    %3276 = vmatprep.subr.mxu0 0.0
    %3277 = vmatpush1.msra.mxu0 0.0
    %3278 = vmatprep.subr.mxu0 0.0
    %3279 = vmatpush1.msra.mxu0 0.0
    %3280 = vmatprep.subr.mxu0 0.0
    %3281 = vmatpush1.msra.mxu0 0.0
    %3282 = vmatprep.mubr.f32.mxu0 0.0
    %v3283 = vand.u32 %v3019, 4294901760
    %v3284 = vsub.f32 %v3019, %v3283
    %3285 = vmatmul.mubr.f32.gmra.mrb[0].mxu0 %v3284
    %v3286 = vpop.f32.mrb[0].mxu0
    %v3287 = vadd.f32 %v3201, %v3286
    %v3288 = vpop.f32.mrb[0].mxu0
    %3289 = vmatprep.mubr.f32.mxu0 0.0
    %v3290 = vand.u32 %v3022, 4294901760
    %v3291 = vsub.f32 %v3022, %v3290
    %3292 = vmatmul.mubr.f32.gmra.mrb[0].mxu0 %v3291
    %v3293 = vpop.f32.mrb[0].mxu0
    %v3294 = vadd.f32 %v3207, %v3293
    %v3295 = vpop.f32.mrb[0].mxu0
    %3296 = vdwg.mxu0
    %3297 = vmatprep.subr.mxu0 0.0
    %v3298 = vand.u32 %v66, 4294901760
    %3299 = vmatpush1.msra.mxu0 %v3298
    %3300 = vmatprep.subr.mxu0 0.0
    %v3301 = vand.u32 %v67, 4294901760
    %3302 = vmatpush1.msra.mxu0 %v3301
    %3303 = vmatprep.subr.mxu0 0.0
    %v3304 = vand.u32 %v68, 4294901760
    %3305 = vmatpush1.msra.mxu0 %v3304
    %3306 = vmatprep.subr.mxu0 0.0
    %v3307 = vand.u32 %v69, 4294901760
    %3308 = vmatpush1.msra.mxu0 %v3307
    %3309 = vmatprep.subr.mxu0 0.0
    %3310 = vmatpush1.msra.mxu0 0.0
    %3311 = vmatprep.subr.mxu0 0.0
    %3312 = vmatpush1.msra.mxu0 0.0
    %3313 = vmatprep.subr.mxu0 0.0
    %3314 = vmatpush1.msra.mxu0 0.0
    %3315 = vmatprep.subr.mxu0 0.0
    %3316 = vmatpush1.msra.mxu0 0.0
    %3317 = vmatprep.subr.mxu0 0.0
    %3318 = vmatpush1.msra.mxu0 0.0
    %3319 = vmatprep.subr.mxu0 0.0
    %3320 = vmatpush1.msra.mxu0 0.0
    %3321 = vmatprep.subr.mxu0 0.0
    %3322 = vmatpush1.msra.mxu0 0.0
    %3323 = vmatprep.subr.mxu0 0.0
    %3324 = vmatpush1.msra.mxu0 0.0
    %3325 = vmatprep.subr.mxu0 0.0
    %3326 = vmatpush1.msra.mxu0 0.0
    %3327 = vmatprep.subr.mxu0 0.0
    %3328 = vmatpush1.msra.mxu0 0.0
    %3329 = vmatprep.subr.mxu0 0.0
    %3330 = vmatpush1.msra.mxu0 0.0
    %3331 = vmatprep.subr.mxu0 0.0
    %3332 = vmatpush1.msra.mxu0 0.0
    %3333 = vmatprep.subr.mxu0 0.0
    %3334 = vmatpush1.msra.mxu0 0.0
    %3335 = vmatprep.subr.mxu0 0.0
    %3336 = vmatpush1.msra.mxu0 0.0
    %3337 = vmatprep.subr.mxu0 0.0
    %3338 = vmatpush1.msra.mxu0 0.0
    %3339 = vmatprep.subr.mxu0 0.0
    %3340 = vmatpush1.msra.mxu0 0.0
    %3341 = vmatprep.subr.mxu0 0.0
    %3342 = vmatpush1.msra.mxu0 0.0
    %3343 = vmatprep.subr.mxu0 0.0
    %3344 = vmatpush1.msra.mxu0 0.0
    %3345 = vmatprep.subr.mxu0 0.0
    %3346 = vmatpush1.msra.mxu0 0.0
    %3347 = vmatprep.subr.mxu0 0.0
    %3348 = vmatpush1.msra.mxu0 0.0
    %3349 = vmatprep.subr.mxu0 0.0
    %3350 = vmatpush1.msra.mxu0 0.0
    %3351 = vmatprep.subr.mxu0 0.0
    %3352 = vmatpush1.msra.mxu0 0.0
    %3353 = vmatprep.subr.mxu0 0.0
    %3354 = vmatpush1.msra.mxu0 0.0
    %3355 = vmatprep.subr.mxu0 0.0
    %3356 = vmatpush1.msra.mxu0 0.0
    %3357 = vmatprep.subr.mxu0 0.0
    %3358 = vmatpush1.msra.mxu0 0.0
    %3359 = vmatprep.subr.mxu0 0.0
    %3360 = vmatpush1.msra.mxu0 0.0
    %3361 = vmatprep.subr.mxu0 0.0
    %3362 = vmatpush1.msra.mxu0 0.0
    %3363 = vmatprep.subr.mxu0 0.0
    %3364 = vmatpush1.msra.mxu0 0.0
    %3365 = vmatprep.mubr.f32.mxu0 0.0
    %v3366 = vand.u32 %v3019, 4294901760
    %v3367 = vsub.f32 %v3019, %v3366
    %v3368 = vand.u32 %v3367, 4294901760
    %3369 = vmatmul.mubr.f32.gmra.mrb[0].mxu0 %v3368
    %v3370 = vpop.f32.mrb[0].mxu0
    %v3371 = vadd.f32 %v3287, %v3370
    %v3372 = vpop.f32.mrb[0].mxu0
    %3373 = vmatprep.mubr.f32.mxu0 0.0
    %v3374 = vand.u32 %v3022, 4294901760
    %v3375 = vsub.f32 %v3022, %v3374
    %v3376 = vand.u32 %v3375, 4294901760
    %3377 = vmatmul.mubr.f32.gmra.mrb[0].mxu0 %v3376
    %v3378 = vpop.f32.mrb[0].mxu0
    %v3379 = vadd.f32 %v3294, %v3378
    %v3380 = vpop.f32.mrb[0].mxu0
    %3381 = vdwg.mxu0
    %3382 = vmatprep.subr.mxu0 0.0
    %v3383 = vand.u32 %v66, 4294901760
    %v3384 = vsub.f32 %v66, %v3383
    %v3385 = vand.u32 %v3384, 4294901760
    %3386 = vmatpush1.msra.mxu0 %v3385
    %3387 = vmatprep.subr.mxu0 0.0
    %v3388 = vand.u32 %v67, 4294901760
    %v3389 = vsub.f32 %v67, %v3388
    %v3390 = vand.u32 %v3389, 4294901760
    %3391 = vmatpush1.msra.mxu0 %v3390
    %3392 = vmatprep.subr.mxu0 0.0
    %v3393 = vand.u32 %v68, 4294901760
    %v3394 = vsub.f32 %v68, %v3393
    %v3395 = vand.u32 %v3394, 4294901760
    %3396 = vmatpush1.msra.mxu0 %v3395
    %3397 = vmatprep.subr.mxu0 0.0
    %v3398 = vand.u32 %v69, 4294901760
    %v3399 = vsub.f32 %v69, %v3398
    %v3400 = vand.u32 %v3399, 4294901760
    %3401 = vmatpush1.msra.mxu0 %v3400
    %3402 = vmatprep.subr.mxu0 0.0
    %3403 = vmatpush1.msra.mxu0 0.0
    %3404 = vmatprep.subr.mxu0 0.0
    %3405 = vmatpush1.msra.mxu0 0.0
    %3406 = vmatprep.subr.mxu0 0.0
    %3407 = vmatpush1.msra.mxu0 0.0
    %3408 = vmatprep.subr.mxu0 0.0
    %3409 = vmatpush1.msra.mxu0 0.0
    %3410 = vmatprep.subr.mxu0 0.0
    %3411 = vmatpush1.msra.mxu0 0.0
    %3412 = vmatprep.subr.mxu0 0.0
    %3413 = vmatpush1.msra.mxu0 0.0
    %3414 = vmatprep.subr.mxu0 0.0
    %3415 = vmatpush1.msra.mxu0 0.0
    %3416 = vmatprep.subr.mxu0 0.0
    %3417 = vmatpush1.msra.mxu0 0.0
    %3418 = vmatprep.subr.mxu0 0.0
    %3419 = vmatpush1.msra.mxu0 0.0
    %3420 = vmatprep.subr.mxu0 0.0
    %3421 = vmatpush1.msra.mxu0 0.0
    %3422 = vmatprep.subr.mxu0 0.0
    %3423 = vmatpush1.msra.mxu0 0.0
    %3424 = vmatprep.subr.mxu0 0.0
    %3425 = vmatpush1.msra.mxu0 0.0
    %3426 = vmatprep.subr.mxu0 0.0
    %3427 = vmatpush1.msra.mxu0 0.0
    %3428 = vmatprep.subr.mxu0 0.0
    %3429 = vmatpush1.msra.mxu0 0.0
    %3430 = vmatprep.subr.mxu0 0.0
    %3431 = vmatpush1.msra.mxu0 0.0
    %3432 = vmatprep.subr.mxu0 0.0
    %3433 = vmatpush1.msra.mxu0 0.0
    %3434 = vmatprep.subr.mxu0 0.0
    %3435 = vmatpush1.msra.mxu0 0.0
    %3436 = vmatprep.subr.mxu0 0.0
    %3437 = vmatpush1.msra.mxu0 0.0
    %3438 = vmatprep.subr.mxu0 0.0
    %3439 = vmatpush1.msra.mxu0 0.0
    %3440 = vmatprep.subr.mxu0 0.0
    %3441 = vmatpush1.msra.mxu0 0.0
    %3442 = vmatprep.subr.mxu0 0.0
    %3443 = vmatpush1.msra.mxu0 0.0
    %3444 = vmatprep.subr.mxu0 0.0
    %3445 = vmatpush1.msra.mxu0 0.0
    %3446 = vmatprep.subr.mxu0 0.0
    %3447 = vmatpush1.msra.mxu0 0.0
    %3448 = vmatprep.subr.mxu0 0.0
    %3449 = vmatpush1.msra.mxu0 0.0
    %3450 = vmatprep.subr.mxu0 0.0
    %3451 = vmatpush1.msra.mxu0 0.0
    %3452 = vmatprep.subr.mxu0 0.0
    %3453 = vmatpush1.msra.mxu0 0.0
    %3454 = vmatprep.subr.mxu0 0.0
    %3455 = vmatpush1.msra.mxu0 0.0
    %3456 = vmatprep.subr.mxu0 0.0
    %3457 = vmatpush1.msra.mxu0 0.0
    %3458 = vmatprep.mubr.f32.mxu0 0.0
    %v3459 = vand.u32 %v3019, 4294901760
    %3460 = vmatmul.mubr.f32.gmra.mrb[0].mxu0 %v3459
    %v3461 = vpop.f32.mrb[0].mxu0
    %v3462 = vadd.f32 %v3371, %v3461
    %v3463 = vpop.f32.mrb[0].mxu0
    %3464 = vmatprep.mubr.f32.mxu0 0.0
    %v3465 = vand.u32 %v3022, 4294901760
    %3466 = vmatmul.mubr.f32.gmra.mrb[0].mxu0 %v3465
    %v3467 = vpop.f32.mrb[0].mxu0
    %v3468 = vadd.f32 %v3379, %v3467
    %v3469 = vpop.f32.mrb[0].mxu0
    %3470 = vdwg.mxu0
    %3471 = vmatprep.subr.mxu0 0.0
    %v3472 = vand.u32 %v66, 4294901760
    %3473 = vmatpush1.msra.mxu0 %v3472
    %3474 = vmatprep.subr.mxu0 0.0
    %v3475 = vand.u32 %v67, 4294901760
    %3476 = vmatpush1.msra.mxu0 %v3475
    %3477 = vmatprep.subr.mxu0 0.0
    %v3478 = vand.u32 %v68, 4294901760
    %3479 = vmatpush1.msra.mxu0 %v3478
    %3480 = vmatprep.subr.mxu0 0.0
    %v3481 = vand.u32 %v69, 4294901760
    %3482 = vmatpush1.msra.mxu0 %v3481
    %3483 = vmatprep.subr.mxu0 0.0
    %3484 = vmatpush1.msra.mxu0 0.0
    %3485 = vmatprep.subr.mxu0 0.0
    %3486 = vmatpush1.msra.mxu0 0.0
    %3487 = vmatprep.subr.mxu0 0.0
    %3488 = vmatpush1.msra.mxu0 0.0
    %3489 = vmatprep.subr.mxu0 0.0
    %3490 = vmatpush1.msra.mxu0 0.0
    %3491 = vmatprep.subr.mxu0 0.0
    %3492 = vmatpush1.msra.mxu0 0.0
    %3493 = vmatprep.subr.mxu0 0.0
    %3494 = vmatpush1.msra.mxu0 0.0
    %3495 = vmatprep.subr.mxu0 0.0
    %3496 = vmatpush1.msra.mxu0 0.0
    %3497 = vmatprep.subr.mxu0 0.0
    %3498 = vmatpush1.msra.mxu0 0.0
    %3499 = vmatprep.subr.mxu0 0.0
    %3500 = vmatpush1.msra.mxu0 0.0
    %3501 = vmatprep.subr.mxu0 0.0
    %3502 = vmatpush1.msra.mxu0 0.0
    %3503 = vmatprep.subr.mxu0 0.0
    %3504 = vmatpush1.msra.mxu0 0.0
    %3505 = vmatprep.subr.mxu0 0.0
    %3506 = vmatpush1.msra.mxu0 0.0
    %3507 = vmatprep.subr.mxu0 0.0
    %3508 = vmatpush1.msra.mxu0 0.0
    %3509 = vmatprep.subr.mxu0 0.0
    %3510 = vmatpush1.msra.mxu0 0.0
    %3511 = vmatprep.subr.mxu0 0.0
    %3512 = vmatpush1.msra.mxu0 0.0
    %3513 = vmatprep.subr.mxu0 0.0
    %3514 = vmatpush1.msra.mxu0 0.0
    %3515 = vmatprep.subr.mxu0 0.0
    %3516 = vmatpush1.msra.mxu0 0.0
    %3517 = vmatprep.subr.mxu0 0.0
    %3518 = vmatpush1.msra.mxu0 0.0
    %3519 = vmatprep.subr.mxu0 0.0
    %3520 = vmatpush1.msra.mxu0 0.0
    %3521 = vmatprep.subr.mxu0 0.0
    %3522 = vmatpush1.msra.mxu0 0.0
    %3523 = vmatprep.subr.mxu0 0.0
    %3524 = vmatpush1.msra.mxu0 0.0
    %3525 = vmatprep.subr.mxu0 0.0
    %3526 = vmatpush1.msra.mxu0 0.0
    %3527 = vmatprep.subr.mxu0 0.0
    %3528 = vmatpush1.msra.mxu0 0.0
    %3529 = vmatprep.subr.mxu0 0.0
    %3530 = vmatpush1.msra.mxu0 0.0
    %3531 = vmatprep.subr.mxu0 0.0
    %3532 = vmatpush1.msra.mxu0 0.0
    %3533 = vmatprep.subr.mxu0 0.0
    %3534 = vmatpush1.msra.mxu0 0.0
    %3535 = vmatprep.subr.mxu0 0.0
    %3536 = vmatpush1.msra.mxu0 0.0
    %3537 = vmatprep.subr.mxu0 0.0
    %3538 = vmatpush1.msra.mxu0 0.0
    %3539 = vmatprep.mubr.f32.mxu0 0.0
    %v3540 = vand.u32 %v3019, 4294901760
    %3541 = vmatmul.mubr.f32.gmra.mrb[0].mxu0 %v3540
    %v3542 = vpop.f32.mrb[0].mxu0
    %v3543 = vadd.f32 %v3462, %v3542
    %v3544 = vpop.f32.mrb[0].mxu0
    %3545 = vmatprep.mubr.f32.mxu0 0.0
    %v3546 = vand.u32 %v3022, 4294901760
    %3547 = vmatmul.mubr.f32.gmra.mrb[0].mxu0 %v3546
    %v3548 = vpop.f32.mrb[0].mxu0
    %v3549 = vadd.f32 %v3468, %v3548
    %v3550 = vpop.f32.mrb[0].mxu0
    %3551 = vdwg.mxu0
    %v3552 = vmul.f32 %v3543, 0.5
    %v3553 = vmul.f32 %v3549, 0.5
    %v3554 = vrcp.pop 1.4142135
    %v3555 = vmul.f32 %v3543, %v3554
    %v3556 = vmul.f32 %v3549, %v3554
    %v3557 = verf.f32.pop %v3555
    %v3558 = verf.f32.pop %v3556
    %v3559 = vadd.f32 %v3557, 1.0
    %v3560 = vadd.f32 %v3558, 1.0
    %v3561 = vmul.f32 %v3552, %v3559
    %v3562 = vmul.f32 %v3553, %v3560
    %v3563 = vlaneseq
    %v3564 = vshrl.u32 %v3563, 7
    %v3565 = vsub.s32 5, %v3564
    %v3566 = vrot.slane %v72, %v3565
    %v3568 = vsel %vm626, %v3561, 0
    %v3571 = vsel %vm626, %v3562, 0
    %3573 = vmatprep.subr.mxu0 0.0
    %v3574 = vand.u32 %v70, 4294901760
    %3575 = vmatpush1.msra.mxu0 %v3574
    %3576 = vmatprep.subr.mxu0 0.0
    %v3577 = vand.u32 %v71, 4294901760
    %3578 = vmatpush1.msra.mxu0 %v3577
    %3579 = vmatprep.subr.mxu0 0.0
    %3580 = vmatpush1.msra.mxu0 0.0
    %3581 = vmatprep.subr.mxu0 0.0
    %3582 = vmatpush1.msra.mxu0 0.0
    %3583 = vmatprep.subr.mxu0 0.0
    %3584 = vmatpush1.msra.mxu0 0.0
    %3585 = vmatprep.subr.mxu0 0.0
    %3586 = vmatpush1.msra.mxu0 0.0
    %3587 = vmatprep.subr.mxu0 0.0
    %3588 = vmatpush1.msra.mxu0 0.0
    %3589 = vmatprep.subr.mxu0 0.0
    %3590 = vmatpush1.msra.mxu0 0.0
    %3591 = vmatprep.subr.mxu0 0.0
    %3592 = vmatpush1.msra.mxu0 0.0
    %3593 = vmatprep.subr.mxu0 0.0
    %3594 = vmatpush1.msra.mxu0 0.0
    %3595 = vmatprep.subr.mxu0 0.0
    %3596 = vmatpush1.msra.mxu0 0.0
    %3597 = vmatprep.subr.mxu0 0.0
    %3598 = vmatpush1.msra.mxu0 0.0
    %3599 = vmatprep.subr.mxu0 0.0
    %3600 = vmatpush1.msra.mxu0 0.0
    %3601 = vmatprep.subr.mxu0 0.0
    %3602 = vmatpush1.msra.mxu0 0.0
    %3603 = vmatprep.subr.mxu0 0.0
    %3604 = vmatpush1.msra.mxu0 0.0
    %3605 = vmatprep.subr.mxu0 0.0
    %3606 = vmatpush1.msra.mxu0 0.0
    %3607 = vmatprep.subr.mxu0 0.0
    %3608 = vmatpush1.msra.mxu0 0.0
    %3609 = vmatprep.subr.mxu0 0.0
    %3610 = vmatpush1.msra.mxu0 0.0
    %3611 = vmatprep.subr.mxu0 0.0
    %3612 = vmatpush1.msra.mxu0 0.0
    %3613 = vmatprep.subr.mxu0 0.0
    %3614 = vmatpush1.msra.mxu0 0.0
    %3615 = vmatprep.subr.mxu0 0.0
    %3616 = vmatpush1.msra.mxu0 0.0
    %3617 = vmatprep.subr.mxu0 0.0
    %3618 = vmatpush1.msra.mxu0 0.0
    %3619 = vmatprep.subr.mxu0 0.0
    %3620 = vmatpush1.msra.mxu0 0.0
    %3621 = vmatprep.subr.mxu0 0.0
    %3622 = vmatpush1.msra.mxu0 0.0
    %3623 = vmatprep.subr.mxu0 0.0
    %3624 = vmatpush1.msra.mxu0 0.0
    %3625 = vmatprep.subr.mxu0 0.0
    %3626 = vmatpush1.msra.mxu0 0.0
    %3627 = vmatprep.subr.mxu0 0.0
    %3628 = vmatpush1.msra.mxu0 0.0
    %3629 = vmatprep.subr.mxu0 0.0
    %3630 = vmatpush1.msra.mxu0 0.0
    %3631 = vmatprep.subr.mxu0 0.0
    %3632 = vmatpush1.msra.mxu0 0.0
    %3633 = vmatprep.subr.mxu0 0.0
    %3634 = vmatpush1.msra.mxu0 0.0
    %3635 = vmatprep.subr.mxu0 0.0
    %3636 = vmatpush1.msra.mxu0 0.0
    %3637 = vmatprep.subr.mxu0 0.0
    %3638 = vmatpush1.msra.mxu0 0.0
    %3639 = vmatprep.mubr.f32.mxu0 0.0
    %v3640 = vand.u32 %v3568, 4294901760
    %v3641 = vsub.f32 %v3568, %v3640
    %v3642 = vand.u32 %v3641, 4294901760
    %v3643 = vsub.f32 %v3641, %v3642
    %v3644 = vand.u32 %v3643, 4294901760
    %3645 = vmatmul.mubr.f32.gmra.mrb[0].mxu0 %v3644
    %v3646 = vpop.f32.mrb[0].mxu0
    %v3647 = vadd.f32 %v3566, %v3646
    %v3648 = vpop.f32.mrb[0].mxu0
    %3649 = vmatprep.mubr.f32.mxu0 0.0
    %v3650 = vand.u32 %v3571, 4294901760
    %v3651 = vsub.f32 %v3571, %v3650
    %v3652 = vand.u32 %v3651, 4294901760
    %v3653 = vsub.f32 %v3651, %v3652
    %v3654 = vand.u32 %v3653, 4294901760
    %3655 = vmatmul.mubr.f32.gmra.mrb[0].mxu0 %v3654
    %v3656 = vpop.f32.mrb[0].mxu0
    %v3657 = vadd.f32 %v3566, %v3656
    %v3658 = vpop.f32.mrb[0].mxu0
    %3659 = vdwg.mxu0
    %3660 = vmatprep.subr.mxu0 0.0
    %v3661 = vand.u32 %v70, 4294901760
    %v3662 = vsub.f32 %v70, %v3661
    %v3663 = vand.u32 %v3662, 4294901760
    %v3664 = vsub.f32 %v3662, %v3663
    %v3665 = vand.u32 %v3664, 4294901760
    %3666 = vmatpush1.msra.mxu0 %v3665
    %3667 = vmatprep.subr.mxu0 0.0
    %v3668 = vand.u32 %v71, 4294901760
    %v3669 = vsub.f32 %v71, %v3668
    %v3670 = vand.u32 %v3669, 4294901760
    %v3671 = vsub.f32 %v3669, %v3670
    %v3672 = vand.u32 %v3671, 4294901760
    %3673 = vmatpush1.msra.mxu0 %v3672
    %3674 = vmatprep.subr.mxu0 0.0
    %3675 = vmatpush1.msra.mxu0 0.0
    %3676 = vmatprep.subr.mxu0 0.0
    %3677 = vmatpush1.msra.mxu0 0.0
    %3678 = vmatprep.subr.mxu0 0.0
    %3679 = vmatpush1.msra.mxu0 0.0
    %3680 = vmatprep.subr.mxu0 0.0
    %3681 = vmatpush1.msra.mxu0 0.0
    %3682 = vmatprep.subr.mxu0 0.0
    %3683 = vmatpush1.msra.mxu0 0.0
    %3684 = vmatprep.subr.mxu0 0.0
    %3685 = vmatpush1.msra.mxu0 0.0
    %3686 = vmatprep.subr.mxu0 0.0
    %3687 = vmatpush1.msra.mxu0 0.0
    %3688 = vmatprep.subr.mxu0 0.0
    %3689 = vmatpush1.msra.mxu0 0.0
    %3690 = vmatprep.subr.mxu0 0.0
    %3691 = vmatpush1.msra.mxu0 0.0
    %3692 = vmatprep.subr.mxu0 0.0
    %3693 = vmatpush1.msra.mxu0 0.0
    %3694 = vmatprep.subr.mxu0 0.0
    %3695 = vmatpush1.msra.mxu0 0.0
    %3696 = vmatprep.subr.mxu0 0.0
    %3697 = vmatpush1.msra.mxu0 0.0
    %3698 = vmatprep.subr.mxu0 0.0
    %3699 = vmatpush1.msra.mxu0 0.0
    %3700 = vmatprep.subr.mxu0 0.0
    %3701 = vmatpush1.msra.mxu0 0.0
    %3702 = vmatprep.subr.mxu0 0.0
    %3703 = vmatpush1.msra.mxu0 0.0
    %3704 = vmatprep.subr.mxu0 0.0
    %3705 = vmatpush1.msra.mxu0 0.0
    %3706 = vmatprep.subr.mxu0 0.0
    %3707 = vmatpush1.msra.mxu0 0.0
    %3708 = vmatprep.subr.mxu0 0.0
    %3709 = vmatpush1.msra.mxu0 0.0
    %3710 = vmatprep.subr.mxu0 0.0
    %3711 = vmatpush1.msra.mxu0 0.0
    %3712 = vmatprep.subr.mxu0 0.0
    %3713 = vmatpush1.msra.mxu0 0.0
    %3714 = vmatprep.subr.mxu0 0.0
    %3715 = vmatpush1.msra.mxu0 0.0
    %3716 = vmatprep.subr.mxu0 0.0
    %3717 = vmatpush1.msra.mxu0 0.0
    %3718 = vmatprep.subr.mxu0 0.0
    %3719 = vmatpush1.msra.mxu0 0.0
    %3720 = vmatprep.subr.mxu0 0.0
    %3721 = vmatpush1.msra.mxu0 0.0
    %3722 = vmatprep.subr.mxu0 0.0
    %3723 = vmatpush1.msra.mxu0 0.0
    %3724 = vmatprep.subr.mxu0 0.0
    %3725 = vmatpush1.msra.mxu0 0.0
    %3726 = vmatprep.subr.mxu0 0.0
    %3727 = vmatpush1.msra.mxu0 0.0
    %3728 = vmatprep.subr.mxu0 0.0
    %3729 = vmatpush1.msra.mxu0 0.0
    %3730 = vmatprep.subr.mxu0 0.0
    %3731 = vmatpush1.msra.mxu0 0.0
    %3732 = vmatprep.subr.mxu0 0.0
    %3733 = vmatpush1.msra.mxu0 0.0
    %3734 = vmatprep.mubr.f32.mxu0 0.0
    %v3735 = vand.u32 %v3568, 4294901760
    %3736 = vmatmul.mubr.f32.gmra.mrb[0].mxu0 %v3735
    %v3737 = vpop.f32.mrb[0].mxu0
    %v3738 = vadd.f32 %v3647, %v3737
    %v3739 = vpop.f32.mrb[0].mxu0
    %3740 = vmatprep.mubr.f32.mxu0 0.0
    %v3741 = vand.u32 %v3571, 4294901760
    %3742 = vmatmul.mubr.f32.gmra.mrb[0].mxu0 %v3741
    %v3743 = vpop.f32.mrb[0].mxu0
    %v3744 = vadd.f32 %v3657, %v3743
    %v3745 = vpop.f32.mrb[0].mxu0
    %3746 = vdwg.mxu0
    %3747 = vmatprep.subr.mxu0 0.0
    %v3748 = vand.u32 %v70, 4294901760
    %v3749 = vsub.f32 %v70, %v3748
    %3750 = vmatpush1.msra.mxu0 %v3749
    %3751 = vmatprep.subr.mxu0 0.0
    %v3752 = vand.u32 %v71, 4294901760
    %v3753 = vsub.f32 %v71, %v3752
    %3754 = vmatpush1.msra.mxu0 %v3753
    %3755 = vmatprep.subr.mxu0 0.0
    %3756 = vmatpush1.msra.mxu0 0.0
    %3757 = vmatprep.subr.mxu0 0.0
    %3758 = vmatpush1.msra.mxu0 0.0
    %3759 = vmatprep.subr.mxu0 0.0
    %3760 = vmatpush1.msra.mxu0 0.0
    %3761 = vmatprep.subr.mxu0 0.0
    %3762 = vmatpush1.msra.mxu0 0.0
    %3763 = vmatprep.subr.mxu0 0.0
    %3764 = vmatpush1.msra.mxu0 0.0
    %3765 = vmatprep.subr.mxu0 0.0
    %3766 = vmatpush1.msra.mxu0 0.0
    %3767 = vmatprep.subr.mxu0 0.0
    %3768 = vmatpush1.msra.mxu0 0.0
    %3769 = vmatprep.subr.mxu0 0.0
    %3770 = vmatpush1.msra.mxu0 0.0
    %3771 = vmatprep.subr.mxu0 0.0
    %3772 = vmatpush1.msra.mxu0 0.0
    %3773 = vmatprep.subr.mxu0 0.0
    %3774 = vmatpush1.msra.mxu0 0.0
    %3775 = vmatprep.subr.mxu0 0.0
    %3776 = vmatpush1.msra.mxu0 0.0
    %3777 = vmatprep.subr.mxu0 0.0
    %3778 = vmatpush1.msra.mxu0 0.0
    %3779 = vmatprep.subr.mxu0 0.0
    %3780 = vmatpush1.msra.mxu0 0.0
    %3781 = vmatprep.subr.mxu0 0.0
    %3782 = vmatpush1.msra.mxu0 0.0
    %3783 = vmatprep.subr.mxu0 0.0
    %3784 = vmatpush1.msra.mxu0 0.0
    %3785 = vmatprep.subr.mxu0 0.0
    %3786 = vmatpush1.msra.mxu0 0.0
    %3787 = vmatprep.subr.mxu0 0.0
    %3788 = vmatpush1.msra.mxu0 0.0
    %3789 = vmatprep.subr.mxu0 0.0
    %3790 = vmatpush1.msra.mxu0 0.0
    %3791 = vmatprep.subr.mxu0 0.0
    %3792 = vmatpush1.msra.mxu0 0.0
    %3793 = vmatprep.subr.mxu0 0.0
    %3794 = vmatpush1.msra.mxu0 0.0
    %3795 = vmatprep.subr.mxu0 0.0
    %3796 = vmatpush1.msra.mxu0 0.0
    %3797 = vmatprep.subr.mxu0 0.0
    %3798 = vmatpush1.msra.mxu0 0.0
    %3799 = vmatprep.subr.mxu0 0.0
    %3800 = vmatpush1.msra.mxu0 0.0
    %3801 = vmatprep.subr.mxu0 0.0
    %3802 = vmatpush1.msra.mxu0 0.0
    %3803 = vmatprep.subr.mxu0 0.0
    %3804 = vmatpush1.msra.mxu0 0.0
    %3805 = vmatprep.subr.mxu0 0.0
    %3806 = vmatpush1.msra.mxu0 0.0
    %3807 = vmatprep.subr.mxu0 0.0
    %3808 = vmatpush1.msra.mxu0 0.0
    %3809 = vmatprep.subr.mxu0 0.0
    %3810 = vmatpush1.msra.mxu0 0.0
    %3811 = vmatprep.subr.mxu0 0.0
    %3812 = vmatpush1.msra.mxu0 0.0
    %3813 = vmatprep.subr.mxu0 0.0
    %3814 = vmatpush1.msra.mxu0 0.0
    %3815 = vmatprep.mubr.f32.mxu0 0.0
    %v3816 = vand.u32 %v3568, 4294901760
    %v3817 = vsub.f32 %v3568, %v3816
    %3818 = vmatmul.mubr.f32.gmra.mrb[0].mxu0 %v3817
    %v3819 = vpop.f32.mrb[0].mxu0
    %v3820 = vadd.f32 %v3738, %v3819
    %v3821 = vpop.f32.mrb[0].mxu0
    %3822 = vmatprep.mubr.f32.mxu0 0.0
    %v3823 = vand.u32 %v3571, 4294901760
    %v3824 = vsub.f32 %v3571, %v3823
    %3825 = vmatmul.mubr.f32.gmra.mrb[0].mxu0 %v3824
    %v3826 = vpop.f32.mrb[0].mxu0
    %v3827 = vadd.f32 %v3744, %v3826
    %v3828 = vpop.f32.mrb[0].mxu0
    %3829 = vdwg.mxu0
    %3830 = vmatprep.subr.mxu0 0.0
    %v3831 = vand.u32 %v70, 4294901760
    %3832 = vmatpush1.msra.mxu0 %v3831
    %3833 = vmatprep.subr.mxu0 0.0
    %v3834 = vand.u32 %v71, 4294901760
    %3835 = vmatpush1.msra.mxu0 %v3834
    %3836 = vmatprep.subr.mxu0 0.0
    %3837 = vmatpush1.msra.mxu0 0.0
    %3838 = vmatprep.subr.mxu0 0.0
    %3839 = vmatpush1.msra.mxu0 0.0
    %3840 = vmatprep.subr.mxu0 0.0
    %3841 = vmatpush1.msra.mxu0 0.0
    %3842 = vmatprep.subr.mxu0 0.0
    %3843 = vmatpush1.msra.mxu0 0.0
    %3844 = vmatprep.subr.mxu0 0.0
    %3845 = vmatpush1.msra.mxu0 0.0
    %3846 = vmatprep.subr.mxu0 0.0
    %3847 = vmatpush1.msra.mxu0 0.0
    %3848 = vmatprep.subr.mxu0 0.0
    %3849 = vmatpush1.msra.mxu0 0.0
    %3850 = vmatprep.subr.mxu0 0.0
    %3851 = vmatpush1.msra.mxu0 0.0
    %3852 = vmatprep.subr.mxu0 0.0
    %3853 = vmatpush1.msra.mxu0 0.0
    %3854 = vmatprep.subr.mxu0 0.0
    %3855 = vmatpush1.msra.mxu0 0.0
    %3856 = vmatprep.subr.mxu0 0.0
    %3857 = vmatpush1.msra.mxu0 0.0
    %3858 = vmatprep.subr.mxu0 0.0
    %3859 = vmatpush1.msra.mxu0 0.0
    %3860 = vmatprep.subr.mxu0 0.0
    %3861 = vmatpush1.msra.mxu0 0.0
    %3862 = vmatprep.subr.mxu0 0.0
    %3863 = vmatpush1.msra.mxu0 0.0
    %3864 = vmatprep.subr.mxu0 0.0
    %3865 = vmatpush1.msra.mxu0 0.0
    %3866 = vmatprep.subr.mxu0 0.0
    %3867 = vmatpush1.msra.mxu0 0.0
    %3868 = vmatprep.subr.mxu0 0.0
    %3869 = vmatpush1.msra.mxu0 0.0
    %3870 = vmatprep.subr.mxu0 0.0
    %3871 = vmatpush1.msra.mxu0 0.0
    %3872 = vmatprep.subr.mxu0 0.0
    %3873 = vmatpush1.msra.mxu0 0.0
    %3874 = vmatprep.subr.mxu0 0.0
    %3875 = vmatpush1.msra.mxu0 0.0
    %3876 = vmatprep.subr.mxu0 0.0
    %3877 = vmatpush1.msra.mxu0 0.0
    %3878 = vmatprep.subr.mxu0 0.0
    %3879 = vmatpush1.msra.mxu0 0.0
    %3880 = vmatprep.subr.mxu0 0.0
    %3881 = vmatpush1.msra.mxu0 0.0
    %3882 = vmatprep.subr.mxu0 0.0
    %3883 = vmatpush1.msra.mxu0 0.0
    %3884 = vmatprep.subr.mxu0 0.0
    %3885 = vmatpush1.msra.mxu0 0.0
    %3886 = vmatprep.subr.mxu0 0.0
    %3887 = vmatpush1.msra.mxu0 0.0
    %3888 = vmatprep.subr.mxu0 0.0
    %3889 = vmatpush1.msra.mxu0 0.0
    %3890 = vmatprep.subr.mxu0 0.0
    %3891 = vmatpush1.msra.mxu0 0.0
    %3892 = vmatprep.subr.mxu0 0.0
    %3893 = vmatpush1.msra.mxu0 0.0
    %3894 = vmatprep.subr.mxu0 0.0
    %3895 = vmatpush1.msra.mxu0 0.0
    %3896 = vmatprep.mubr.f32.mxu0 0.0
    %v3897 = vand.u32 %v3568, 4294901760
    %v3898 = vsub.f32 %v3568, %v3897
    %v3899 = vand.u32 %v3898, 4294901760
    %3900 = vmatmul.mubr.f32.gmra.mrb[0].mxu0 %v3899
    %v3901 = vpop.f32.mrb[0].mxu0
    %v3902 = vadd.f32 %v3820, %v3901
    %v3903 = vpop.f32.mrb[0].mxu0
    %3904 = vmatprep.mubr.f32.mxu0 0.0
    %v3905 = vand.u32 %v3571, 4294901760
    %v3906 = vsub.f32 %v3571, %v3905
    %v3907 = vand.u32 %v3906, 4294901760
    %3908 = vmatmul.mubr.f32.gmra.mrb[0].mxu0 %v3907
    %v3909 = vpop.f32.mrb[0].mxu0
    %v3910 = vadd.f32 %v3827, %v3909
    %v3911 = vpop.f32.mrb[0].mxu0
    %3912 = vdwg.mxu0
    %3913 = vmatprep.subr.mxu0 0.0
    %v3914 = vand.u32 %v70, 4294901760
    %v3915 = vsub.f32 %v70, %v3914
    %v3916 = vand.u32 %v3915, 4294901760
    %3917 = vmatpush1.msra.mxu0 %v3916
    %3918 = vmatprep.subr.mxu0 0.0
    %v3919 = vand.u32 %v71, 4294901760
    %v3920 = vsub.f32 %v71, %v3919
    %v3921 = vand.u32 %v3920, 4294901760
    %3922 = vmatpush1.msra.mxu0 %v3921
    %3923 = vmatprep.subr.mxu0 0.0
    %3924 = vmatpush1.msra.mxu0 0.0
    %3925 = vmatprep.subr.mxu0 0.0
    %3926 = vmatpush1.msra.mxu0 0.0
    %3927 = vmatprep.subr.mxu0 0.0
    %3928 = vmatpush1.msra.mxu0 0.0
    %3929 = vmatprep.subr.mxu0 0.0
    %3930 = vmatpush1.msra.mxu0 0.0
    %3931 = vmatprep.subr.mxu0 0.0
    %3932 = vmatpush1.msra.mxu0 0.0
    %3933 = vmatprep.subr.mxu0 0.0
    %3934 = vmatpush1.msra.mxu0 0.0
    %3935 = vmatprep.subr.mxu0 0.0
    %3936 = vmatpush1.msra.mxu0 0.0
    %3937 = vmatprep.subr.mxu0 0.0
    %3938 = vmatpush1.msra.mxu0 0.0
    %3939 = vmatprep.subr.mxu0 0.0
    %3940 = vmatpush1.msra.mxu0 0.0
    %3941 = vmatprep.subr.mxu0 0.0
    %3942 = vmatpush1.msra.mxu0 0.0
    %3943 = vmatprep.subr.mxu0 0.0
    %3944 = vmatpush1.msra.mxu0 0.0
    %3945 = vmatprep.subr.mxu0 0.0
    %3946 = vmatpush1.msra.mxu0 0.0
    %3947 = vmatprep.subr.mxu0 0.0
    %3948 = vmatpush1.msra.mxu0 0.0
    %3949 = vmatprep.subr.mxu0 0.0
    %3950 = vmatpush1.msra.mxu0 0.0
    %3951 = vmatprep.subr.mxu0 0.0
    %3952 = vmatpush1.msra.mxu0 0.0
    %3953 = vmatprep.subr.mxu0 0.0
    %3954 = vmatpush1.msra.mxu0 0.0
    %3955 = vmatprep.subr.mxu0 0.0
    %3956 = vmatpush1.msra.mxu0 0.0
    %3957 = vmatprep.subr.mxu0 0.0
    %3958 = vmatpush1.msra.mxu0 0.0
    %3959 = vmatprep.subr.mxu0 0.0
    %3960 = vmatpush1.msra.mxu0 0.0
    %3961 = vmatprep.subr.mxu0 0.0
    %3962 = vmatpush1.msra.mxu0 0.0
    %3963 = vmatprep.subr.mxu0 0.0
    %3964 = vmatpush1.msra.mxu0 0.0
    %3965 = vmatprep.subr.mxu0 0.0
    %3966 = vmatpush1.msra.mxu0 0.0
    %3967 = vmatprep.subr.mxu0 0.0
    %3968 = vmatpush1.msra.mxu0 0.0
    %3969 = vmatprep.subr.mxu0 0.0
    %3970 = vmatpush1.msra.mxu0 0.0
    %3971 = vmatprep.subr.mxu0 0.0
    %3972 = vmatpush1.msra.mxu0 0.0
    %3973 = vmatprep.subr.mxu0 0.0
    %3974 = vmatpush1.msra.mxu0 0.0
    %3975 = vmatprep.subr.mxu0 0.0
    %3976 = vmatpush1.msra.mxu0 0.0
    %3977 = vmatprep.subr.mxu0 0.0
    %3978 = vmatpush1.msra.mxu0 0.0
    %3979 = vmatprep.subr.mxu0 0.0
    %3980 = vmatpush1.msra.mxu0 0.0
    %3981 = vmatprep.subr.mxu0 0.0
    %3982 = vmatpush1.msra.mxu0 0.0
    %3983 = vmatprep.mubr.f32.mxu0 0.0
    %v3984 = vand.u32 %v3568, 4294901760
    %3985 = vmatmul.mubr.f32.gmra.mrb[0].mxu0 %v3984
    %v3986 = vpop.f32.mrb[0].mxu0
    %v3987 = vadd.f32 %v3902, %v3986
    %v3988 = vpop.f32.mrb[0].mxu0
    %3989 = vmatprep.mubr.f32.mxu0 0.0
    %v3990 = vand.u32 %v3571, 4294901760
    %3991 = vmatmul.mubr.f32.gmra.mrb[0].mxu0 %v3990
    %v3992 = vpop.f32.mrb[0].mxu0
    %v3993 = vadd.f32 %v3910, %v3992
    %v3994 = vpop.f32.mrb[0].mxu0
    %3995 = vdwg.mxu0
    %3996 = vmatprep.subr.mxu0 0.0
    %v3997 = vand.u32 %v70, 4294901760
    %3998 = vmatpush1.msra.mxu0 %v3997
    %3999 = vmatprep.subr.mxu0 0.0
    %v4000 = vand.u32 %v71, 4294901760
    %4001 = vmatpush1.msra.mxu0 %v4000
    %4002 = vmatprep.subr.mxu0 0.0
    %4003 = vmatpush1.msra.mxu0 0.0
    %4004 = vmatprep.subr.mxu0 0.0
    %4005 = vmatpush1.msra.mxu0 0.0
    %4006 = vmatprep.subr.mxu0 0.0
    %4007 = vmatpush1.msra.mxu0 0.0
    %4008 = vmatprep.subr.mxu0 0.0
    %4009 = vmatpush1.msra.mxu0 0.0
    %4010 = vmatprep.subr.mxu0 0.0
    %4011 = vmatpush1.msra.mxu0 0.0
    %4012 = vmatprep.subr.mxu0 0.0
    %4013 = vmatpush1.msra.mxu0 0.0
    %4014 = vmatprep.subr.mxu0 0.0
    %4015 = vmatpush1.msra.mxu0 0.0
    %4016 = vmatprep.subr.mxu0 0.0
    %4017 = vmatpush1.msra.mxu0 0.0
    %4018 = vmatprep.subr.mxu0 0.0
    %4019 = vmatpush1.msra.mxu0 0.0
    %4020 = vmatprep.subr.mxu0 0.0
    %4021 = vmatpush1.msra.mxu0 0.0
    %4022 = vmatprep.subr.mxu0 0.0
    %4023 = vmatpush1.msra.mxu0 0.0
    %4024 = vmatprep.subr.mxu0 0.0
    %4025 = vmatpush1.msra.mxu0 0.0
    %4026 = vmatprep.subr.mxu0 0.0
    %4027 = vmatpush1.msra.mxu0 0.0
    %4028 = vmatprep.subr.mxu0 0.0
    %4029 = vmatpush1.msra.mxu0 0.0
    %4030 = vmatprep.subr.mxu0 0.0
    %4031 = vmatpush1.msra.mxu0 0.0
    %4032 = vmatprep.subr.mxu0 0.0
    %4033 = vmatpush1.msra.mxu0 0.0
    %4034 = vmatprep.subr.mxu0 0.0
    %4035 = vmatpush1.msra.mxu0 0.0
    %4036 = vmatprep.subr.mxu0 0.0
    %4037 = vmatpush1.msra.mxu0 0.0
    %4038 = vmatprep.subr.mxu0 0.0
    %4039 = vmatpush1.msra.mxu0 0.0
    %4040 = vmatprep.subr.mxu0 0.0
    %4041 = vmatpush1.msra.mxu0 0.0
    %4042 = vmatprep.subr.mxu0 0.0
    %4043 = vmatpush1.msra.mxu0 0.0
    %4044 = vmatprep.subr.mxu0 0.0
    %4045 = vmatpush1.msra.mxu0 0.0
    %4046 = vmatprep.subr.mxu0 0.0
    %4047 = vmatpush1.msra.mxu0 0.0
    %4048 = vmatprep.subr.mxu0 0.0
    %4049 = vmatpush1.msra.mxu0 0.0
    %4050 = vmatprep.subr.mxu0 0.0
    %4051 = vmatpush1.msra.mxu0 0.0
    %4052 = vmatprep.subr.mxu0 0.0
    %4053 = vmatpush1.msra.mxu0 0.0
    %4054 = vmatprep.subr.mxu0 0.0
    %4055 = vmatpush1.msra.mxu0 0.0
    %4056 = vmatprep.subr.mxu0 0.0
    %4057 = vmatpush1.msra.mxu0 0.0
    %4058 = vmatprep.subr.mxu0 0.0
    %4059 = vmatpush1.msra.mxu0 0.0
    %4060 = vmatprep.subr.mxu0 0.0
    %4061 = vmatpush1.msra.mxu0 0.0
    %4062 = vmatprep.mubr.f32.mxu0 0.0
    %v4063 = vand.u32 %v3568, 4294901760
    %4064 = vmatmul.mubr.f32.gmra.mrb[0].mxu0 %v4063
    %v4065 = vpop.f32.mrb[0].mxu0
    %v4066 = vadd.f32 %v3987, %v4065
    %v4067 = vpop.f32.mrb[0].mxu0
    %4068 = vmatprep.mubr.f32.mxu0 0.0
    %v4069 = vand.u32 %v3571, 4294901760
    %4070 = vmatmul.mubr.f32.gmra.mrb[0].mxu0 %v4069
    %v4071 = vpop.f32.mrb[0].mxu0
    %v4072 = vadd.f32 %v3993, %v4071
    %v4073 = vpop.f32.mrb[0].mxu0
    %4074 = vdwg.mxu0
    %v4075 = vadd.f32 %v4066, %v3012
    %v4076 = vadd.f32 %v4072, %v3013
    %v4077 = vsel %vm77, %v4075, 0.0
    %4078 = vadd.xlane.f32.xlu0 %v4077
    %v4079 = vpop.xlane.xlu0 %4078
    %v4080 = vsel %vm77, %v4076, 0.0
    %4081 = vadd.xlane.f32.xlu0 %v4080
    %v4082 = vpop.xlane.xlu0 %4081
    %v4083 = vmul.f32 %v4079, %v2981
    %v4084 = vmul.f32 %v4082, %v2981
    %v4085 = vsub.f32 %v4075, %v4083
    %v4086 = vsub.f32 %v4076, %v4084
    %v4087 = vmul.f32 %v4085, %v4085
    %v4088 = vmul.f32 %v4086, %v4086
    %v4089 = vsel %vm77, %v4087, 0.0
    %4090 = vadd.xlane.f32.xlu0 %v4089
    %v4091 = vpop.xlane.xlu0 %4090
    %v4092 = vsel %vm77, %v4088, 0.0
    %4093 = vadd.xlane.f32.xlu0 %v4092
    %v4094 = vpop.xlane.xlu0 %4093
    %v4095 = vmul.f32 %v4091, %v2981
    %v4096 = vmul.f32 %v4094, %v2981
    %v4097 = vadd.f32 %v4095, 1e-08
    %v4098 = vadd.f32 %v4096, 1e-08
    %v4099 = vrsqrt.pop %v4097
    %v4100 = vrsqrt.pop %v4098
    %v4101 = vmul.f32 %v4085, %v4099
    %v4102 = vmul.f32 %v4086, %v4100
    %v4103 = vlaneseq
    %v4104 = vshrl.u32 %v4103, 7
    %v4105 = vsub.s32 6, %v4104
    %v4106 = vrot.slane %v72, %v4105
    %v4107 = vmul.f32 %v4101, %v4106
    %v4108 = vmul.f32 %v4102, %v4106
    %v4109 = vlaneseq
    %v4110 = vshrl.u32 %v4109, 7
    %v4111 = vsub.s32 7, %v4110
    %v4112 = vrot.slane %v72, %v4111
    %v4113 = vadd.f32 %v4107, %v4112
    %v4114 = vadd.f32 %v4108, %v4112
    %4115 = vst.msk [vmem:[#allocation8] sm:$0xff] %vm77, %v4113
    %4116 = vst.msk [vmem:[#allocation8 + $0x8] sm:$0xff] %vm77, %v4114
    // Predicated region
    $region26: #{tpu_custom_call.1} parent=1 // pred_check
      _
    $region27: #{tpu_custom_call.1} parent=1 // pred_check_branch
      %4118 = sbr.rel (0) target = $region29
    $region28: #{tpu_custom_call.1} parent=1 // pred_region
      %s4120 = ssub.s32 256, 256
      %4121 = vsyncadd [#allocation4], %s4120
      %s4122 = sshll.u32 [#allocation8], 4
      %s4123 = int_to_ptr.vmem [resolvable:$true] %s4122
      %4128 = dma.vmem_to_hbm [thread:$0]  %s4123, 256, %s3, [#allocation4], 128, 128, 8
    $region29: #{tpu_custom_call.1} parent=1 // pred_fallthru
      _
    // Predicated region
    $region30: #{tpu_custom_call.1} parent=1 // pred_check
      _
    $region31: #{tpu_custom_call.1} parent=1 // pred_check_branch
      %4130 = sbr.rel (0) target = $region33
    $region32: #{tpu_custom_call.1} parent=1 // pred_region
      %4131 = dma.done [#allocation4], 256
    $region33: #{tpu_custom_call.1} parent=1 // pred_fallthru
      _
    %4132 = vsyncpa [#allocation3], 1
    %4133 = vsyncpa [#allocation6], 1
    %4134 = vsyncpa [#allocation4], 1

</llo_original>
